<compile_context>
chip_gen: v7x
topology: tpu7x:2x2x1
jax: 0.10.0
libtpu: 0.0.40
codegen_flags: <defaults>
</compile_context>

<pallas_src>
import jax
import jax.numpy as jnp
from jax.experimental import pallas as pl
from jax.experimental.pallas import tpu as pltpu


# ----------------------------- Pallas kernels ------------------------------

def conv_stats_kernel(p_ref, w_ref, y_ref, sum_ref, ssq_ref):
    """Pass 1: conv-as-matmul over an M tile + BN sum / sum-of-squares accumulation.

    p:   (TM, K)  bf16 im2col patches tile
    w:   (K, N)   bf16 conv weights (K = Cin*5*5, N = Cout)
    y:   (TM, N)  f32 conv output tile (pre-BN)
    sum: (1, N)   f32 running per-channel sum     (resident across the grid)
    ssq: (1, N)   f32 running per-channel sum(y^2) (resident across the grid)
    """
    y = jnp.dot(p_ref[...], w_ref[...], preferred_element_type=jnp.float32)
    y_ref[...] = y

    @pl.when(pl.program_id(0) == 0)
    def _():
        sum_ref[...] = jnp.zeros_like(sum_ref)
        ssq_ref[...] = jnp.zeros_like(ssq_ref)

    sum_ref[...] += jnp.sum(y, axis=0, keepdims=True)
    ssq_ref[...] += jnp.sum(y * y, axis=0, keepdims=True)


def bn_relu_pool_kernel(y_ref, scale_ref, shift_ref, o_ref, tmp_ref):
    """Pass 2 (per image): BN affine (precomputed scale/shift) + ReLU + 2x2 maxpool.

    y:     (H, W, C)    f32 conv output for one image
    scale: (1, C)       f32 gamma / sqrt(var + eps)
    shift: (1, C)       f32 beta - mean * scale
    o:     (H2, W2, C)  f32 pooled activation
    tmp:   (H2, W, C)   f32 VMEM scratch (vertically pooled rows)
    """
    H2, W, C = tmp_ref.shape
    W2 = o_ref.shape[1]
    s = scale_ref[...]          # (1, C)
    t = shift_ref[...]          # (1, C)

    # Vertical 2x pool: split the leading (row) dim, affine BEFORE max because the
    # BN scale can be negative; ReLU commutes with max so it is applied at the end.
    y = y_ref[...].reshape(H2, 2, W, C)
    tmp_ref[...] = jnp.maximum(y[:, 0] * s + t, y[:, 1] * s + t)

    # Horizontal 2x pool: stride-2 sublane reads from the scratch, then ReLU.
    left = tmp_ref[:, pl.ds(0, W2, 2), :]
    right = tmp_ref[:, pl.ds(1, W2, 2), :]
    o_ref[...] = jnp.maximum(jnp.maximum(left, right), 0.0)


def fc_kernel(x_ref, w_ref, b_ref, o_ref):
    """Final linear layer: (TB, K)bf16 @ (K, num_classes)bf16 -> f32 + bias."""
    o_ref[...] = (jnp.dot(x_ref[...], w_ref[...],
                          preferred_element_type=jnp.float32) + b_ref[...])


# ------------------------------- glue helpers ------------------------------

def _pick_tile(m, target=512):
    """Largest multiple-of-8 divisor of m that is <= target (falls back to m)."""
    best = None
    for t in range(8, min(m, target) + 1, 8):
        if m % t == 0:
            best = t
    return best if best is not None else m


def _im2col(x_nhwc, k=5, pad=2):
    """5x5 patches (stride 1, pad 2) -> (B*H*W, Cin*k*k), feature order (Cin, kh, kw)
    to match PyTorch Conv2d weight layout (Cout, Cin, kh, kw) flattened row-major."""
    B, H, W, C = x_nhwc.shape
    xp = jnp.pad(x_nhwc, ((0, 0), (pad, pad), (pad, pad), (0, 0)))
    cols = []
    for kh in range(k):
        for kw in range(k):
            cols.append(xp[:, kh:kh + H, kw:kw + W, :])
    p = jnp.stack(cols, axis=3)                 # (B, H, W, k*k, C)
    p = p.reshape(B, H, W, k, k, C)
    p = jnp.transpose(p, (0, 1, 2, 5, 3, 4))    # (B, H, W, C, kh, kw)
    return p.reshape(B * H * W, C * k * k)


def conv_matmul_stats(patches, w, *, tile_target=512):
    """Tiled conv matmul + BN statistics accumulation (pass 1)."""
    M, K = patches.shape
    N = w.shape[1]
    TM = _pick_tile(M, tile_target)
    return pl.pallas_call(
        conv_stats_kernel,
        out_shape=(jax.ShapeDtypeStruct((M, N), jnp.float32),
                   jax.ShapeDtypeStruct((1, N), jnp.float32),
                   jax.ShapeDtypeStruct((1, N), jnp.float32)),
        grid=(M // TM,),
        in_specs=[pl.BlockSpec((TM, K), lambda i: (i, 0)),
                  pl.BlockSpec((K, N), lambda i: (0, 0))],
        out_specs=(pl.BlockSpec((TM, N), lambda i: (i, 0)),
                   pl.BlockSpec((1, N), lambda i: (0, 0)),
                   pl.BlockSpec((1, N), lambda i: (0, 0))),
        compiler_params=pltpu.CompilerParams(
            dimension_semantics=("arbitrary",)),   # BN reduction axis -> sequential
    )(patches, w)


def bn_relu_pool(y4, scale, shift):
    """Fused BN-apply + ReLU + 2x2 maxpool (pass 2), one image per grid step."""
    B, H, W, C = y4.shape
    H2, W2 = H // 2, W // 2
    return pl.pallas_call(
        bn_relu_pool_kernel,
        out_shape=jax.ShapeDtypeStruct((B, H2, W2, C), jnp.float32),
        grid=(B,),
        in_specs=[pl.BlockSpec((None, H, W, C), lambda b: (b, 0, 0, 0)),
                  pl.BlockSpec((1, C), lambda b: (0, 0)),
                  pl.BlockSpec((1, C), lambda b: (0, 0))],
        out_specs=pl.BlockSpec((None, H2, W2, C), lambda b: (b, 0, 0, 0)),
        scratch_shapes=[pltpu.VMEM((H2, W, C), jnp.float32)],
        compiler_params=pltpu.CompilerParams(
            dimension_semantics=("parallel",)),
    )(y4, scale, shift)


def fc(x, w, b, *, tile_target=256):
    Bsz, K = x.shape
    N = w.shape[1]
    TB = _pick_tile(Bsz, tile_target)
    return pl.pallas_call(
        fc_kernel,
        out_shape=jax.ShapeDtypeStruct((Bsz, N), jnp.float32),
        grid=(Bsz // TB,),
        in_specs=[pl.BlockSpec((TB, K), lambda i: (i, 0)),
                  pl.BlockSpec((K, N), lambda i: (0, 0)),
                  pl.BlockSpec((1, N), lambda i: (0, 0))],
        out_specs=pl.BlockSpec((TB, N), lambda i: (i, 0)),
        compiler_params=pltpu.CompilerParams(
            dimension_semantics=("parallel",)),
    )(x, w, b)


def _bn_scale_shift(ssum, ssq, gamma, beta, count, eps=1e-5):
    """Finalize training-mode BN batch stats into a single per-channel affine."""
    mean = ssum / count                                   # (1, N)
    var = jnp.maximum(ssq / count - mean * mean, 0.0)     # biased variance
    inv = jax.lax.rsqrt(var + eps)
    scale = gamma[None, :] * inv
    shift = beta[None, :] - mean * scale
    return scale, shift


# ------------------------------ model forward ------------------------------

def init_params(key, num_classes=10):
    k1, k2, k3 = jax.random.split(key, 3)
    return {
        # PyTorch Conv2d weight layout: (Cout, Cin, kh, kw)
        "conv1_w": 0.1 * jax.random.normal(k1, (16, 1, 5, 5), jnp.float32),
        "conv1_b": jnp.zeros((16,), jnp.float32),   # unused: BN cancels conv bias
        "bn1_gamma": jnp.ones((16,), jnp.float32),
        "bn1_beta": jnp.zeros((16,), jnp.float32),
        "conv2_w": 0.05 * jax.random.normal(k2, (32, 16, 5, 5), jnp.float32),
        "conv2_b": jnp.zeros((32,), jnp.float32),   # unused: BN cancels conv bias
        "bn2_gamma": jnp.ones((32,), jnp.float32),
        "bn2_beta": jnp.zeros((32,), jnp.float32),
        # PyTorch Linear weight layout: (num_classes, 7*7*32)
        "fc_w": 0.02 * jax.random.normal(k3, (num_classes, 7 * 7 * 32), jnp.float32),
        "fc_b": jnp.zeros((num_classes,), jnp.float32),
    }


@jax.jit
def auto_quantized_net_forward(x_nchw, params):
    B, Cin, H, W = x_nchw.shape                # (B, 1, 28, 28)
    x = jnp.transpose(x_nchw, (0, 2, 3, 1))    # -> NHWC, channels on lanes

    # --- conv1 (tiled matmul + BN stats) -> BN+ReLU+pool (fused) ---
    p1 = _im2col(x.astype(jnp.bfloat16))                         # (B*28*28, 25)
    w1 = params["conv1_w"].reshape(16, Cin * 25).T.astype(jnp.bfloat16)
    y1, s1_sum, s1_ssq = conv_matmul_stats(p1, w1)               # y1: (M1, 16) f32
    sc1, sh1 = _bn_scale_shift(s1_sum, s1_ssq,
                               params["bn1_gamma"], params["bn1_beta"], B * H * W)
    h1 = bn_relu_pool(y1.reshape(B, H, W, 16), sc1, sh1)         # (B, 14, 14, 16)

    # --- conv2 (tiled matmul + BN stats) -> BN+ReLU+pool (fused) ---
    H2, W2 = H // 2, W // 2
    p2 = _im2col(h1.astype(jnp.bfloat16))                        # (B*14*14, 400)
    w2 = params["conv2_w"].reshape(32, 16 * 25).T.astype(jnp.bfloat16)
    y2, s2_sum, s2_ssq = conv_matmul_stats(p2, w2)               # y2: (M2, 32) f32
    sc2, sh2 = _bn_scale_shift(s2_sum, s2_ssq,
                               params["bn2_gamma"], params["bn2_beta"], B * H2 * W2)
    h2 = bn_relu_pool(y2.reshape(B, H2, W2, 32), sc2, sh2)       # (B, 7, 7, 32)

    # --- flatten in PyTorch NCHW order, then fc ---
    flat = jnp.transpose(h2, (0, 3, 1, 2)).reshape(B, -1).astype(jnp.bfloat16)
    wf = params["fc_w"].T.astype(jnp.bfloat16)                   # (1568, num_classes)
    return fc(flat, wf, params["fc_b"][None, :])


if __name__ == "__main__":
    key = jax.random.PRNGKey(0)
    xk, pk = jax.random.split(key)
    # fc expects 7*7*32 features => input must be (B, 1, 28, 28) (MNIST-like).
    x = jax.random.normal(xk, (2, 1, 28, 28), jnp.float32)
    params = init_params(pk, num_classes=10)

    out = auto_quantized_net_forward(x, params)
    out = jax.block_until_ready(out)
    assert out.shape == (2, 10) and out.dtype == jnp.float32
    print("KERNEL_OK")
</pallas_src>

<mosaic_0001>
module attributes {stable_mosaic.version = 11 : i64} {
  func.func @conv_stats_kernel(%arg0: i32, %arg1: memref<392x25xbf16, #tpu.memory_space<vmem>>, %arg2: memref<25x16xbf16, #tpu.memory_space<vmem>>, %arg3: memref<392x16xf32, #tpu.memory_space<vmem>>, %arg4: memref<1x16xf32, #tpu.memory_space<vmem>>, %arg5: memref<1x16xf32, #tpu.memory_space<vmem>>) attributes {dimension_semantics = [#tpu.dimension_semantics<arbitrary>], iteration_bounds = array<i64: 4>, scalar_prefetch = 0 : i64, scratch_operands = 0 : i64, tpu.core_type = #tpu.core_type<tc>, window_params = [{transform_indices = @transform_0, window_bounds = array<i64: 392, 25>}, {pipeline_mode = #tpu.pipeline_mode<synchronous>, transform_indices = @transform_1, window_bounds = array<i64: 25, 16>}, {transform_indices = @transform_2, window_bounds = array<i64: 392, 16>}, {pipeline_mode = #tpu.pipeline_mode<synchronous>, transform_indices = @transform_3, window_bounds = array<i64: 1, 16>}, {pipeline_mode = #tpu.pipeline_mode<synchronous>, transform_indices = @transform_4, window_bounds = array<i64: 1, 16>}]} {
    %c0 = arith.constant 0 : index
    %c0_0 = arith.constant 0 : index
    %0 = vector.load %arg1[%c0, %c0_0] : memref<392x25xbf16, #tpu.memory_space<vmem>>, vector<392x25xbf16>
    %c0_1 = arith.constant 0 : index
    %c0_2 = arith.constant 0 : index
    %1 = vector.load %arg2[%c0_1, %c0_2] : memref<25x16xbf16, #tpu.memory_space<vmem>>, vector<25x16xbf16>
    %cst = arith.constant dense<0.000000e+00> : vector<392x16xf32>
    %2 = tpu.matmul %0, %1, %cst {dimension_numbers = #tpu.dot_dimension_numbers<[1], [0], [0], [1], [0, 0, 1, 1], [], []>} : vector<392x25xbf16>, vector<25x16xbf16>, vector<392x16xf32> -> vector<392x16xf32>
    %c0_3 = arith.constant 0 : index
    %c0_4 = arith.constant 0 : index
    %3 = vector.load %arg3[%c0_3, %c0_4] : memref<392x16xf32, #tpu.memory_space<vmem>>, vector<392x16xf32>
    tpu.vector_store %arg3[%c0_3, %c0_4], %2 {strides = array<i32>} : memref<392x16xf32, #tpu.memory_space<vmem>>, vector<392x16xf32>,
    %c0_i32 = arith.constant 0 : i32
    %4 = arith.cmpi eq, %arg0, %c0_i32 : i32
    %5 = arith.extui %4 : i1 to i32
    %c0_i32_5 = arith.constant 0 : i32
    %6 = arith.cmpi ne, %5, %c0_i32_5 : i32
    scf.if %6 {
      %cst_16 = arith.constant 0.000000e+00 : f32
      %18 = vector.broadcast %cst_16 : f32 to vector<1x16xf32>
      %c0_17 = arith.constant 0 : index
      %c0_18 = arith.constant 0 : index
      %19 = vector.load %arg4[%c0_17, %c0_18] : memref<1x16xf32, #tpu.memory_space<vmem>>, vector<1x16xf32>
      tpu.vector_store %arg4[%c0_17, %c0_18], %18 {strides = array<i32>} : memref<1x16xf32, #tpu.memory_space<vmem>>, vector<1x16xf32>,
      %cst_19 = arith.constant 0.000000e+00 : f32
      %20 = vector.broadcast %cst_19 : f32 to vector<1x16xf32>
      %c0_20 = arith.constant 0 : index
      %c0_21 = arith.constant 0 : index
      %21 = vector.load %arg5[%c0_20, %c0_21] : memref<1x16xf32, #tpu.memory_space<vmem>>, vector<1x16xf32>
      tpu.vector_store %arg5[%c0_20, %c0_21], %20 {strides = array<i32>} : memref<1x16xf32, #tpu.memory_space<vmem>>, vector<1x16xf32>,
    } else {
    }
    %c0_6 = arith.constant 0 : index
    %c0_7 = arith.constant 0 : index
    %7 = vector.load %arg4[%c0_6, %c0_7] : memref<1x16xf32, #tpu.memory_space<vmem>>, vector<1x16xf32>
    %cst_8 = arith.constant dense<0.000000e+00> : vector<16xf32>
    %8 = vector.multi_reduction <add>, %2, %cst_8 [0] : vector<392x16xf32> to vector<16xf32>
    %9 = vector.shape_cast %8 : vector<16xf32> to vector<1x16xf32>
    %10 = arith.addf %7, %9 : vector<1x16xf32>
    %c0_9 = arith.constant 0 : index
    %c0_10 = arith.constant 0 : index
    %11 = vector.load %arg4[%c0_9, %c0_10] : memref<1x16xf32, #tpu.memory_space<vmem>>, vector<1x16xf32>
    tpu.vector_store %arg4[%c0_9, %c0_10], %10 {strides = array<i32>} : memref<1x16xf32, #tpu.memory_space<vmem>>, vector<1x16xf32>,
    %c0_11 = arith.constant 0 : index
    %c0_12 = arith.constant 0 : index
    %12 = vector.load %arg5[%c0_11, %c0_12] : memref<1x16xf32, #tpu.memory_space<vmem>>, vector<1x16xf32>
    %13 = arith.mulf %2, %2 : vector<392x16xf32>
    %cst_13 = arith.constant dense<0.000000e+00> : vector<16xf32>
    %14 = vector.multi_reduction <add>, %13, %cst_13 [0] : vector<392x16xf32> to vector<16xf32>
    %15 = vector.shape_cast %14 : vector<16xf32> to vector<1x16xf32>
    %16 = arith.addf %12, %15 : vector<1x16xf32>
    %c0_14 = arith.constant 0 : index
    %c0_15 = arith.constant 0 : index
    %17 = vector.load %arg5[%c0_14, %c0_15] : memref<1x16xf32, #tpu.memory_space<vmem>>, vector<1x16xf32>
    tpu.vector_store %arg5[%c0_14, %c0_15], %16 {strides = array<i32>} : memref<1x16xf32, #tpu.memory_space<vmem>>, vector<1x16xf32>,
    return
  }
  func.func @transform_0(%arg0: i32) -> (i32, i32) {
    %c0_i32 = arith.constant 0 : i32
    %c0_i32_0 = arith.constant 0 : i32
    return %arg0, %c0_i32 : i32, i32
  }
  func.func @transform_1(%arg0: i32) -> (i32, i32) {
    %c0_i32 = arith.constant 0 : i32
    %c0_i32_0 = arith.constant 0 : i32
    %c0_i32_1 = arith.constant 0 : i32
    return %c0_i32, %c0_i32_0 : i32, i32
  }
  func.func @transform_2(%arg0: i32) -> (i32, i32) {
    %c0_i32 = arith.constant 0 : i32
    %c0_i32_0 = arith.constant 0 : i32
    return %arg0, %c0_i32 : i32, i32
  }
  func.func @transform_3(%arg0: i32) -> (i32, i32) {
    %c0_i32 = arith.constant 0 : i32
    %c0_i32_0 = arith.constant 0 : i32
    %c0_i32_1 = arith.constant 0 : i32
    return %c0_i32, %c0_i32_0 : i32, i32
  }
  func.func @transform_4(%arg0: i32) -> (i32, i32) {
    %c0_i32 = arith.constant 0 : i32
    %c0_i32_0 = arith.constant 0 : i32
    %c0_i32_1 = arith.constant 0 : i32
    return %c0_i32, %c0_i32_0 : i32, i32
  }
}

module attributes {stable_mosaic.version = 11 : i64} {
  func.func @bn_relu_pool_kernel(%arg0: i32, %arg1: memref<1x28x28x16xf32, #tpu.memory_space<vmem>>, %arg2: memref<1x16xf32, #tpu.memory_space<vmem>>, %arg3: memref<1x16xf32, #tpu.memory_space<vmem>>, %arg4: memref<1x14x14x16xf32, #tpu.memory_space<vmem>>, %arg5: memref<14x28x16xf32, #tpu.memory_space<vmem>>) attributes {dimension_semantics = [#tpu.dimension_semantics<parallel>], iteration_bounds = array<i64: 2>, scalar_prefetch = 0 : i64, scratch_operands = 1 : i64, tpu.core_type = #tpu.core_type<tc>, window_params = [{transform_indices = @transform_0, window_bounds = array<i64: 1, 28, 28, 16>}, {pipeline_mode = #tpu.pipeline_mode<synchronous>, transform_indices = @transform_1, window_bounds = array<i64: 1, 16>}, {pipeline_mode = #tpu.pipeline_mode<synchronous>, transform_indices = @transform_2, window_bounds = array<i64: 1, 16>}, {transform_indices = @transform_3, window_bounds = array<i64: 1, 14, 14, 16>}]} {
    %c0 = arith.constant 0 : index
    %c0_0 = arith.constant 0 : index
    %0 = vector.load %arg2[%c0, %c0_0] : memref<1x16xf32, #tpu.memory_space<vmem>>, vector<1x16xf32>
    %c0_1 = arith.constant 0 : index
    %c0_2 = arith.constant 0 : index
    %1 = vector.load %arg3[%c0_1, %c0_2] : memref<1x16xf32, #tpu.memory_space<vmem>>, vector<1x16xf32>
    %c0_3 = arith.constant 0 : index
    %c0_4 = arith.constant 0 : index
    %c0_5 = arith.constant 0 : index
    %c0_6 = arith.constant 0 : index
    %2 = vector.load %arg1[%c0_3, %c0_4, %c0_5, %c0_6] : memref<1x28x28x16xf32, #tpu.memory_space<vmem>>, vector<1x28x28x16xf32>
    %3 = vector.shape_cast %2 : vector<1x28x28x16xf32> to vector<28x28x16xf32>
    %4 = vector.shape_cast %3 : vector<28x28x16xf32> to vector<14x2x28x16xf32>
    %5 = vector.extract_strided_slice %4 {offsets = [0, 0, 0, 0], sizes = [14, 1, 28, 16], strides = [1, 1, 1, 1]} : vector<14x2x28x16xf32> to vector<14x1x28x16xf32>
    %6 = vector.shape_cast %5 : vector<14x1x28x16xf32> to vector<14x28x16xf32>
    %7 = vector.shape_cast %0 : vector<1x16xf32> to vector<1x1x16xf32>
    %8 = vector.broadcast %7 : vector<1x1x16xf32> to vector<14x28x16xf32>
    %9 = arith.mulf %6, %8 : vector<14x28x16xf32>
    %10 = vector.shape_cast %1 : vector<1x16xf32> to vector<1x1x16xf32>
    %11 = vector.broadcast %10 : vector<1x1x16xf32> to vector<14x28x16xf32>
    %12 = arith.addf %9, %11 : vector<14x28x16xf32>
    %13 = vector.extract_strided_slice %4 {offsets = [0, 1, 0, 0], sizes = [14, 1, 28, 16], strides = [1, 1, 1, 1]} : vector<14x2x28x16xf32> to vector<14x1x28x16xf32>
    %14 = vector.shape_cast %13 : vector<14x1x28x16xf32> to vector<14x28x16xf32>
    %15 = vector.shape_cast %0 : vector<1x16xf32> to vector<1x1x16xf32>
    %16 = vector.broadcast %15 : vector<1x1x16xf32> to vector<14x28x16xf32>
    %17 = arith.mulf %14, %16 : vector<14x28x16xf32>
    %18 = vector.shape_cast %1 : vector<1x16xf32> to vector<1x1x16xf32>
    %19 = vector.broadcast %18 : vector<1x1x16xf32> to vector<14x28x16xf32>
    %20 = arith.addf %17, %19 : vector<14x28x16xf32>
    %21 = arith.maximumf %12, %20 : vector<14x28x16xf32>
    %c0_7 = arith.constant 0 : index
    %c0_8 = arith.constant 0 : index
    %c0_9 = arith.constant 0 : index
    %22 = vector.load %arg5[%c0_7, %c0_8, %c0_9] : memref<14x28x16xf32, #tpu.memory_space<vmem>>, vector<14x28x16xf32>
    tpu.vector_store %arg5[%c0_7, %c0_8, %c0_9], %21 {strides = array<i32>} : memref<14x28x16xf32, #tpu.memory_space<vmem>>, vector<14x28x16xf32>,
    %c0_10 = arith.constant 0 : index
    %c0_11 = arith.constant 0 : index
    %c0_12 = arith.constant 0 : index
    %23 = tpu.strided_load %arg5[%c0_10, %c0_11, %c0_12] {strides = array<i32: 1, 2, 1>} : memref<14x28x16xf32, #tpu.memory_space<vmem>>, vector<14x14x16xf32>
    %c0_13 = arith.constant 0 : index
    %c1 = arith.constant 1 : index
    %c0_14 = arith.constant 0 : index
    %24 = tpu.strided_load %arg5[%c0_13, %c1, %c0_14] {strides = array<i32: 1, 2, 1>} : memref<14x28x16xf32, #tpu.memory_space<vmem>>, vector<14x14x16xf32>
    %25 = arith.maximumf %23, %24 : vector<14x14x16xf32>
    %cst = arith.constant 0.000000e+00 : f32
    %26 = vector.broadcast %cst : f32 to vector<14x14x16xf32>
    %27 = arith.maximumf %25, %26 : vector<14x14x16xf32>
    %c0_15 = arith.constant 0 : index
    %c0_16 = arith.constant 0 : index
    %c0_17 = arith.constant 0 : index
    %c0_18 = arith.constant 0 : index
    %28 = vector.load %arg4[%c0_15, %c0_16, %c0_17, %c0_18] : memref<1x14x14x16xf32, #tpu.memory_space<vmem>>, vector<1x14x14x16xf32>
    %29 = vector.shape_cast %28 : vector<1x14x14x16xf32> to vector<14x14x16xf32>
    %30 = vector.shape_cast %27 : vector<14x14x16xf32> to vector<1x14x14x16xf32>
    tpu.vector_store %arg4[%c0_15, %c0_16, %c0_17, %c0_18], %30 {strides = array<i32>} : memref<1x14x14x16xf32, #tpu.memory_space<vmem>>, vector<1x14x14x16xf32>,
    return
  }
  func.func @transform_0(%arg0: i32) -> (i32, i32, i32, i32) {
    %c0_i32 = arith.constant 0 : i32
    %c0_i32_0 = arith.constant 0 : i32
    %c0_i32_1 = arith.constant 0 : i32
    %c0_i32_2 = arith.constant 0 : i32
    return %arg0, %c0_i32, %c0_i32_0, %c0_i32_1 : i32, i32, i32, i32
  }
  func.func @transform_1(%arg0: i32) -> (i32, i32) {
    %c0_i32 = arith.constant 0 : i32
    %c0_i32_0 = arith.constant 0 : i32
    %c0_i32_1 = arith.constant 0 : i32
    return %c0_i32, %c0_i32_0 : i32, i32
  }
  func.func @transform_2(%arg0: i32) -> (i32, i32) {
    %c0_i32 = arith.constant 0 : i32
    %c0_i32_0 = arith.constant 0 : i32
    %c0_i32_1 = arith.constant 0 : i32
    return %c0_i32, %c0_i32_0 : i32, i32
  }
  func.func @transform_3(%arg0: i32) -> (i32, i32, i32, i32) {
    %c0_i32 = arith.constant 0 : i32
    %c0_i32_0 = arith.constant 0 : i32
    %c0_i32_1 = arith.constant 0 : i32
    %c0_i32_2 = arith.constant 0 : i32
    return %arg0, %c0_i32, %c0_i32_0, %c0_i32_1 : i32, i32, i32, i32
  }
}

module attributes {stable_mosaic.version = 11 : i64} {
  func.func @conv_stats_kernel(%arg0: i32, %arg1: memref<392x400xbf16, #tpu.memory_space<vmem>>, %arg2: memref<400x32xbf16, #tpu.memory_space<vmem>>, %arg3: memref<392x32xf32, #tpu.memory_space<vmem>>, %arg4: memref<1x32xf32, #tpu.memory_space<vmem>>, %arg5: memref<1x32xf32, #tpu.memory_space<vmem>>) attributes {dimension_semantics = [#tpu.dimension_semantics<arbitrary>], iteration_bounds = array<i64: 1>, scalar_prefetch = 0 : i64, scratch_operands = 0 : i64, tpu.core_type = #tpu.core_type<tc>, window_params = [{transform_indices = @transform_0, window_bounds = array<i64: 392, 400>}, {pipeline_mode = #tpu.pipeline_mode<synchronous>, transform_indices = @transform_1, window_bounds = array<i64: 400, 32>}, {transform_indices = @transform_2, window_bounds = array<i64: 392, 32>}, {pipeline_mode = #tpu.pipeline_mode<synchronous>, transform_indices = @transform_3, window_bounds = array<i64: 1, 32>}, {pipeline_mode = #tpu.pipeline_mode<synchronous>, transform_indices = @transform_4, window_bounds = array<i64: 1, 32>}]} {
    %c0 = arith.constant 0 : index
    %c0_0 = arith.constant 0 : index
    %0 = vector.load %arg1[%c0, %c0_0] : memref<392x400xbf16, #tpu.memory_space<vmem>>, vector<392x400xbf16>
    %c0_1 = arith.constant 0 : index
    %c0_2 = arith.constant 0 : index
    %1 = vector.load %arg2[%c0_1, %c0_2] : memref<400x32xbf16, #tpu.memory_space<vmem>>, vector<400x32xbf16>
    %cst = arith.constant dense<0.000000e+00> : vector<392x32xf32>
    %2 = tpu.matmul %0, %1, %cst {dimension_numbers = #tpu.dot_dimension_numbers<[1], [0], [0], [1], [0, 0, 1, 1], [], []>} : vector<392x400xbf16>, vector<400x32xbf16>, vector<392x32xf32> -> vector<392x32xf32>
    %c0_3 = arith.constant 0 : index
    %c0_4 = arith.constant 0 : index
    %3 = vector.load %arg3[%c0_3, %c0_4] : memref<392x32xf32, #tpu.memory_space<vmem>>, vector<392x32xf32>
    tpu.vector_store %arg3[%c0_3, %c0_4], %2 {strides = array<i32>} : memref<392x32xf32, #tpu.memory_space<vmem>>, vector<392x32xf32>,
    %c0_i32 = arith.constant 0 : i32
    %4 = arith.cmpi eq, %arg0, %c0_i32 : i32
    %5 = arith.extui %4 : i1 to i32
    %c0_i32_5 = arith.constant 0 : i32
    %6 = arith.cmpi ne, %5, %c0_i32_5 : i32
    scf.if %6 {
      %cst_16 = arith.constant 0.000000e+00 : f32
      %18 = vector.broadcast %cst_16 : f32 to vector<1x32xf32>
      %c0_17 = arith.constant 0 : index
      %c0_18 = arith.constant 0 : index
      %19 = vector.load %arg4[%c0_17, %c0_18] : memref<1x32xf32, #tpu.memory_space<vmem>>, vector<1x32xf32>
      tpu.vector_store %arg4[%c0_17, %c0_18], %18 {strides = array<i32>} : memref<1x32xf32, #tpu.memory_space<vmem>>, vector<1x32xf32>,
      %cst_19 = arith.constant 0.000000e+00 : f32
      %20 = vector.broadcast %cst_19 : f32 to vector<1x32xf32>
      %c0_20 = arith.constant 0 : index
      %c0_21 = arith.constant 0 : index
      %21 = vector.load %arg5[%c0_20, %c0_21] : memref<1x32xf32, #tpu.memory_space<vmem>>, vector<1x32xf32>
      tpu.vector_store %arg5[%c0_20, %c0_21], %20 {strides = array<i32>} : memref<1x32xf32, #tpu.memory_space<vmem>>, vector<1x32xf32>,
    } else {
    }
    %c0_6 = arith.constant 0 : index
    %c0_7 = arith.constant 0 : index
    %7 = vector.load %arg4[%c0_6, %c0_7] : memref<1x32xf32, #tpu.memory_space<vmem>>, vector<1x32xf32>
    %cst_8 = arith.constant dense<0.000000e+00> : vector<32xf32>
    %8 = vector.multi_reduction <add>, %2, %cst_8 [0] : vector<392x32xf32> to vector<32xf32>
    %9 = vector.shape_cast %8 : vector<32xf32> to vector<1x32xf32>
    %10 = arith.addf %7, %9 : vector<1x32xf32>
    %c0_9 = arith.constant 0 : index
    %c0_10 = arith.constant 0 : index
    %11 = vector.load %arg4[%c0_9, %c0_10] : memref<1x32xf32, #tpu.memory_space<vmem>>, vector<1x32xf32>
    tpu.vector_store %arg4[%c0_9, %c0_10], %10 {strides = array<i32>} : memref<1x32xf32, #tpu.memory_space<vmem>>, vector<1x32xf32>,
    %c0_11 = arith.constant 0 : index
    %c0_12 = arith.constant 0 : index
    %12 = vector.load %arg5[%c0_11, %c0_12] : memref<1x32xf32, #tpu.memory_space<vmem>>, vector<1x32xf32>
    %13 = arith.mulf %2, %2 : vector<392x32xf32>
    %cst_13 = arith.constant dense<0.000000e+00> : vector<32xf32>
    %14 = vector.multi_reduction <add>, %13, %cst_13 [0] : vector<392x32xf32> to vector<32xf32>
    %15 = vector.shape_cast %14 : vector<32xf32> to vector<1x32xf32>
    %16 = arith.addf %12, %15 : vector<1x32xf32>
    %c0_14 = arith.constant 0 : index
    %c0_15 = arith.constant 0 : index
    %17 = vector.load %arg5[%c0_14, %c0_15] : memref<1x32xf32, #tpu.memory_space<vmem>>, vector<1x32xf32>
    tpu.vector_store %arg5[%c0_14, %c0_15], %16 {strides = array<i32>} : memref<1x32xf32, #tpu.memory_space<vmem>>, vector<1x32xf32>,
    return
  }
  func.func @transform_0(%arg0: i32) -> (i32, i32) {
    %c0_i32 = arith.constant 0 : i32
    %c0_i32_0 = arith.constant 0 : i32
    return %arg0, %c0_i32 : i32, i32
  }
  func.func @transform_1(%arg0: i32) -> (i32, i32) {
    %c0_i32 = arith.constant 0 : i32
    %c0_i32_0 = arith.constant 0 : i32
    %c0_i32_1 = arith.constant 0 : i32
    return %c0_i32, %c0_i32_0 : i32, i32
  }
  func.func @transform_2(%arg0: i32) -> (i32, i32) {
    %c0_i32 = arith.constant 0 : i32
    %c0_i32_0 = arith.constant 0 : i32
    return %arg0, %c0_i32 : i32, i32
  }
  func.func @transform_3(%arg0: i32) -> (i32, i32) {
    %c0_i32 = arith.constant 0 : i32
    %c0_i32_0 = arith.constant 0 : i32
    %c0_i32_1 = arith.constant 0 : i32
    return %c0_i32, %c0_i32_0 : i32, i32
  }
  func.func @transform_4(%arg0: i32) -> (i32, i32) {
    %c0_i32 = arith.constant 0 : i32
    %c0_i32_0 = arith.constant 0 : i32
    %c0_i32_1 = arith.constant 0 : i32
    return %c0_i32, %c0_i32_0 : i32, i32
  }
}

module attributes {stable_mosaic.version = 11 : i64} {
  func.func @bn_relu_pool_kernel(%arg0: i32, %arg1: memref<1x14x14x32xf32, #tpu.memory_space<vmem>>, %arg2: memref<1x32xf32, #tpu.memory_space<vmem>>, %arg3: memref<1x32xf32, #tpu.memory_space<vmem>>, %arg4: memref<1x7x7x32xf32, #tpu.memory_space<vmem>>, %arg5: memref<7x14x32xf32, #tpu.memory_space<vmem>>) attributes {dimension_semantics = [#tpu.dimension_semantics<parallel>], iteration_bounds = array<i64: 2>, scalar_prefetch = 0 : i64, scratch_operands = 1 : i64, tpu.core_type = #tpu.core_type<tc>, window_params = [{transform_indices = @transform_0, window_bounds = array<i64: 1, 14, 14, 32>}, {pipeline_mode = #tpu.pipeline_mode<synchronous>, transform_indices = @transform_1, window_bounds = array<i64: 1, 32>}, {pipeline_mode = #tpu.pipeline_mode<synchronous>, transform_indices = @transform_2, window_bounds = array<i64: 1, 32>}, {transform_indices = @transform_3, window_bounds = array<i64: 1, 7, 7, 32>}]} {
    %c0 = arith.constant 0 : index
    %c0_0 = arith.constant 0 : index
    %0 = vector.load %arg2[%c0, %c0_0] : memref<1x32xf32, #tpu.memory_space<vmem>>, vector<1x32xf32>
    %c0_1 = arith.constant 0 : index
    %c0_2 = arith.constant 0 : index
    %1 = vector.load %arg3[%c0_1, %c0_2] : memref<1x32xf32, #tpu.memory_space<vmem>>, vector<1x32xf32>
    %c0_3 = arith.constant 0 : index
    %c0_4 = arith.constant 0 : index
    %c0_5 = arith.constant 0 : index
    %c0_6 = arith.constant 0 : index
    %2 = vector.load %arg1[%c0_3, %c0_4, %c0_5, %c0_6] : memref<1x14x14x32xf32, #tpu.memory_space<vmem>>, vector<1x14x14x32xf32>
    %3 = vector.shape_cast %2 : vector<1x14x14x32xf32> to vector<14x14x32xf32>
    %4 = vector.shape_cast %3 : vector<14x14x32xf32> to vector<7x2x14x32xf32>
    %5 = vector.extract_strided_slice %4 {offsets = [0, 0, 0, 0], sizes = [7, 1, 14, 32], strides = [1, 1, 1, 1]} : vector<7x2x14x32xf32> to vector<7x1x14x32xf32>
    %6 = vector.shape_cast %5 : vector<7x1x14x32xf32> to vector<7x14x32xf32>
    %7 = vector.shape_cast %0 : vector<1x32xf32> to vector<1x1x32xf32>
    %8 = vector.broadcast %7 : vector<1x1x32xf32> to vector<7x14x32xf32>
    %9 = arith.mulf %6, %8 : vector<7x14x32xf32>
    %10 = vector.shape_cast %1 : vector<1x32xf32> to vector<1x1x32xf32>
    %11 = vector.broadcast %10 : vector<1x1x32xf32> to vector<7x14x32xf32>
    %12 = arith.addf %9, %11 : vector<7x14x32xf32>
    %13 = vector.extract_strided_slice %4 {offsets = [0, 1, 0, 0], sizes = [7, 1, 14, 32], strides = [1, 1, 1, 1]} : vector<7x2x14x32xf32> to vector<7x1x14x32xf32>
    %14 = vector.shape_cast %13 : vector<7x1x14x32xf32> to vector<7x14x32xf32>
    %15 = vector.shape_cast %0 : vector<1x32xf32> to vector<1x1x32xf32>
    %16 = vector.broadcast %15 : vector<1x1x32xf32> to vector<7x14x32xf32>
    %17 = arith.mulf %14, %16 : vector<7x14x32xf32>
    %18 = vector.shape_cast %1 : vector<1x32xf32> to vector<1x1x32xf32>
    %19 = vector.broadcast %18 : vector<1x1x32xf32> to vector<7x14x32xf32>
    %20 = arith.addf %17, %19 : vector<7x14x32xf32>
    %21 = arith.maximumf %12, %20 : vector<7x14x32xf32>
    %c0_7 = arith.constant 0 : index
    %c0_8 = arith.constant 0 : index
    %c0_9 = arith.constant 0 : index
    %22 = vector.load %arg5[%c0_7, %c0_8, %c0_9] : memref<7x14x32xf32, #tpu.memory_space<vmem>>, vector<7x14x32xf32>
    tpu.vector_store %arg5[%c0_7, %c0_8, %c0_9], %21 {strides = array<i32>} : memref<7x14x32xf32, #tpu.memory_space<vmem>>, vector<7x14x32xf32>,
    %c0_10 = arith.constant 0 : index
    %c0_11 = arith.constant 0 : index
    %c0_12 = arith.constant 0 : index
    %23 = tpu.strided_load %arg5[%c0_10, %c0_11, %c0_12] {strides = array<i32: 1, 2, 1>} : memref<7x14x32xf32, #tpu.memory_space<vmem>>, vector<7x7x32xf32>
    %c0_13 = arith.constant 0 : index
    %c1 = arith.constant 1 : index
    %c0_14 = arith.constant 0 : index
    %24 = tpu.strided_load %arg5[%c0_13, %c1, %c0_14] {strides = array<i32: 1, 2, 1>} : memref<7x14x32xf32, #tpu.memory_space<vmem>>, vector<7x7x32xf32>
    %25 = arith.maximumf %23, %24 : vector<7x7x32xf32>
    %cst = arith.constant 0.000000e+00 : f32
    %26 = vector.broadcast %cst : f32 to vector<7x7x32xf32>
    %27 = arith.maximumf %25, %26 : vector<7x7x32xf32>
    %c0_15 = arith.constant 0 : index
    %c0_16 = arith.constant 0 : index
    %c0_17 = arith.constant 0 : index
    %c0_18 = arith.constant 0 : index
    %28 = vector.load %arg4[%c0_15, %c0_16, %c0_17, %c0_18] : memref<1x7x7x32xf32, #tpu.memory_space<vmem>>, vector<1x7x7x32xf32>
    %29 = vector.shape_cast %28 : vector<1x7x7x32xf32> to vector<7x7x32xf32>
    %30 = vector.shape_cast %27 : vector<7x7x32xf32> to vector<1x7x7x32xf32>
    tpu.vector_store %arg4[%c0_15, %c0_16, %c0_17, %c0_18], %30 {strides = array<i32>} : memref<1x7x7x32xf32, #tpu.memory_space<vmem>>, vector<1x7x7x32xf32>,
    return
  }
  func.func @transform_0(%arg0: i32) -> (i32, i32, i32, i32) {
    %c0_i32 = arith.constant 0 : i32
    %c0_i32_0 = arith.constant 0 : i32
    %c0_i32_1 = arith.constant 0 : i32
    %c0_i32_2 = arith.constant 0 : i32
    return %arg0, %c0_i32, %c0_i32_0, %c0_i32_1 : i32, i32, i32, i32
  }
  func.func @transform_1(%arg0: i32) -> (i32, i32) {
    %c0_i32 = arith.constant 0 : i32
    %c0_i32_0 = arith.constant 0 : i32
    %c0_i32_1 = arith.constant 0 : i32
    return %c0_i32, %c0_i32_0 : i32, i32
  }
  func.func @transform_2(%arg0: i32) -> (i32, i32) {
    %c0_i32 = arith.constant 0 : i32
    %c0_i32_0 = arith.constant 0 : i32
    %c0_i32_1 = arith.constant 0 : i32
    return %c0_i32, %c0_i32_0 : i32, i32
  }
  func.func @transform_3(%arg0: i32) -> (i32, i32, i32, i32) {
    %c0_i32 = arith.constant 0 : i32
    %c0_i32_0 = arith.constant 0 : i32
    %c0_i32_1 = arith.constant 0 : i32
    %c0_i32_2 = arith.constant 0 : i32
    return %arg0, %c0_i32, %c0_i32_0, %c0_i32_1 : i32, i32, i32, i32
  }
}

module attributes {stable_mosaic.version = 11 : i64} {
  func.func @fc_kernel(%arg0: i32, %arg1: memref<2x1568xbf16, #tpu.memory_space<vmem>>, %arg2: memref<1568x10xbf16, #tpu.memory_space<vmem>>, %arg3: memref<1x10xf32, #tpu.memory_space<vmem>>, %arg4: memref<2x10xf32, #tpu.memory_space<vmem>>) attributes {dimension_semantics = [#tpu.dimension_semantics<parallel>], iteration_bounds = array<i64: 1>, scalar_prefetch = 0 : i64, scratch_operands = 0 : i64, tpu.core_type = #tpu.core_type<tc>, window_params = [{transform_indices = @transform_0, window_bounds = array<i64: 2, 1568>}, {pipeline_mode = #tpu.pipeline_mode<synchronous>, transform_indices = @transform_1, window_bounds = array<i64: 1568, 10>}, {pipeline_mode = #tpu.pipeline_mode<synchronous>, transform_indices = @transform_2, window_bounds = array<i64: 1, 10>}, {transform_indices = @transform_3, window_bounds = array<i64: 2, 10>}]} {
    %c0 = arith.constant 0 : index
    %c0_0 = arith.constant 0 : index
    %0 = vector.load %arg1[%c0, %c0_0] : memref<2x1568xbf16, #tpu.memory_space<vmem>>, vector<2x1568xbf16>
    %c0_1 = arith.constant 0 : index
    %c0_2 = arith.constant 0 : index
    %1 = vector.load %arg2[%c0_1, %c0_2] : memref<1568x10xbf16, #tpu.memory_space<vmem>>, vector<1568x10xbf16>
    %cst = arith.constant dense<0.000000e+00> : vector<2x10xf32>
    %2 = tpu.matmul %0, %1, %cst {dimension_numbers = #tpu.dot_dimension_numbers<[1], [0], [0], [1], [0, 0, 1, 1], [], []>} : vector<2x1568xbf16>, vector<1568x10xbf16>, vector<2x10xf32> -> vector<2x10xf32>
    %c0_3 = arith.constant 0 : index
    %c0_4 = arith.constant 0 : index
    %3 = vector.load %arg3[%c0_3, %c0_4] : memref<1x10xf32, #tpu.memory_space<vmem>>, vector<1x10xf32>
    %4 = vector.broadcast %3 : vector<1x10xf32> to vector<2x10xf32>
    %5 = arith.addf %2, %4 : vector<2x10xf32>
    %c0_5 = arith.constant 0 : index
    %c0_6 = arith.constant 0 : index
    %6 = vector.load %arg4[%c0_5, %c0_6] : memref<2x10xf32, #tpu.memory_space<vmem>>, vector<2x10xf32>
    tpu.vector_store %arg4[%c0_5, %c0_6], %5 {strides = array<i32>} : memref<2x10xf32, #tpu.memory_space<vmem>>, vector<2x10xf32>,
    return
  }
  func.func @transform_0(%arg0: i32) -> (i32, i32) {
    %c0_i32 = arith.constant 0 : i32
    %c0_i32_0 = arith.constant 0 : i32
    return %arg0, %c0_i32 : i32, i32
  }
  func.func @transform_1(%arg0: i32) -> (i32, i32) {
    %c0_i32 = arith.constant 0 : i32
    %c0_i32_0 = arith.constant 0 : i32
    %c0_i32_1 = arith.constant 0 : i32
    return %c0_i32, %c0_i32_0 : i32, i32
  }
  func.func @transform_2(%arg0: i32) -> (i32, i32) {
    %c0_i32 = arith.constant 0 : i32
    %c0_i32_0 = arith.constant 0 : i32
    %c0_i32_1 = arith.constant 0 : i32
    return %c0_i32, %c0_i32_0 : i32, i32
  }
  func.func @transform_3(%arg0: i32) -> (i32, i32) {
    %c0_i32 = arith.constant 0 : i32
    %c0_i32_0 = arith.constant 0 : i32
    return %arg0, %c0_i32 : i32, i32
  }
}

</mosaic_0001>

<llo_original>
// kernel: auto_quantized_net_forward.5
$region0: #{auto_quantized_net_forward.5}
  #allocation0 [shape = 'u32[]', space=smem, size = 0x4, offset = 0x4, fixed_abs, tag = 'smem constant byte address 0x4 - core index']
  #allocation1 [shape = 'u32[144,128]{1,0:T(1,128)}', space=vmem, size = 0x12000, scoped, tag = 'internal scratch']
  %s0 = inlined_call_operand.vmem [shape: bf16[1568,25], index: 0, kind: input, shape index: {}]
  %s1 = inlined_call_operand.vmem [shape: bf16[25,16], index: 1, kind: input, shape index: {}]
  %s2 = inlined_call_operand.vmem [shape: f32[1568,16], index: 2, kind: output, shape index: {0}]
  %s3 = inlined_call_operand.vmem [shape: f32[1,16], index: 3, kind: output, shape index: {1}]
  %s4 = inlined_call_operand.vmem [shape: f32[1,16], index: 4, kind: output, shape index: {2}]
  %5 = xla_tuple %s2, %s3, %s4
  %s6 = sld [smem:[#allocation0]]
  $region61: #{auto_quantized_net_forward.5} parent=0
    _
  %s8 = ssub.s32 1, %s6
  %s9 = scalar_select 0, %s8, %s6
  loop: start=0, step=1, limit=6
  $region2: #{auto_quantized_net_forward.5} parent=0 // loop_pre_header
    _
  $region3: #{auto_quantized_net_forward.5} parent=0 // loop_header
    %s11 = sphi 0, %s15
    %p12 = scmp.ge.s32.totalorder %s11, 6
    %s21 = sphi 0, %s23
    %s24 = sphi 0, %s21
    %s25 = sphi 0, %s24
    %s41 = sphi 0, %s25
    %s45 = sphi 0, %s45
    %s47 = sphi 0, %s45
    %s48 = sphi 0, %s47
    %s62 = sphi 0, %s48
    %s68 = sphi 0, %s70
    %s71 = sphi 0, %s68
    %s72 = sphi 0, %s71
    %s88 = sphi 0, %s72
    %s92 = sphi 0, %s92
    %s94 = sphi 0, %s92
    %s95 = sphi 0, %s94
    %s109 = sphi 0, %s95
    %s113 = sphi 0, %s113
    %s115 = sphi 0, %s113
    %s116 = sphi 0, %s115
    %s130 = sphi 0, %s116
  $region4: #{auto_quantized_net_forward.5} parent=0 // loop_header_branch
    %14 = sbr.rel (%p12) target = $region8
  $region5: #{auto_quantized_net_forward.5} parent=0 // loop_body
    %s16 = ssub.s32 %s11, 1
    %s17 = ssub.s32 %s11, 2
    %s18 = sadd.s32 %s11, 1
    %s19 = ssub.s32 %s11, %s18
    %p20 = scmp.eq.s32.totalorder %s19, 0
    %s22 = sadd.s32 %s21, 1
    %s23 = scalar_select %p20, %s21, %s22
    %p26 = pneg %p20
    %p27 = scmp.eq.s32.totalorder %s11, 3
    %p28 = por %p26, %p27
    %p29 = scmp.ne.s32.totalorder %s21, %s24
    %p30 = scmp.eq.s32.totalorder %s11, 0
    %p31 = por %p29, %p30
    %p32 = scmp.ne.s32.totalorder %s21, %s24
    %p33 = scmp.eq.s32.totalorder %s16, 3
    %p34 = por %p32, %p33
    %p35 = scmp.ne.s32.totalorder %s24, %s25
    %p36 = scmp.eq.s32.totalorder %s16, 0
    %p37 = por %p35, %p36
    %p38 = scmp.ne.s32.totalorder %s24, %s25
    %p39 = scmp.eq.s32.totalorder %s17, 3
    %p40 = por %p38, %p39
    %p42 = scmp.ne.s32.totalorder %s25, %s41
    %p43 = scmp.eq.s32.totalorder %s17, 0
    %p44 = por %p42, %p43
    %s46 = sadd.s32 %s45, 1
    %p49 = scmp.eq.s32.totalorder %s11, 3
    %p50 = scmp.ne.s32.totalorder %s45, %s47
    %p51 = scmp.eq.s32.totalorder %s11, 0
    %p52 = por %p50, %p51
    %p53 = scmp.ne.s32.totalorder %s45, %s47
    %p54 = scmp.eq.s32.totalorder %s16, 3
    %p55 = por %p53, %p54
    %p56 = scmp.ne.s32.totalorder %s47, %s48
    %p57 = scmp.eq.s32.totalorder %s16, 0
    %p58 = por %p56, %p57
    %p59 = scmp.ne.s32.totalorder %s47, %s48
    %p60 = scmp.eq.s32.totalorder %s17, 3
    %p61 = por %p59, %p60
    %p63 = scmp.ne.s32.totalorder %s48, %s62
    %p64 = scmp.eq.s32.totalorder %s17, 0
    %p65 = por %p63, %p64
    %s66 = ssub.s32 %s11, %s18
    %p67 = scmp.eq.s32.totalorder %s66, 0
    %s69 = sadd.s32 %s68, 1
    %s70 = scalar_select %p67, %s68, %s69
    %p73 = pneg %p67
    %p74 = scmp.eq.s32.totalorder %s11, 3
    %p75 = por %p73, %p74
    %p76 = scmp.ne.s32.totalorder %s68, %s71
    %p77 = scmp.eq.s32.totalorder %s11, 0
    %p78 = por %p76, %p77
    %p79 = scmp.ne.s32.totalorder %s68, %s71
    %p80 = scmp.eq.s32.totalorder %s16, 3
    %p81 = por %p79, %p80
    %p82 = scmp.ne.s32.totalorder %s71, %s72
    %p83 = scmp.eq.s32.totalorder %s16, 0
    %p84 = por %p82, %p83
    %p85 = scmp.ne.s32.totalorder %s71, %s72
    %p86 = scmp.eq.s32.totalorder %s17, 3
    %p87 = por %p85, %p86
    %p89 = scmp.ne.s32.totalorder %s72, %s88
    %p90 = scmp.eq.s32.totalorder %s17, 0
    %p91 = por %p89, %p90
    %s93 = sadd.s32 %s92, 1
    %p96 = scmp.eq.s32.totalorder %s11, 3
    %p97 = scmp.ne.s32.totalorder %s92, %s94
    %p98 = scmp.eq.s32.totalorder %s11, 0
    %p99 = por %p97, %p98
    %p100 = scmp.ne.s32.totalorder %s92, %s94
    %p101 = scmp.eq.s32.totalorder %s16, 3
    %p102 = por %p100, %p101
    %p103 = scmp.ne.s32.totalorder %s94, %s95
    %p104 = scmp.eq.s32.totalorder %s16, 0
    %p105 = por %p103, %p104
    %p106 = scmp.ne.s32.totalorder %s94, %s95
    %p107 = scmp.eq.s32.totalorder %s17, 3
    %p108 = por %p106, %p107
    %p110 = scmp.ne.s32.totalorder %s95, %s109
    %p111 = scmp.eq.s32.totalorder %s17, 0
    %p112 = por %p110, %p111
    %s114 = sadd.s32 %s113, 1
    %p117 = scmp.eq.s32.totalorder %s11, 3
    %p118 = scmp.ne.s32.totalorder %s113, %s115
    %p119 = scmp.eq.s32.totalorder %s11, 0
    %p120 = por %p118, %p119
    %p121 = scmp.ne.s32.totalorder %s113, %s115
    %p122 = scmp.eq.s32.totalorder %s16, 3
    %p123 = por %p121, %p122
    %p124 = scmp.ne.s32.totalorder %s115, %s116
    %p125 = scmp.eq.s32.totalorder %s16, 0
    %p126 = por %p124, %p125
    %p127 = scmp.ne.s32.totalorder %s115, %s116
    %p128 = scmp.eq.s32.totalorder %s17, 3
    %p129 = por %p127, %p128
    %p131 = scmp.ne.s32.totalorder %s116, %s130
    %p132 = scmp.eq.s32.totalorder %s17, 0
    %p133 = por %p131, %p132
    %p134 = scmp.le.s32.totalorder 1, %s11
    %p135 = scmp.lt.s32.totalorder %s11, 5
    %p136 = pnand %p134, %p135
    %p137 = pneg %p136
    // Predicated region
    $region9: #{auto_quantized_net_forward.5} parent=5 // pred_check
      _
    $region10: #{auto_quantized_net_forward.5} parent=5 // pred_check_branch
      %139 = sbr.rel (%p136) target = $region12
    $region11: #{auto_quantized_net_forward.5} parent=5 // pred_region
      %s140 = ssub.s32 %s11, 1
      // Predicated region
      $region13: #{auto_quantized_net_forward.5} parent=11 // pred_check
        %p141 = pneg %p58
      $region14: #{auto_quantized_net_forward.5} parent=11 // pred_check_branch
        %143 = sbr.rel (%p141) target = $region16
      $region15: #{auto_quantized_net_forward.5} parent=11 // pred_region
        _
      $region16: #{auto_quantized_net_forward.5} parent=11 // pred_fallthru
        _
    $region12: #{auto_quantized_net_forward.5} parent=5 // pred_fallthru
      _
    %p144 = scmp.lt.s32.totalorder %s11, 4
    // Predicated region
    $region17: #{auto_quantized_net_forward.5} parent=5 // pred_check
      %p145 = pneg %p144
    $region18: #{auto_quantized_net_forward.5} parent=5 // pred_check_branch
      %147 = sbr.rel (%p145) target = $region20
    $region19: #{auto_quantized_net_forward.5} parent=5 // pred_region
      // Predicated region
      $region21: #{auto_quantized_net_forward.5} parent=19 // pred_check
        %p148 = pneg %p31
      $region22: #{auto_quantized_net_forward.5} parent=19 // pred_check_branch
        %150 = sbr.rel (%p148) target = $region24
      $region23: #{auto_quantized_net_forward.5} parent=19 // pred_region
        %s151 = smul.u32 49, %s11
        %p152 = scmp.lt.s32.totalorder %s151, 195
        %s153 = scalar_select %p152, %s151, 195
        %s154 = smul.addr %s153, 4
        %s155 = scalar_lea.vmem %s0, %s154
        %s156 = smul.u32 49, %s11
      $region24: #{auto_quantized_net_forward.5} parent=19 // pred_fallthru
        _
    $region20: #{auto_quantized_net_forward.5} parent=5 // pred_fallthru
      _
    %p157 = scmp.le.s32.totalorder 1, %s11
    %p158 = scmp.lt.s32.totalorder %s11, 5
    %p159 = pnand %p157, %p158
    %p160 = pneg %p159
    // Predicated region
    $region25: #{auto_quantized_net_forward.5} parent=5 // pred_check
      _
    $region26: #{auto_quantized_net_forward.5} parent=5 // pred_check_branch
      %162 = sbr.rel (%p159) target = $region28
    $region27: #{auto_quantized_net_forward.5} parent=5 // pred_region
      %s163 = ssub.s32 %s11, 1
      %s164 = smul.u32 49, %s16
      %p165 = scmp.lt.s32.totalorder %s164, 195
      %s166 = scalar_select %p165, %s164, 195
      %s167 = smul.addr %s166, 4
      %s168 = scalar_lea.vmem %s0, %s167
      %p169 = pneg %p37
      %p170 = pneg %p34
      %p171 = pneg %p58
      %p172 = pneg %p55
      %p173 = pneg %p84
      %p174 = pneg %p81
      %s175 = smul.u32 49, %s16
      %p176 = scmp.lt.s32.totalorder %s175, 195
      %s177 = scalar_select %p176, %s175, 195
      %s178 = smul.addr %s177, 8
      %s179 = scalar_lea.vmem %s2, %s178
      %p180 = pneg %p105
      %p181 = pneg %p102
      %p182 = pneg %p126
      %p183 = pneg %p123
      %s184 = smul.u32 49, %s16
      %p185 = scmp.lt.s32.totalorder %s184, 195
      %s186 = scalar_select %p185, %s184, 195
      %s187 = smul.addr %s186, 4
      %s188 = scalar_lea.vmem %s0, %s187
      %s189 = smul.u32 49, %s16
      %s190 = smul.u32 49, %s16
      %p191 = scmp.lt.s32.totalorder %s190, 195
      %s192 = scalar_select %p191, %s190, 195
      %s193 = smul.addr %s192, 8
      %s194 = scalar_lea.vmem %s2, %s193
      %s195 = smul.u32 49, %s16
      %v197 = vld [vmem:[%s188] sm:$0xf]
      %v198 = vld [vmem:[%s188 + $0x4] sm:$0xf]
      %v199 = vld [vmem:[%s188 + $0x8] sm:$0xf]
      %v200 = vld [vmem:[%s188 + $0xc] sm:$0xf]
      %v201 = vld [vmem:[%s188 + $0x10] sm:$0xf]
      %v202 = vld [vmem:[%s188 + $0x14] sm:$0xf]
      %v203 = vld [vmem:[%s188 + $0x18] sm:$0xf]
      %v204 = vld [vmem:[%s188 + $0x1c] sm:$0xf]
      %v205 = vld [vmem:[%s188 + $0x20] sm:$0xf]
      %v206 = vld [vmem:[%s188 + $0x24] sm:$0xf]
      %v207 = vld [vmem:[%s188 + $0x28] sm:$0xf]
      %v208 = vld [vmem:[%s188 + $0x2c] sm:$0xf]
      %v209 = vld [vmem:[%s188 + $0x30] sm:$0xf]
      %v210 = vld [vmem:[%s188 + $0x34] sm:$0xf]
      %v211 = vld [vmem:[%s188 + $0x38] sm:$0xf]
      %v212 = vld [vmem:[%s188 + $0x3c] sm:$0xf]
      %v213 = vld [vmem:[%s188 + $0x40] sm:$0xf]
      %v214 = vld [vmem:[%s188 + $0x44] sm:$0xf]
      %v215 = vld [vmem:[%s188 + $0x48] sm:$0xf]
      %v216 = vld [vmem:[%s188 + $0x4c] sm:$0xf]
      %v217 = vld [vmem:[%s188 + $0x50] sm:$0xf]
      %v218 = vld [vmem:[%s188 + $0x54] sm:$0xf]
      %v219 = vld [vmem:[%s188 + $0x58] sm:$0xf]
      %v220 = vld [vmem:[%s188 + $0x5c] sm:$0xf]
      %v221 = vld [vmem:[%s188 + $0x60] sm:$0xf]
      %v222 = vld [vmem:[%s188 + $0x64] sm:$0xf]
      %v223 = vld [vmem:[%s188 + $0x68] sm:$0xf]
      %v224 = vld [vmem:[%s188 + $0x6c] sm:$0xf]
      %v225 = vld [vmem:[%s188 + $0x70] sm:$0xf]
      %v226 = vld [vmem:[%s188 + $0x74] sm:$0xf]
      %v227 = vld [vmem:[%s188 + $0x78] sm:$0xf]
      %v228 = vld [vmem:[%s188 + $0x7c] sm:$0xf]
      %v229 = vld [vmem:[%s188 + $0x80] sm:$0xf]
      %v230 = vld [vmem:[%s188 + $0x84] sm:$0xf]
      %v231 = vld [vmem:[%s188 + $0x88] sm:$0xf]
      %v232 = vld [vmem:[%s188 + $0x8c] sm:$0xf]
      %v233 = vld [vmem:[%s188 + $0x90] sm:$0xf]
      %v234 = vld [vmem:[%s188 + $0x94] sm:$0xf]
      %v235 = vld [vmem:[%s188 + $0x98] sm:$0xf]
      %v236 = vld [vmem:[%s188 + $0x9c] sm:$0xf]
      %v237 = vld [vmem:[%s188 + $0xa0] sm:$0xf]
      %v238 = vld [vmem:[%s188 + $0xa4] sm:$0xf]
      %v239 = vld [vmem:[%s188 + $0xa8] sm:$0xf]
      %v240 = vld [vmem:[%s188 + $0xac] sm:$0xf]
      %v241 = vld [vmem:[%s188 + $0xb0] sm:$0xf]
      %v242 = vld [vmem:[%s188 + $0xb4] sm:$0xf]
      %v243 = vld [vmem:[%s188 + $0xb8] sm:$0xf]
      %v244 = vld [vmem:[%s188 + $0xbc] sm:$0xf]
      %v245 = vld [vmem:[%s188 + $0xc0] sm:$0xf]
      %v246 = vld [vmem:[%s1] sm:$0xf]
      %v247 = vld [vmem:[%s1 + $0x4] sm:$0xf]
      %v248 = vld [vmem:[%s1 + $0x8] sm:$0xf]
      %v249 = vld [vmem:[%s1 + $0xc] sm:$0x1]
      %v299 = vunpack.c.l.b16 %v197
      %v300 = vunpack.c.l.b16 %v198
      %v301 = vunpack.c.l.b16 %v199
      %v302 = vunpack.c.l.b16 %v200
      %v303 = vunpack.c.l.b16 %v201
      %v304 = vunpack.c.l.b16 %v202
      %v305 = vunpack.c.l.b16 %v203
      %v306 = vunpack.c.l.b16 %v204
      %v307 = vunpack.c.l.b16 %v205
      %v308 = vunpack.c.l.b16 %v206
      %v309 = vunpack.c.l.b16 %v207
      %v310 = vunpack.c.l.b16 %v208
      %v311 = vunpack.c.l.b16 %v209
      %v312 = vunpack.c.l.b16 %v210
      %v313 = vunpack.c.l.b16 %v211
      %v314 = vunpack.c.l.b16 %v212
      %v315 = vunpack.c.l.b16 %v213
      %v316 = vunpack.c.l.b16 %v214
      %v317 = vunpack.c.l.b16 %v215
      %v318 = vunpack.c.l.b16 %v216
      %v319 = vunpack.c.l.b16 %v217
      %v320 = vunpack.c.l.b16 %v218
      %v321 = vunpack.c.l.b16 %v219
      %v322 = vunpack.c.l.b16 %v220
      %v323 = vunpack.c.l.b16 %v221
      %v324 = vunpack.c.l.b16 %v222
      %v325 = vunpack.c.l.b16 %v223
      %v326 = vunpack.c.l.b16 %v224
      %v327 = vunpack.c.l.b16 %v225
      %v328 = vunpack.c.l.b16 %v226
      %v329 = vunpack.c.l.b16 %v227
      %v330 = vunpack.c.l.b16 %v228
      %v331 = vunpack.c.l.b16 %v229
      %v332 = vunpack.c.l.b16 %v230
      %v333 = vunpack.c.l.b16 %v231
      %v334 = vunpack.c.l.b16 %v232
      %v335 = vunpack.c.l.b16 %v233
      %v336 = vunpack.c.l.b16 %v234
      %v337 = vunpack.c.l.b16 %v235
      %v338 = vunpack.c.l.b16 %v236
      %v339 = vunpack.c.l.b16 %v237
      %v340 = vunpack.c.l.b16 %v238
      %v341 = vunpack.c.l.b16 %v239
      %v342 = vunpack.c.l.b16 %v240
      %v343 = vunpack.c.l.b16 %v241
      %v344 = vunpack.c.l.b16 %v242
      %v345 = vunpack.c.l.b16 %v243
      %v346 = vunpack.c.l.b16 %v244
      %v347 = vunpack.c.l.b16 %v245
      %v348 = vpack.c.b16 %v300, %v299
      %v349 = vpack.c.b16 %v302, %v301
      %v350 = vpack.c.b16 %v304, %v303
      %v351 = vpack.c.b16 %v306, %v305
      %v352 = vpack.c.b16 %v308, %v307
      %v353 = vpack.c.b16 %v310, %v309
      %v354 = vpack.c.b16 %v312, %v311
      %v355 = vpack.c.b16 %v314, %v313
      %v356 = vpack.c.b16 %v316, %v315
      %v357 = vpack.c.b16 %v318, %v317
      %v358 = vpack.c.b16 %v320, %v319
      %v359 = vpack.c.b16 %v322, %v321
      %v360 = vpack.c.b16 %v324, %v323
      %v361 = vpack.c.b16 %v326, %v325
      %v362 = vpack.c.b16 %v328, %v327
      %v363 = vpack.c.b16 %v330, %v329
      %v364 = vpack.c.b16 %v332, %v331
      %v365 = vpack.c.b16 %v334, %v333
      %v366 = vpack.c.b16 %v336, %v335
      %v367 = vpack.c.b16 %v338, %v337
      %v368 = vpack.c.b16 %v340, %v339
      %v369 = vpack.c.b16 %v342, %v341
      %v370 = vpack.c.b16 %v344, %v343
      %v371 = vpack.c.b16 %v346, %v345
      %v372 = vpack.c.b16 %v347, %v347
      %v377 = vunpack.c.l.b16 %v246
      %v378 = vunpack.c.l.b16 %v247
      %v379 = vunpack.c.l.b16 %v248
      %v380 = vunpack.c.l.b16 %v249
      %v381 = vpack.c.b16 %v378, %v377
      %v382 = vpack.c.b16 %v380, %v379
      %vm384 = vcmask 203776
      %v386 = vsel %vm384, %v348, 0
      %v389 = vsel %vm384, %v349, 0
      %v392 = vsel %vm384, %v350, 0
      %v395 = vsel %vm384, %v351, 0
      %v398 = vsel %vm384, %v352, 0
      %v401 = vsel %vm384, %v353, 0
      %v404 = vsel %vm384, %v354, 0
      %v407 = vsel %vm384, %v355, 0
      %v410 = vsel %vm384, %v356, 0
      %v413 = vsel %vm384, %v357, 0
      %v416 = vsel %vm384, %v358, 0
      %v419 = vsel %vm384, %v359, 0
      %v422 = vsel %vm384, %v360, 0
      %v425 = vsel %vm384, %v361, 0
      %v428 = vsel %vm384, %v362, 0
      %v431 = vsel %vm384, %v363, 0
      %v434 = vsel %vm384, %v364, 0
      %v437 = vsel %vm384, %v365, 0
      %v440 = vsel %vm384, %v366, 0
      %v443 = vsel %vm384, %v367, 0
      %v446 = vsel %vm384, %v368, 0
      %v449 = vsel %vm384, %v369, 0
      %v452 = vsel %vm384, %v370, 0
      %v455 = vsel %vm384, %v371, 0
      %v458 = vsel %vm384, %v372, 0
      %vm460 = vcmask 1043456
      %vm461 = vcmask 1044480
      %v462 = vsel %vm460, 4294967295, 65535
      %v463 = vsel %vm461, %v462, 0
      %v465 = vand.u32 %v382, %v463
      %467 = vmatprep.subr.bf16.mxu0 0
      %468 = vmatpush1.bf16.msra.mxu0 %v381
      %469 = vmatprep.subr.bf16.mxu0 0
      %470 = vmatpush1.bf16.msra.mxu0 %v465
      %471 = vmatprep.subr.bf16.mxu0 0
      %472 = vmatpush1.bf16.msra.mxu0 0
      %473 = vmatprep.subr.bf16.mxu0 0
      %474 = vmatpush1.bf16.msra.mxu0 0
      %475 = vmatprep.subr.bf16.mxu0 0
      %476 = vmatpush1.bf16.msra.mxu0 0
      %477 = vmatprep.subr.bf16.mxu0 0
      %478 = vmatpush1.bf16.msra.mxu0 0
      %479 = vmatprep.subr.bf16.mxu0 0
      %480 = vmatpush1.bf16.msra.mxu0 0
      %481 = vmatprep.subr.bf16.mxu0 0
      %482 = vmatpush1.bf16.msra.mxu0 0
      %483 = vmatprep.subr.bf16.mxu0 0
      %484 = vmatpush1.bf16.msra.mxu0 0
      %485 = vmatprep.subr.bf16.mxu0 0
      %486 = vmatpush1.bf16.msra.mxu0 0
      %487 = vmatprep.subr.bf16.mxu0 0
      %488 = vmatpush1.bf16.msra.mxu0 0
      %489 = vmatprep.subr.bf16.mxu0 0
      %490 = vmatpush1.bf16.msra.mxu0 0
      %491 = vmatprep.subr.bf16.mxu0 0
      %492 = vmatpush1.bf16.msra.mxu0 0
      %493 = vmatprep.subr.bf16.mxu0 0
      %494 = vmatpush1.bf16.msra.mxu0 0
      %495 = vmatprep.subr.bf16.mxu0 0
      %496 = vmatpush1.bf16.msra.mxu0 0
      %497 = vmatprep.subr.bf16.mxu0 0
      %498 = vmatpush1.bf16.msra.mxu0 0
      %499 = vmatprep.mubr.bf16.mxu0 0
      %500 = vmatmul.mubr.bf16.gmra.mrb[0].mxu0 %v386
      %v501 = vpop.f32.mrb[0].mxu0
      %v502 = vadd.f32 0.0, %v501
      %v503 = vpop.f32.mrb[0].mxu0
      %v504 = vpop.f32.mrb[0].mxu0
      %v505 = vadd.f32 0.0, %v504
      %v506 = vpop.f32.mrb[0].mxu0
      %507 = vmatprep.mubr.bf16.mxu0 0
      %508 = vmatmul.mubr.bf16.gmra.mrb[0].mxu0 %v389
      %v509 = vpop.f32.mrb[0].mxu0
      %v510 = vadd.f32 0.0, %v509
      %v511 = vpop.f32.mrb[0].mxu0
      %v512 = vpop.f32.mrb[0].mxu0
      %v513 = vadd.f32 0.0, %v512
      %v514 = vpop.f32.mrb[0].mxu0
      %515 = vmatprep.mubr.bf16.mxu0 0
      %516 = vmatmul.mubr.bf16.gmra.mrb[0].mxu0 %v392
      %v517 = vpop.f32.mrb[0].mxu0
      %v518 = vadd.f32 0.0, %v517
      %v519 = vpop.f32.mrb[0].mxu0
      %v520 = vpop.f32.mrb[0].mxu0
      %v521 = vadd.f32 0.0, %v520
      %v522 = vpop.f32.mrb[0].mxu0
      %523 = vmatprep.mubr.bf16.mxu0 0
      %524 = vmatmul.mubr.bf16.gmra.mrb[0].mxu0 %v395
      %v525 = vpop.f32.mrb[0].mxu0
      %v526 = vadd.f32 0.0, %v525
      %v527 = vpop.f32.mrb[0].mxu0
      %v528 = vpop.f32.mrb[0].mxu0
      %v529 = vadd.f32 0.0, %v528
      %v530 = vpop.f32.mrb[0].mxu0
      %531 = vmatprep.mubr.bf16.mxu0 0
      %532 = vmatmul.mubr.bf16.gmra.mrb[0].mxu0 %v398
      %v533 = vpop.f32.mrb[0].mxu0
      %v534 = vadd.f32 0.0, %v533
      %v535 = vpop.f32.mrb[0].mxu0
      %v536 = vpop.f32.mrb[0].mxu0
      %v537 = vadd.f32 0.0, %v536
      %v538 = vpop.f32.mrb[0].mxu0
      %539 = vmatprep.mubr.bf16.mxu0 0
      %540 = vmatmul.mubr.bf16.gmra.mrb[0].mxu0 %v401
      %v541 = vpop.f32.mrb[0].mxu0
      %v542 = vadd.f32 0.0, %v541
      %v543 = vpop.f32.mrb[0].mxu0
      %v544 = vpop.f32.mrb[0].mxu0
      %v545 = vadd.f32 0.0, %v544
      %v546 = vpop.f32.mrb[0].mxu0
      %547 = vmatprep.mubr.bf16.mxu0 0
      %548 = vmatmul.mubr.bf16.gmra.mrb[0].mxu0 %v404
      %v549 = vpop.f32.mrb[0].mxu0
      %v550 = vadd.f32 0.0, %v549
      %v551 = vpop.f32.mrb[0].mxu0
      %v552 = vpop.f32.mrb[0].mxu0
      %v553 = vadd.f32 0.0, %v552
      %v554 = vpop.f32.mrb[0].mxu0
      %555 = vmatprep.mubr.bf16.mxu0 0
      %556 = vmatmul.mubr.bf16.gmra.mrb[0].mxu0 %v407
      %v557 = vpop.f32.mrb[0].mxu0
      %v558 = vadd.f32 0.0, %v557
      %v559 = vpop.f32.mrb[0].mxu0
      %v560 = vpop.f32.mrb[0].mxu0
      %v561 = vadd.f32 0.0, %v560
      %v562 = vpop.f32.mrb[0].mxu0
      %563 = vmatprep.mubr.bf16.mxu0 0
      %564 = vmatmul.mubr.bf16.gmra.mrb[0].mxu0 %v410
      %v565 = vpop.f32.mrb[0].mxu0
      %v566 = vadd.f32 0.0, %v565
      %v567 = vpop.f32.mrb[0].mxu0
      %v568 = vpop.f32.mrb[0].mxu0
      %v569 = vadd.f32 0.0, %v568
      %v570 = vpop.f32.mrb[0].mxu0
      %571 = vmatprep.mubr.bf16.mxu0 0
      %572 = vmatmul.mubr.bf16.gmra.mrb[0].mxu0 %v413
      %v573 = vpop.f32.mrb[0].mxu0
      %v574 = vadd.f32 0.0, %v573
      %v575 = vpop.f32.mrb[0].mxu0
      %v576 = vpop.f32.mrb[0].mxu0
      %v577 = vadd.f32 0.0, %v576
      %v578 = vpop.f32.mrb[0].mxu0
      %579 = vmatprep.mubr.bf16.mxu0 0
      %580 = vmatmul.mubr.bf16.gmra.mrb[0].mxu0 %v416
      %v581 = vpop.f32.mrb[0].mxu0
      %v582 = vadd.f32 0.0, %v581
      %v583 = vpop.f32.mrb[0].mxu0
      %v584 = vpop.f32.mrb[0].mxu0
      %v585 = vadd.f32 0.0, %v584
      %v586 = vpop.f32.mrb[0].mxu0
      %587 = vmatprep.mubr.bf16.mxu0 0
      %588 = vmatmul.mubr.bf16.gmra.mrb[0].mxu0 %v419
      %v589 = vpop.f32.mrb[0].mxu0
      %v590 = vadd.f32 0.0, %v589
      %v591 = vpop.f32.mrb[0].mxu0
      %v592 = vpop.f32.mrb[0].mxu0
      %v593 = vadd.f32 0.0, %v592
      %v594 = vpop.f32.mrb[0].mxu0
      %595 = vmatprep.mubr.bf16.mxu0 0
      %596 = vmatmul.mubr.bf16.gmra.mrb[0].mxu0 %v422
      %v597 = vpop.f32.mrb[0].mxu0
      %v598 = vadd.f32 0.0, %v597
      %v599 = vpop.f32.mrb[0].mxu0
      %v600 = vpop.f32.mrb[0].mxu0
      %v601 = vadd.f32 0.0, %v600
      %v602 = vpop.f32.mrb[0].mxu0
      %603 = vmatprep.mubr.bf16.mxu0 0
      %604 = vmatmul.mubr.bf16.gmra.mrb[0].mxu0 %v425
      %v605 = vpop.f32.mrb[0].mxu0
      %v606 = vadd.f32 0.0, %v605
      %v607 = vpop.f32.mrb[0].mxu0
      %v608 = vpop.f32.mrb[0].mxu0
      %v609 = vadd.f32 0.0, %v608
      %v610 = vpop.f32.mrb[0].mxu0
      %611 = vmatprep.mubr.bf16.mxu0 0
      %612 = vmatmul.mubr.bf16.gmra.mrb[0].mxu0 %v428
      %v613 = vpop.f32.mrb[0].mxu0
      %v614 = vadd.f32 0.0, %v613
      %v615 = vpop.f32.mrb[0].mxu0
      %v616 = vpop.f32.mrb[0].mxu0
      %v617 = vadd.f32 0.0, %v616
      %v618 = vpop.f32.mrb[0].mxu0
      %619 = vmatprep.mubr.bf16.mxu0 0
      %620 = vmatmul.mubr.bf16.gmra.mrb[0].mxu0 %v431
      %v621 = vpop.f32.mrb[0].mxu0
      %v622 = vadd.f32 0.0, %v621
      %v623 = vpop.f32.mrb[0].mxu0
      %v624 = vpop.f32.mrb[0].mxu0
      %v625 = vadd.f32 0.0, %v624
      %v626 = vpop.f32.mrb[0].mxu0
      %627 = vmatprep.mubr.bf16.mxu0 0
      %628 = vmatmul.mubr.bf16.gmra.mrb[0].mxu0 %v434
      %v629 = vpop.f32.mrb[0].mxu0
      %v630 = vadd.f32 0.0, %v629
      %v631 = vpop.f32.mrb[0].mxu0
      %v632 = vpop.f32.mrb[0].mxu0
      %v633 = vadd.f32 0.0, %v632
      %v634 = vpop.f32.mrb[0].mxu0
      %635 = vmatprep.mubr.bf16.mxu0 0
      %636 = vmatmul.mubr.bf16.gmra.mrb[0].mxu0 %v437
      %v637 = vpop.f32.mrb[0].mxu0
      %v638 = vadd.f32 0.0, %v637
      %v639 = vpop.f32.mrb[0].mxu0
      %v640 = vpop.f32.mrb[0].mxu0
      %v641 = vadd.f32 0.0, %v640
      %v642 = vpop.f32.mrb[0].mxu0
      %643 = vmatprep.mubr.bf16.mxu0 0
      %644 = vmatmul.mubr.bf16.gmra.mrb[0].mxu0 %v440
      %v645 = vpop.f32.mrb[0].mxu0
      %v646 = vadd.f32 0.0, %v645
      %v647 = vpop.f32.mrb[0].mxu0
      %v648 = vpop.f32.mrb[0].mxu0
      %v649 = vadd.f32 0.0, %v648
      %v650 = vpop.f32.mrb[0].mxu0
      %651 = vmatprep.mubr.bf16.mxu0 0
      %652 = vmatmul.mubr.bf16.gmra.mrb[0].mxu0 %v443
      %v653 = vpop.f32.mrb[0].mxu0
      %v654 = vadd.f32 0.0, %v653
      %v655 = vpop.f32.mrb[0].mxu0
      %v656 = vpop.f32.mrb[0].mxu0
      %v657 = vadd.f32 0.0, %v656
      %v658 = vpop.f32.mrb[0].mxu0
      %659 = vmatprep.mubr.bf16.mxu0 0
      %660 = vmatmul.mubr.bf16.gmra.mrb[0].mxu0 %v446
      %v661 = vpop.f32.mrb[0].mxu0
      %v662 = vadd.f32 0.0, %v661
      %v663 = vpop.f32.mrb[0].mxu0
      %v664 = vpop.f32.mrb[0].mxu0
      %v665 = vadd.f32 0.0, %v664
      %v666 = vpop.f32.mrb[0].mxu0
      %667 = vmatprep.mubr.bf16.mxu0 0
      %668 = vmatmul.mubr.bf16.gmra.mrb[0].mxu0 %v449
      %v669 = vpop.f32.mrb[0].mxu0
      %v670 = vadd.f32 0.0, %v669
      %v671 = vpop.f32.mrb[0].mxu0
      %v672 = vpop.f32.mrb[0].mxu0
      %v673 = vadd.f32 0.0, %v672
      %v674 = vpop.f32.mrb[0].mxu0
      %675 = vmatprep.mubr.bf16.mxu0 0
      %676 = vmatmul.mubr.bf16.gmra.mrb[0].mxu0 %v452
      %v677 = vpop.f32.mrb[0].mxu0
      %v678 = vadd.f32 0.0, %v677
      %v679 = vpop.f32.mrb[0].mxu0
      %v680 = vpop.f32.mrb[0].mxu0
      %v681 = vadd.f32 0.0, %v680
      %v682 = vpop.f32.mrb[0].mxu0
      %683 = vmatprep.mubr.bf16.mxu0 0
      %684 = vmatmul.mubr.bf16.gmra.mrb[0].mxu0 %v455
      %v685 = vpop.f32.mrb[0].mxu0
      %v686 = vadd.f32 0.0, %v685
      %v687 = vpop.f32.mrb[0].mxu0
      %v688 = vpop.f32.mrb[0].mxu0
      %v689 = vadd.f32 0.0, %v688
      %v690 = vpop.f32.mrb[0].mxu0
      %691 = vmatprep.mubr.bf16.mxu0 0
      %692 = vmatmul.mubr.bf16.gmra.mrb[0].mxu0 %v458
      %v693 = vpop.f32.mrb[0].mxu0
      %v694 = vadd.f32 0.0, %v693
      %v695 = vpop.f32.mrb[0].mxu0
      %v696 = vpop.f32.mrb[0].mxu0
      %v697 = vpop.f32.mrb[0].mxu0
      %698 = vdwg.mxu0
      %vm699 = vcmask 130048
      %700 = vst.msk [vmem:[%s194] sm:$0xff] %vm699, %v502
      %701 = vst.msk [vmem:[%s194 + $0x8] sm:$0xff] %vm699, %v505
      %702 = vst.msk [vmem:[%s194 + $0x10] sm:$0xff] %vm699, %v510
      %703 = vst.msk [vmem:[%s194 + $0x18] sm:$0xff] %vm699, %v513
      %704 = vst.msk [vmem:[%s194 + $0x20] sm:$0xff] %vm699, %v518
      %705 = vst.msk [vmem:[%s194 + $0x28] sm:$0xff] %vm699, %v521
      %706 = vst.msk [vmem:[%s194 + $0x30] sm:$0xff] %vm699, %v526
      %707 = vst.msk [vmem:[%s194 + $0x38] sm:$0xff] %vm699, %v529
      %708 = vst.msk [vmem:[%s194 + $0x40] sm:$0xff] %vm699, %v534
      %709 = vst.msk [vmem:[%s194 + $0x48] sm:$0xff] %vm699, %v537
      %710 = vst.msk [vmem:[%s194 + $0x50] sm:$0xff] %vm699, %v542
      %711 = vst.msk [vmem:[%s194 + $0x58] sm:$0xff] %vm699, %v545
      %712 = vst.msk [vmem:[%s194 + $0x60] sm:$0xff] %vm699, %v550
      %713 = vst.msk [vmem:[%s194 + $0x68] sm:$0xff] %vm699, %v553
      %714 = vst.msk [vmem:[%s194 + $0x70] sm:$0xff] %vm699, %v558
      %715 = vst.msk [vmem:[%s194 + $0x78] sm:$0xff] %vm699, %v561
      %716 = vst.msk [vmem:[%s194 + $0x80] sm:$0xff] %vm699, %v566
      %717 = vst.msk [vmem:[%s194 + $0x88] sm:$0xff] %vm699, %v569
      %718 = vst.msk [vmem:[%s194 + $0x90] sm:$0xff] %vm699, %v574
      %719 = vst.msk [vmem:[%s194 + $0x98] sm:$0xff] %vm699, %v577
      %720 = vst.msk [vmem:[%s194 + $0xa0] sm:$0xff] %vm699, %v582
      %721 = vst.msk [vmem:[%s194 + $0xa8] sm:$0xff] %vm699, %v585
      %722 = vst.msk [vmem:[%s194 + $0xb0] sm:$0xff] %vm699, %v590
      %723 = vst.msk [vmem:[%s194 + $0xb8] sm:$0xff] %vm699, %v593
      %724 = vst.msk [vmem:[%s194 + $0xc0] sm:$0xff] %vm699, %v598
      %725 = vst.msk [vmem:[%s194 + $0xc8] sm:$0xff] %vm699, %v601
      %726 = vst.msk [vmem:[%s194 + $0xd0] sm:$0xff] %vm699, %v606
      %727 = vst.msk [vmem:[%s194 + $0xd8] sm:$0xff] %vm699, %v609
      %728 = vst.msk [vmem:[%s194 + $0xe0] sm:$0xff] %vm699, %v614
      %729 = vst.msk [vmem:[%s194 + $0xe8] sm:$0xff] %vm699, %v617
      %730 = vst.msk [vmem:[%s194 + $0xf0] sm:$0xff] %vm699, %v622
      %731 = vst.msk [vmem:[%s194 + $0xf8] sm:$0xff] %vm699, %v625
      %732 = vst.msk [vmem:[%s194 + $0x100] sm:$0xff] %vm699, %v630
      %733 = vst.msk [vmem:[%s194 + $0x108] sm:$0xff] %vm699, %v633
      %734 = vst.msk [vmem:[%s194 + $0x110] sm:$0xff] %vm699, %v638
      %735 = vst.msk [vmem:[%s194 + $0x118] sm:$0xff] %vm699, %v641
      %736 = vst.msk [vmem:[%s194 + $0x120] sm:$0xff] %vm699, %v646
      %737 = vst.msk [vmem:[%s194 + $0x128] sm:$0xff] %vm699, %v649
      %738 = vst.msk [vmem:[%s194 + $0x130] sm:$0xff] %vm699, %v654
      %739 = vst.msk [vmem:[%s194 + $0x138] sm:$0xff] %vm699, %v657
      %740 = vst.msk [vmem:[%s194 + $0x140] sm:$0xff] %vm699, %v662
      %741 = vst.msk [vmem:[%s194 + $0x148] sm:$0xff] %vm699, %v665
      %742 = vst.msk [vmem:[%s194 + $0x150] sm:$0xff] %vm699, %v670
      %743 = vst.msk [vmem:[%s194 + $0x158] sm:$0xff] %vm699, %v673
      %744 = vst.msk [vmem:[%s194 + $0x160] sm:$0xff] %vm699, %v678
      %745 = vst.msk [vmem:[%s194 + $0x168] sm:$0xff] %vm699, %v681
      %746 = vst.msk [vmem:[%s194 + $0x170] sm:$0xff] %vm699, %v686
      %747 = vst.msk [vmem:[%s194 + $0x178] sm:$0xff] %vm699, %v689
      %748 = vst.msk [vmem:[%s194 + $0x180] sm:$0xff] %vm699, %v694
      %p749 = scmp.eq.s32.totalorder %s16, 0
      // Predicated region
      $region29: #{auto_quantized_net_forward.5} parent=27 // pred_check
        %p750 = pneg %p749
      $region30: #{auto_quantized_net_forward.5} parent=27 // pred_check_branch
        %752 = sbr.rel (%p750) target = $region32
      $region31: #{auto_quantized_net_forward.5} parent=27 // pred_region
        %vm753 = vcmask 122880
        %754 = vst.msk [vmem:[%s3] sm:$0x1] %vm753, 0.0
        %755 = vst.msk [vmem:[%s4] sm:$0x1] %vm753, 0.0
      $region32: #{auto_quantized_net_forward.5} parent=27 // pred_fallthru
        _
      %v756 = vld [vmem:[%s3] sm:$0x1]
      %v757 = vsel %vm699, %v502, 0.0
      %v758 = vsel %vm699, %v505, 0.0
      %v759 = vadd.f32 %v757, %v758
      %v760 = vsel %vm699, %v510, 0.0
      %v761 = vadd.f32 %v759, %v760
      %v762 = vsel %vm699, %v513, 0.0
      %v763 = vadd.f32 %v761, %v762
      %v764 = vsel %vm699, %v518, 0.0
      %v765 = vadd.f32 %v763, %v764
      %v766 = vsel %vm699, %v521, 0.0
      %v767 = vadd.f32 %v765, %v766
      %v768 = vsel %vm699, %v526, 0.0
      %v769 = vadd.f32 %v767, %v768
      %v770 = vsel %vm699, %v529, 0.0
      %v771 = vadd.f32 %v769, %v770
      %v772 = vsel %vm699, %v534, 0.0
      %v773 = vadd.f32 %v771, %v772
      %v774 = vsel %vm699, %v537, 0.0
      %v775 = vadd.f32 %v773, %v774
      %v776 = vsel %vm699, %v542, 0.0
      %v777 = vadd.f32 %v775, %v776
      %v778 = vsel %vm699, %v545, 0.0
      %v779 = vadd.f32 %v777, %v778
      %v780 = vsel %vm699, %v550, 0.0
      %v781 = vadd.f32 %v779, %v780
      %v782 = vsel %vm699, %v553, 0.0
      %v783 = vadd.f32 %v781, %v782
      %v784 = vsel %vm699, %v558, 0.0
      %v785 = vadd.f32 %v783, %v784
      %v786 = vsel %vm699, %v561, 0.0
      %v787 = vadd.f32 %v785, %v786
      %v788 = vsel %vm699, %v566, 0.0
      %v789 = vadd.f32 %v787, %v788
      %v790 = vsel %vm699, %v569, 0.0
      %v791 = vadd.f32 %v789, %v790
      %v792 = vsel %vm699, %v574, 0.0
      %v793 = vadd.f32 %v791, %v792
      %v794 = vsel %vm699, %v577, 0.0
      %v795 = vadd.f32 %v793, %v794
      %v796 = vsel %vm699, %v582, 0.0
      %v797 = vadd.f32 %v795, %v796
      %v798 = vsel %vm699, %v585, 0.0
      %v799 = vadd.f32 %v797, %v798
      %v800 = vsel %vm699, %v590, 0.0
      %v801 = vadd.f32 %v799, %v800
      %v802 = vsel %vm699, %v593, 0.0
      %v803 = vadd.f32 %v801, %v802
      %v804 = vsel %vm699, %v598, 0.0
      %v805 = vadd.f32 %v803, %v804
      %v806 = vsel %vm699, %v601, 0.0
      %v807 = vadd.f32 %v805, %v806
      %v808 = vsel %vm699, %v606, 0.0
      %v809 = vadd.f32 %v807, %v808
      %v810 = vsel %vm699, %v609, 0.0
      %v811 = vadd.f32 %v809, %v810
      %v812 = vsel %vm699, %v614, 0.0
      %v813 = vadd.f32 %v811, %v812
      %v814 = vsel %vm699, %v617, 0.0
      %v815 = vadd.f32 %v813, %v814
      %v816 = vsel %vm699, %v622, 0.0
      %v817 = vadd.f32 %v815, %v816
      %v818 = vsel %vm699, %v625, 0.0
      %v819 = vadd.f32 %v817, %v818
      %v820 = vsel %vm699, %v630, 0.0
      %v821 = vadd.f32 %v819, %v820
      %v822 = vsel %vm699, %v633, 0.0
      %v823 = vadd.f32 %v821, %v822
      %v824 = vsel %vm699, %v638, 0.0
      %v825 = vadd.f32 %v823, %v824
      %v826 = vsel %vm699, %v641, 0.0
      %v827 = vadd.f32 %v825, %v826
      %v828 = vsel %vm699, %v646, 0.0
      %v829 = vadd.f32 %v827, %v828
      %v830 = vsel %vm699, %v649, 0.0
      %v831 = vadd.f32 %v829, %v830
      %v832 = vsel %vm699, %v654, 0.0
      %v833 = vadd.f32 %v831, %v832
      %v834 = vsel %vm699, %v657, 0.0
      %v835 = vadd.f32 %v833, %v834
      %v836 = vsel %vm699, %v662, 0.0
      %v837 = vadd.f32 %v835, %v836
      %v838 = vsel %vm699, %v665, 0.0
      %v839 = vadd.f32 %v837, %v838
      %v840 = vsel %vm699, %v670, 0.0
      %v841 = vadd.f32 %v839, %v840
      %v842 = vsel %vm699, %v673, 0.0
      %v843 = vadd.f32 %v841, %v842
      %v844 = vsel %vm699, %v678, 0.0
      %v845 = vadd.f32 %v843, %v844
      %v846 = vsel %vm699, %v681, 0.0
      %v847 = vadd.f32 %v845, %v846
      %v848 = vsel %vm699, %v686, 0.0
      %v849 = vadd.f32 %v847, %v848
      %v850 = vsel %vm699, %v689, 0.0
      %v851 = vadd.f32 %v849, %v850
      %v852 = vsel %vm699, %v694, 0.0
      %v853 = vadd.f32 %v851, %v852
      %v854 = vrot.slane %v853, 4
      %v855 = vadd.f32 %v853, %v854
      %v856 = vrot.slane %v855, 2
      %v857 = vadd.f32 %v855, %v856
      %v858 = vrot.slane %v857, 1
      %v859 = vadd.f32 %v857, %v858
      %v860 = vadd.f32 %v756, %v859
      %vm861 = vcmask 122880
      %862 = vst.msk [vmem:[%s3] sm:$0x1] %vm861, %v860
      %v863 = vld [vmem:[%s4] sm:$0x1]
      %v864 = vmul.f32 %v502, %v502
      %v865 = vmul.f32 %v505, %v505
      %v866 = vmul.f32 %v510, %v510
      %v867 = vmul.f32 %v513, %v513
      %v868 = vmul.f32 %v518, %v518
      %v869 = vmul.f32 %v521, %v521
      %v870 = vmul.f32 %v526, %v526
      %v871 = vmul.f32 %v529, %v529
      %v872 = vmul.f32 %v534, %v534
      %v873 = vmul.f32 %v537, %v537
      %v874 = vmul.f32 %v542, %v542
      %v875 = vmul.f32 %v545, %v545
      %v876 = vmul.f32 %v550, %v550
      %v877 = vmul.f32 %v553, %v553
      %v878 = vmul.f32 %v558, %v558
      %v879 = vmul.f32 %v561, %v561
      %v880 = vmul.f32 %v566, %v566
      %v881 = vmul.f32 %v569, %v569
      %v882 = vmul.f32 %v574, %v574
      %v883 = vmul.f32 %v577, %v577
      %v884 = vmul.f32 %v582, %v582
      %v885 = vmul.f32 %v585, %v585
      %v886 = vmul.f32 %v590, %v590
      %v887 = vmul.f32 %v593, %v593
      %v888 = vmul.f32 %v598, %v598
      %v889 = vmul.f32 %v601, %v601
      %v890 = vmul.f32 %v606, %v606
      %v891 = vmul.f32 %v609, %v609
      %v892 = vmul.f32 %v614, %v614
      %v893 = vmul.f32 %v617, %v617
      %v894 = vmul.f32 %v622, %v622
      %v895 = vmul.f32 %v625, %v625
      %v896 = vmul.f32 %v630, %v630
      %v897 = vmul.f32 %v633, %v633
      %v898 = vmul.f32 %v638, %v638
      %v899 = vmul.f32 %v641, %v641
      %v900 = vmul.f32 %v646, %v646
      %v901 = vmul.f32 %v649, %v649
      %v902 = vmul.f32 %v654, %v654
      %v903 = vmul.f32 %v657, %v657
      %v904 = vmul.f32 %v662, %v662
      %v905 = vmul.f32 %v665, %v665
      %v906 = vmul.f32 %v670, %v670
      %v907 = vmul.f32 %v673, %v673
      %v908 = vmul.f32 %v678, %v678
      %v909 = vmul.f32 %v681, %v681
      %v910 = vmul.f32 %v686, %v686
      %v911 = vmul.f32 %v689, %v689
      %v912 = vmul.f32 %v694, %v694
      %v913 = vsel %vm699, %v864, 0.0
      %v914 = vsel %vm699, %v865, 0.0
      %v915 = vadd.f32 %v913, %v914
      %v916 = vsel %vm699, %v866, 0.0
      %v917 = vadd.f32 %v915, %v916
      %v918 = vsel %vm699, %v867, 0.0
      %v919 = vadd.f32 %v917, %v918
      %v920 = vsel %vm699, %v868, 0.0
      %v921 = vadd.f32 %v919, %v920
      %v922 = vsel %vm699, %v869, 0.0
      %v923 = vadd.f32 %v921, %v922
      %v924 = vsel %vm699, %v870, 0.0
      %v925 = vadd.f32 %v923, %v924
      %v926 = vsel %vm699, %v871, 0.0
      %v927 = vadd.f32 %v925, %v926
      %v928 = vsel %vm699, %v872, 0.0
      %v929 = vadd.f32 %v927, %v928
      %v930 = vsel %vm699, %v873, 0.0
      %v931 = vadd.f32 %v929, %v930
      %v932 = vsel %vm699, %v874, 0.0
      %v933 = vadd.f32 %v931, %v932
      %v934 = vsel %vm699, %v875, 0.0
      %v935 = vadd.f32 %v933, %v934
      %v936 = vsel %vm699, %v876, 0.0
      %v937 = vadd.f32 %v935, %v936
      %v938 = vsel %vm699, %v877, 0.0
      %v939 = vadd.f32 %v937, %v938
      %v940 = vsel %vm699, %v878, 0.0
      %v941 = vadd.f32 %v939, %v940
      %v942 = vsel %vm699, %v879, 0.0
      %v943 = vadd.f32 %v941, %v942
      %v944 = vsel %vm699, %v880, 0.0
      %v945 = vadd.f32 %v943, %v944
      %v946 = vsel %vm699, %v881, 0.0
      %v947 = vadd.f32 %v945, %v946
      %v948 = vsel %vm699, %v882, 0.0
      %v949 = vadd.f32 %v947, %v948
      %v950 = vsel %vm699, %v883, 0.0
      %v951 = vadd.f32 %v949, %v950
      %v952 = vsel %vm699, %v884, 0.0
      %v953 = vadd.f32 %v951, %v952
      %v954 = vsel %vm699, %v885, 0.0
      %v955 = vadd.f32 %v953, %v954
      %v956 = vsel %vm699, %v886, 0.0
      %v957 = vadd.f32 %v955, %v956
      %v958 = vsel %vm699, %v887, 0.0
      %v959 = vadd.f32 %v957, %v958
      %v960 = vsel %vm699, %v888, 0.0
      %v961 = vadd.f32 %v959, %v960
      %v962 = vsel %vm699, %v889, 0.0
      %v963 = vadd.f32 %v961, %v962
      %v964 = vsel %vm699, %v890, 0.0
      %v965 = vadd.f32 %v963, %v964
      %v966 = vsel %vm699, %v891, 0.0
      %v967 = vadd.f32 %v965, %v966
      %v968 = vsel %vm699, %v892, 0.0
      %v969 = vadd.f32 %v967, %v968
      %v970 = vsel %vm699, %v893, 0.0
      %v971 = vadd.f32 %v969, %v970
      %v972 = vsel %vm699, %v894, 0.0
      %v973 = vadd.f32 %v971, %v972
      %v974 = vsel %vm699, %v895, 0.0
      %v975 = vadd.f32 %v973, %v974
      %v976 = vsel %vm699, %v896, 0.0
      %v977 = vadd.f32 %v975, %v976
      %v978 = vsel %vm699, %v897, 0.0
      %v979 = vadd.f32 %v977, %v978
      %v980 = vsel %vm699, %v898, 0.0
      %v981 = vadd.f32 %v979, %v980
      %v982 = vsel %vm699, %v899, 0.0
      %v983 = vadd.f32 %v981, %v982
      %v984 = vsel %vm699, %v900, 0.0
      %v985 = vadd.f32 %v983, %v984
      %v986 = vsel %vm699, %v901, 0.0
      %v987 = vadd.f32 %v985, %v986
      %v988 = vsel %vm699, %v902, 0.0
      %v989 = vadd.f32 %v987, %v988
      %v990 = vsel %vm699, %v903, 0.0
      %v991 = vadd.f32 %v989, %v990
      %v992 = vsel %vm699, %v904, 0.0
      %v993 = vadd.f32 %v991, %v992
      %v994 = vsel %vm699, %v905, 0.0
      %v995 = vadd.f32 %v993, %v994
      %v996 = vsel %vm699, %v906, 0.0
      %v997 = vadd.f32 %v995, %v996
      %v998 = vsel %vm699, %v907, 0.0
      %v999 = vadd.f32 %v997, %v998
      %v1000 = vsel %vm699, %v908, 0.0
      %v1001 = vadd.f32 %v999, %v1000
      %v1002 = vsel %vm699, %v909, 0.0
      %v1003 = vadd.f32 %v1001, %v1002
      %v1004 = vsel %vm699, %v910, 0.0
      %v1005 = vadd.f32 %v1003, %v1004
      %v1006 = vsel %vm699, %v911, 0.0
      %v1007 = vadd.f32 %v1005, %v1006
      %v1008 = vsel %vm699, %v912, 0.0
      %v1009 = vadd.f32 %v1007, %v1008
      %v1010 = vrot.slane %v1009, 4
      %v1011 = vadd.f32 %v1009, %v1010
      %v1012 = vrot.slane %v1011, 2
      %v1013 = vadd.f32 %v1011, %v1012
      %v1014 = vrot.slane %v1013, 1
      %v1015 = vadd.f32 %v1013, %v1014
      %v1016 = vadd.f32 %v863, %v1015
      %1017 = vst.msk [vmem:[%s4] sm:$0x1] %vm861, %v1016
      %s1018 = smul.u32 49, %s16
      %p1019 = scmp.lt.s32.totalorder %s1018, 195
      %s1020 = scalar_select %p1019, %s1018, 195
      %s1021 = smul.addr %s1020, 8
      %s1022 = scalar_lea.vmem %s2, %s1021
      // Predicated region
      $region33: #{auto_quantized_net_forward.5} parent=27 // pred_check
        %p1023 = pneg %p81
      $region34: #{auto_quantized_net_forward.5} parent=27 // pred_check_branch
        %1025 = sbr.rel (%p1023) target = $region36
      $region35: #{auto_quantized_net_forward.5} parent=27 // pred_region
        %s1026 = smul.u32 49, %s16
      $region36: #{auto_quantized_net_forward.5} parent=27 // pred_fallthru
        _
      // Predicated region
      $region37: #{auto_quantized_net_forward.5} parent=27 // pred_check
        %p1027 = pneg %p102
      $region38: #{auto_quantized_net_forward.5} parent=27 // pred_check_branch
        %1029 = sbr.rel (%p1027) target = $region40
      $region39: #{auto_quantized_net_forward.5} parent=27 // pred_region
        _
      $region40: #{auto_quantized_net_forward.5} parent=27 // pred_fallthru
        _
      // Predicated region
      $region41: #{auto_quantized_net_forward.5} parent=27 // pred_check
        %p1030 = pneg %p123
      $region42: #{auto_quantized_net_forward.5} parent=27 // pred_check_branch
        %1032 = sbr.rel (%p1030) target = $region44
      $region43: #{auto_quantized_net_forward.5} parent=27 // pred_region
        _
      $region44: #{auto_quantized_net_forward.5} parent=27 // pred_fallthru
        _
      // Predicated region
      $region45: #{auto_quantized_net_forward.5} parent=27 // pred_check
        %p1033 = pneg %p102
      $region46: #{auto_quantized_net_forward.5} parent=27 // pred_check_branch
        %1035 = sbr.rel (%p1033) target = $region48
      $region47: #{auto_quantized_net_forward.5} parent=27 // pred_region
        _
      $region48: #{auto_quantized_net_forward.5} parent=27 // pred_fallthru
        _
      // Predicated region
      $region49: #{auto_quantized_net_forward.5} parent=27 // pred_check
        %p1036 = pneg %p123
      $region50: #{auto_quantized_net_forward.5} parent=27 // pred_check_branch
        %1038 = sbr.rel (%p1036) target = $region52
      $region51: #{auto_quantized_net_forward.5} parent=27 // pred_region
        _
      $region52: #{auto_quantized_net_forward.5} parent=27 // pred_fallthru
        _
    $region28: #{auto_quantized_net_forward.5} parent=5 // pred_fallthru
      _
    %p1039 = scmp.le.s32.totalorder 2, %s11
    // Predicated region
    $region53: #{auto_quantized_net_forward.5} parent=5 // pred_check
      %p1040 = pneg %p1039
    $region54: #{auto_quantized_net_forward.5} parent=5 // pred_check_branch
      %1042 = sbr.rel (%p1040) target = $region56
    $region55: #{auto_quantized_net_forward.5} parent=5 // pred_region
      %s1043 = ssub.s32 %s11, 2
      // Predicated region
      $region57: #{auto_quantized_net_forward.5} parent=55 // pred_check
        %p1044 = pneg %p87
      $region58: #{auto_quantized_net_forward.5} parent=55 // pred_check_branch
        %1046 = sbr.rel (%p1044) target = $region60
      $region59: #{auto_quantized_net_forward.5} parent=55 // pred_region
        %s1047 = smul.u32 49, %s17
        %p1048 = scmp.lt.s32.totalorder %s1047, 195
        %s1049 = scalar_select %p1048, %s1047, 195
        %s1050 = smul.addr %s1049, 8
        %s1051 = scalar_lea.vmem %s2, %s1050
      $region60: #{auto_quantized_net_forward.5} parent=55 // pred_fallthru
        _
    $region56: #{auto_quantized_net_forward.5} parent=5 // pred_fallthru
      _
  $region6: #{auto_quantized_net_forward.5} parent=0 // loop_footer
    %s15 = sadd.s32 1, %s11
  $region7: #{auto_quantized_net_forward.5} parent=0 // loop_footer_branch
    %10 = sbr.rel target = $region3
  $region8: #{auto_quantized_net_forward.5} parent=0 // loop_exit
    _

// kernel: auto_quantized_net_forward.6
$region0: #{auto_quantized_net_forward.6}
  #allocation0 [shape = 'u32[]', space=smem, size = 0x4, offset = 0x4, fixed_abs, tag = 'smem constant byte address 0x4 - core index']
  #allocation1 [shape = 'u32[144,128]{1,0:T(1,128)}', space=vmem, size = 0x12000, scoped, tag = 'internal scratch']
  #allocation2 [shape = 'f32[14,28,16]{2,1,0:T(8,128)}', space=vmem, size = 0x38000, scoped, tag = 'scratch operand']
  %s0 = inlined_call_operand.vmem [shape: f32[2,28,28,16], index: 0, kind: input, shape index: {}]
  %s1 = inlined_call_operand.vmem [shape: f32[1,16], index: 1, kind: input, shape index: {}]
  %s2 = inlined_call_operand.vmem [shape: f32[1,16], index: 2, kind: input, shape index: {}]
  %s3 = inlined_call_operand.vmem [shape: f32[2,14,14,16], index: 3, kind: output, shape index: {}]
  %s4 = sld [smem:[#allocation0]]
  $region45: #{auto_quantized_net_forward.6} parent=0
    _
  %s6 = ssub.s32 1, %s4
  %s7 = scalar_select 0, %s6, %s4
  loop: start=0, step=1, limit=4
  $region2: #{auto_quantized_net_forward.6} parent=0 // loop_pre_header
    _
  $region3: #{auto_quantized_net_forward.6} parent=0 // loop_header
    %s9 = sphi 0, %s13
    %p10 = scmp.ge.s32.totalorder %s9, 4
    %s19 = sphi 0, %s21
    %s22 = sphi 0, %s19
    %s23 = sphi 0, %s22
    %s39 = sphi 0, %s23
    %s43 = sphi 0, %s43
    %s45 = sphi 0, %s43
    %s46 = sphi 0, %s45
    %s60 = sphi 0, %s46
    %s64 = sphi 0, %s64
    %s66 = sphi 0, %s64
    %s67 = sphi 0, %s66
    %s81 = sphi 0, %s67
    %s87 = sphi 0, %s89
    %s90 = sphi 0, %s87
    %s91 = sphi 0, %s90
    %s107 = sphi 0, %s91
  $region4: #{auto_quantized_net_forward.6} parent=0 // loop_header_branch
    %12 = sbr.rel (%p10) target = $region8
  $region5: #{auto_quantized_net_forward.6} parent=0 // loop_body
    %s14 = ssub.s32 %s9, 1
    %s15 = ssub.s32 %s9, 2
    %s16 = sadd.s32 %s9, 1
    %s17 = ssub.s32 %s9, %s16
    %p18 = scmp.eq.s32.totalorder %s17, 0
    %s20 = sadd.s32 %s19, 1
    %s21 = scalar_select %p18, %s19, %s20
    %p24 = pneg %p18
    %p25 = scmp.eq.s32.totalorder %s9, 1
    %p26 = por %p24, %p25
    %p27 = scmp.ne.s32.totalorder %s19, %s22
    %p28 = scmp.eq.s32.totalorder %s9, 0
    %p29 = por %p27, %p28
    %p30 = scmp.ne.s32.totalorder %s19, %s22
    %p31 = scmp.eq.s32.totalorder %s14, 1
    %p32 = por %p30, %p31
    %p33 = scmp.ne.s32.totalorder %s22, %s23
    %p34 = scmp.eq.s32.totalorder %s14, 0
    %p35 = por %p33, %p34
    %p36 = scmp.ne.s32.totalorder %s22, %s23
    %p37 = scmp.eq.s32.totalorder %s15, 1
    %p38 = por %p36, %p37
    %p40 = scmp.ne.s32.totalorder %s23, %s39
    %p41 = scmp.eq.s32.totalorder %s15, 0
    %p42 = por %p40, %p41
    %s44 = sadd.s32 %s43, 1
    %p47 = scmp.eq.s32.totalorder %s9, 1
    %p48 = scmp.ne.s32.totalorder %s43, %s45
    %p49 = scmp.eq.s32.totalorder %s9, 0
    %p50 = por %p48, %p49
    %p51 = scmp.ne.s32.totalorder %s43, %s45
    %p52 = scmp.eq.s32.totalorder %s14, 1
    %p53 = por %p51, %p52
    %p54 = scmp.ne.s32.totalorder %s45, %s46
    %p55 = scmp.eq.s32.totalorder %s14, 0
    %p56 = por %p54, %p55
    %p57 = scmp.ne.s32.totalorder %s45, %s46
    %p58 = scmp.eq.s32.totalorder %s15, 1
    %p59 = por %p57, %p58
    %p61 = scmp.ne.s32.totalorder %s46, %s60
    %p62 = scmp.eq.s32.totalorder %s15, 0
    %p63 = por %p61, %p62
    %s65 = sadd.s32 %s64, 1
    %p68 = scmp.eq.s32.totalorder %s9, 1
    %p69 = scmp.ne.s32.totalorder %s64, %s66
    %p70 = scmp.eq.s32.totalorder %s9, 0
    %p71 = por %p69, %p70
    %p72 = scmp.ne.s32.totalorder %s64, %s66
    %p73 = scmp.eq.s32.totalorder %s14, 1
    %p74 = por %p72, %p73
    %p75 = scmp.ne.s32.totalorder %s66, %s67
    %p76 = scmp.eq.s32.totalorder %s14, 0
    %p77 = por %p75, %p76
    %p78 = scmp.ne.s32.totalorder %s66, %s67
    %p79 = scmp.eq.s32.totalorder %s15, 1
    %p80 = por %p78, %p79
    %p82 = scmp.ne.s32.totalorder %s67, %s81
    %p83 = scmp.eq.s32.totalorder %s15, 0
    %p84 = por %p82, %p83
    %s85 = ssub.s32 %s9, %s16
    %p86 = scmp.eq.s32.totalorder %s85, 0
    %s88 = sadd.s32 %s87, 1
    %s89 = scalar_select %p86, %s87, %s88
    %p92 = pneg %p86
    %p93 = scmp.eq.s32.totalorder %s9, 1
    %p94 = por %p92, %p93
    %p95 = scmp.ne.s32.totalorder %s87, %s90
    %p96 = scmp.eq.s32.totalorder %s9, 0
    %p97 = por %p95, %p96
    %p98 = scmp.ne.s32.totalorder %s87, %s90
    %p99 = scmp.eq.s32.totalorder %s14, 1
    %p100 = por %p98, %p99
    %p101 = scmp.ne.s32.totalorder %s90, %s91
    %p102 = scmp.eq.s32.totalorder %s14, 0
    %p103 = por %p101, %p102
    %p104 = scmp.ne.s32.totalorder %s90, %s91
    %p105 = scmp.eq.s32.totalorder %s15, 1
    %p106 = por %p104, %p105
    %p108 = scmp.ne.s32.totalorder %s91, %s107
    %p109 = scmp.eq.s32.totalorder %s15, 0
    %p110 = por %p108, %p109
    %p111 = scmp.le.s32.totalorder 1, %s9
    %p112 = scmp.lt.s32.totalorder %s9, 3
    %p113 = pnand %p111, %p112
    %p114 = pneg %p113
    // Predicated region
    $region9: #{auto_quantized_net_forward.6} parent=5 // pred_check
      _
    $region10: #{auto_quantized_net_forward.6} parent=5 // pred_check_branch
      %116 = sbr.rel (%p113) target = $region12
    $region11: #{auto_quantized_net_forward.6} parent=5 // pred_region
      %s117 = ssub.s32 %s9, 1
      // Predicated region
      $region13: #{auto_quantized_net_forward.6} parent=11 // pred_check
        %p118 = pneg %p56
      $region14: #{auto_quantized_net_forward.6} parent=11 // pred_check_branch
        %120 = sbr.rel (%p118) target = $region16
      $region15: #{auto_quantized_net_forward.6} parent=11 // pred_region
        _
      $region16: #{auto_quantized_net_forward.6} parent=11 // pred_fallthru
        _
      // Predicated region
      $region17: #{auto_quantized_net_forward.6} parent=11 // pred_check
        %p121 = pneg %p77
      $region18: #{auto_quantized_net_forward.6} parent=11 // pred_check_branch
        %123 = sbr.rel (%p121) target = $region20
      $region19: #{auto_quantized_net_forward.6} parent=11 // pred_region
        _
      $region20: #{auto_quantized_net_forward.6} parent=11 // pred_fallthru
        _
    $region12: #{auto_quantized_net_forward.6} parent=5 // pred_fallthru
      _
    %p124 = scmp.lt.s32.totalorder %s9, 2
    // Predicated region
    $region21: #{auto_quantized_net_forward.6} parent=5 // pred_check
      %p125 = pneg %p124
    $region22: #{auto_quantized_net_forward.6} parent=5 // pred_check_branch
      %127 = sbr.rel (%p125) target = $region24
    $region23: #{auto_quantized_net_forward.6} parent=5 // pred_region
      // Predicated region
      $region25: #{auto_quantized_net_forward.6} parent=23 // pred_check
        %p128 = pneg %p29
      $region26: #{auto_quantized_net_forward.6} parent=23 // pred_check_branch
        %130 = sbr.rel (%p128) target = $region28
      $region27: #{auto_quantized_net_forward.6} parent=23 // pred_region
        %p131 = scmp.lt.s32.totalorder %s9, 1
        %s132 = scalar_select %p131, %s9, 1
        %s133 = smul.addr %s132, 112
        %s134 = smul.addr %s133, 8
        %s135 = scalar_lea.vmem %s0, %s134
      $region28: #{auto_quantized_net_forward.6} parent=23 // pred_fallthru
        _
    $region24: #{auto_quantized_net_forward.6} parent=5 // pred_fallthru
      _
    %p136 = scmp.le.s32.totalorder 1, %s9
    %p137 = scmp.lt.s32.totalorder %s9, 3
    %p138 = pnand %p136, %p137
    %p139 = pneg %p138
    // Predicated region
    $region29: #{auto_quantized_net_forward.6} parent=5 // pred_check
      _
    $region30: #{auto_quantized_net_forward.6} parent=5 // pred_check_branch
      %141 = sbr.rel (%p138) target = $region32
    $region31: #{auto_quantized_net_forward.6} parent=5 // pred_region
      %s142 = ssub.s32 %s9, 1
      %p143 = scmp.lt.s32.totalorder %s14, 1
      %s144 = scalar_select %p143, %s14, 1
      %s145 = smul.addr %s144, 112
      %s146 = smul.addr %s145, 8
      %s147 = scalar_lea.vmem %s0, %s146
      %p148 = pneg %p35
      %p149 = pneg %p32
      %p150 = pneg %p56
      %p151 = pneg %p53
      %p152 = pneg %p77
      %p153 = pneg %p74
      %p154 = pneg %p103
      %p155 = pneg %p100
      %p156 = scmp.lt.s32.totalorder %s14, 1
      %s157 = scalar_select %p156, %s14, 1
      %s158 = smul.addr %s157, 28
      %s159 = smul.addr %s158, 8
      %s160 = scalar_lea.vmem %s3, %s159
      %p161 = scmp.lt.s32.totalorder %s14, 1
      %s162 = scalar_select %p161, %s14, 1
      %s163 = smul.addr %s162, 112
      %s164 = smul.addr %s163, 8
      %s165 = scalar_lea.vmem %s0, %s164
      %p166 = scmp.lt.s32.totalorder %s14, 1
      %s167 = scalar_select %p166, %s14, 1
      %s168 = smul.addr %s167, 28
      %s169 = smul.addr %s168, 8
      %s170 = scalar_lea.vmem %s3, %s169
      %v171 = vld [vmem:[%s1] sm:$0x1]
      %v172 = vld [vmem:[%s2] sm:$0x1]
      %v173 = vld [vmem:[%s165] sm:$0xff]
      %v174 = vld [vmem:[%s165 + $0x8] sm:$0xff]
      %v175 = vld [vmem:[%s165 + $0x10] sm:$0xff]
      %v176 = vld [vmem:[%s165 + $0x18] sm:$0xf]
      %v177 = vld [vmem:[%s165 + $0x20] sm:$0xff]
      %v178 = vld [vmem:[%s165 + $0x28] sm:$0xff]
      %v179 = vld [vmem:[%s165 + $0x30] sm:$0xff]
      %v180 = vld [vmem:[%s165 + $0x38] sm:$0xf]
      %v181 = vld [vmem:[%s165 + $0x40] sm:$0xff]
      %v182 = vld [vmem:[%s165 + $0x48] sm:$0xff]
      %v183 = vld [vmem:[%s165 + $0x50] sm:$0xff]
      %v184 = vld [vmem:[%s165 + $0x58] sm:$0xf]
      %v185 = vld [vmem:[%s165 + $0x60] sm:$0xff]
      %v186 = vld [vmem:[%s165 + $0x68] sm:$0xff]
      %v187 = vld [vmem:[%s165 + $0x70] sm:$0xff]
      %v188 = vld [vmem:[%s165 + $0x78] sm:$0xf]
      %v189 = vld [vmem:[%s165 + $0x80] sm:$0xff]
      %v190 = vld [vmem:[%s165 + $0x88] sm:$0xff]
      %v191 = vld [vmem:[%s165 + $0x90] sm:$0xff]
      %v192 = vld [vmem:[%s165 + $0x98] sm:$0xf]
      %v193 = vld [vmem:[%s165 + $0xa0] sm:$0xff]
      %v194 = vld [vmem:[%s165 + $0xa8] sm:$0xff]
      %v195 = vld [vmem:[%s165 + $0xb0] sm:$0xff]
      %v196 = vld [vmem:[%s165 + $0xb8] sm:$0xf]
      %v197 = vld [vmem:[%s165 + $0xc0] sm:$0xff]
      %v198 = vld [vmem:[%s165 + $0xc8] sm:$0xff]
      %v199 = vld [vmem:[%s165 + $0xd0] sm:$0xff]
      %v200 = vld [vmem:[%s165 + $0xd8] sm:$0xf]
      %v201 = vld [vmem:[%s165 + $0xe0] sm:$0xff]
      %v202 = vld [vmem:[%s165 + $0xe8] sm:$0xff]
      %v203 = vld [vmem:[%s165 + $0xf0] sm:$0xff]
      %v204 = vld [vmem:[%s165 + $0xf8] sm:$0xf]
      %v205 = vld [vmem:[%s165 + $0x100] sm:$0xff]
      %v206 = vld [vmem:[%s165 + $0x108] sm:$0xff]
      %v207 = vld [vmem:[%s165 + $0x110] sm:$0xff]
      %v208 = vld [vmem:[%s165 + $0x118] sm:$0xf]
      %v209 = vld [vmem:[%s165 + $0x120] sm:$0xff]
      %v210 = vld [vmem:[%s165 + $0x128] sm:$0xff]
      %v211 = vld [vmem:[%s165 + $0x130] sm:$0xff]
      %v212 = vld [vmem:[%s165 + $0x138] sm:$0xf]
      %v213 = vld [vmem:[%s165 + $0x140] sm:$0xff]
      %v214 = vld [vmem:[%s165 + $0x148] sm:$0xff]
      %v215 = vld [vmem:[%s165 + $0x150] sm:$0xff]
      %v216 = vld [vmem:[%s165 + $0x158] sm:$0xf]
      %v217 = vld [vmem:[%s165 + $0x160] sm:$0xff]
      %v218 = vld [vmem:[%s165 + $0x168] sm:$0xff]
      %v219 = vld [vmem:[%s165 + $0x170] sm:$0xff]
      %v220 = vld [vmem:[%s165 + $0x178] sm:$0xf]
      %v221 = vld [vmem:[%s165 + $0x180] sm:$0xff]
      %v222 = vld [vmem:[%s165 + $0x188] sm:$0xff]
      %v223 = vld [vmem:[%s165 + $0x190] sm:$0xff]
      %v224 = vld [vmem:[%s165 + $0x198] sm:$0xf]
      %v225 = vld [vmem:[%s165 + $0x1a0] sm:$0xff]
      %v226 = vld [vmem:[%s165 + $0x1a8] sm:$0xff]
      %v227 = vld [vmem:[%s165 + $0x1b0] sm:$0xff]
      %v228 = vld [vmem:[%s165 + $0x1b8] sm:$0xf]
      %v229 = vld [vmem:[%s165 + $0x1c0] sm:$0xff]
      %v230 = vld [vmem:[%s165 + $0x1c8] sm:$0xff]
      %v231 = vld [vmem:[%s165 + $0x1d0] sm:$0xff]
      %v232 = vld [vmem:[%s165 + $0x1d8] sm:$0xf]
      %v233 = vld [vmem:[%s165 + $0x1e0] sm:$0xff]
      %v234 = vld [vmem:[%s165 + $0x1e8] sm:$0xff]
      %v235 = vld [vmem:[%s165 + $0x1f0] sm:$0xff]
      %v236 = vld [vmem:[%s165 + $0x1f8] sm:$0xf]
      %v237 = vld [vmem:[%s165 + $0x200] sm:$0xff]
      %v238 = vld [vmem:[%s165 + $0x208] sm:$0xff]
      %v239 = vld [vmem:[%s165 + $0x210] sm:$0xff]
      %v240 = vld [vmem:[%s165 + $0x218] sm:$0xf]
      %v241 = vld [vmem:[%s165 + $0x220] sm:$0xff]
      %v242 = vld [vmem:[%s165 + $0x228] sm:$0xff]
      %v243 = vld [vmem:[%s165 + $0x230] sm:$0xff]
      %v244 = vld [vmem:[%s165 + $0x238] sm:$0xf]
      %v245 = vld [vmem:[%s165 + $0x240] sm:$0xff]
      %v246 = vld [vmem:[%s165 + $0x248] sm:$0xff]
      %v247 = vld [vmem:[%s165 + $0x250] sm:$0xff]
      %v248 = vld [vmem:[%s165 + $0x258] sm:$0xf]
      %v249 = vld [vmem:[%s165 + $0x260] sm:$0xff]
      %v250 = vld [vmem:[%s165 + $0x268] sm:$0xff]
      %v251 = vld [vmem:[%s165 + $0x270] sm:$0xff]
      %v252 = vld [vmem:[%s165 + $0x278] sm:$0xf]
      %v253 = vld [vmem:[%s165 + $0x280] sm:$0xff]
      %v254 = vld [vmem:[%s165 + $0x288] sm:$0xff]
      %v255 = vld [vmem:[%s165 + $0x290] sm:$0xff]
      %v256 = vld [vmem:[%s165 + $0x298] sm:$0xf]
      %v257 = vld [vmem:[%s165 + $0x2a0] sm:$0xff]
      %v258 = vld [vmem:[%s165 + $0x2a8] sm:$0xff]
      %v259 = vld [vmem:[%s165 + $0x2b0] sm:$0xff]
      %v260 = vld [vmem:[%s165 + $0x2b8] sm:$0xf]
      %v261 = vld [vmem:[%s165 + $0x2c0] sm:$0xff]
      %v262 = vld [vmem:[%s165 + $0x2c8] sm:$0xff]
      %v263 = vld [vmem:[%s165 + $0x2d0] sm:$0xff]
      %v264 = vld [vmem:[%s165 + $0x2d8] sm:$0xf]
      %v265 = vld [vmem:[%s165 + $0x2e0] sm:$0xff]
      %v266 = vld [vmem:[%s165 + $0x2e8] sm:$0xff]
      %v267 = vld [vmem:[%s165 + $0x2f0] sm:$0xff]
      %v268 = vld [vmem:[%s165 + $0x2f8] sm:$0xf]
      %v269 = vld [vmem:[%s165 + $0x300] sm:$0xff]
      %v270 = vld [vmem:[%s165 + $0x308] sm:$0xff]
      %v271 = vld [vmem:[%s165 + $0x310] sm:$0xff]
      %v272 = vld [vmem:[%s165 + $0x318] sm:$0xf]
      %v273 = vld [vmem:[%s165 + $0x320] sm:$0xff]
      %v274 = vld [vmem:[%s165 + $0x328] sm:$0xff]
      %v275 = vld [vmem:[%s165 + $0x330] sm:$0xff]
      %v276 = vld [vmem:[%s165 + $0x338] sm:$0xf]
      %v277 = vld [vmem:[%s165 + $0x340] sm:$0xff]
      %v278 = vld [vmem:[%s165 + $0x348] sm:$0xff]
      %v279 = vld [vmem:[%s165 + $0x350] sm:$0xff]
      %v280 = vld [vmem:[%s165 + $0x358] sm:$0xf]
      %v281 = vld [vmem:[%s165 + $0x360] sm:$0xff]
      %v282 = vld [vmem:[%s165 + $0x368] sm:$0xff]
      %v283 = vld [vmem:[%s165 + $0x370] sm:$0xff]
      %v284 = vld [vmem:[%s165 + $0x378] sm:$0xf]
      %v286 = vlaneseq
      %v287 = vshrl.u32 %v286, 7
      %v288 = vsub.s32 0, %v287
      %v289 = vrot.slane %v171, %v288
      %v291 = vmul.f32 %v173, %v289
      %v292 = vmul.f32 %v174, %v289
      %v293 = vmul.f32 %v175, %v289
      %v294 = vmul.f32 %v176, %v289
      %v295 = vmul.f32 %v181, %v289
      %v296 = vmul.f32 %v182, %v289
      %v297 = vmul.f32 %v183, %v289
      %v298 = vmul.f32 %v184, %v289
      %v299 = vmul.f32 %v189, %v289
      %v300 = vmul.f32 %v190, %v289
      %v301 = vmul.f32 %v191, %v289
      %v302 = vmul.f32 %v192, %v289
      %v303 = vmul.f32 %v197, %v289
      %v304 = vmul.f32 %v198, %v289
      %v305 = vmul.f32 %v199, %v289
      %v306 = vmul.f32 %v200, %v289
      %v307 = vmul.f32 %v205, %v289
      %v308 = vmul.f32 %v206, %v289
      %v309 = vmul.f32 %v207, %v289
      %v310 = vmul.f32 %v208, %v289
      %v311 = vmul.f32 %v213, %v289
      %v312 = vmul.f32 %v214, %v289
      %v313 = vmul.f32 %v215, %v289
      %v314 = vmul.f32 %v216, %v289
      %v315 = vmul.f32 %v221, %v289
      %v316 = vmul.f32 %v222, %v289
      %v317 = vmul.f32 %v223, %v289
      %v318 = vmul.f32 %v224, %v289
      %v319 = vmul.f32 %v229, %v289
      %v320 = vmul.f32 %v230, %v289
      %v321 = vmul.f32 %v231, %v289
      %v322 = vmul.f32 %v232, %v289
      %v323 = vmul.f32 %v237, %v289
      %v324 = vmul.f32 %v238, %v289
      %v325 = vmul.f32 %v239, %v289
      %v326 = vmul.f32 %v240, %v289
      %v327 = vmul.f32 %v245, %v289
      %v328 = vmul.f32 %v246, %v289
      %v329 = vmul.f32 %v247, %v289
      %v330 = vmul.f32 %v248, %v289
      %v331 = vmul.f32 %v253, %v289
      %v332 = vmul.f32 %v254, %v289
      %v333 = vmul.f32 %v255, %v289
      %v334 = vmul.f32 %v256, %v289
      %v335 = vmul.f32 %v261, %v289
      %v336 = vmul.f32 %v262, %v289
      %v337 = vmul.f32 %v263, %v289
      %v338 = vmul.f32 %v264, %v289
      %v339 = vmul.f32 %v269, %v289
      %v340 = vmul.f32 %v270, %v289
      %v341 = vmul.f32 %v271, %v289
      %v342 = vmul.f32 %v272, %v289
      %v343 = vmul.f32 %v277, %v289
      %v344 = vmul.f32 %v278, %v289
      %v345 = vmul.f32 %v279, %v289
      %v346 = vmul.f32 %v280, %v289
      %v348 = vlaneseq
      %v349 = vshrl.u32 %v348, 7
      %v350 = vsub.s32 0, %v349
      %v351 = vrot.slane %v172, %v350
      %v353 = vadd.f32 %v291, %v351
      %v354 = vadd.f32 %v292, %v351
      %v355 = vadd.f32 %v293, %v351
      %v356 = vadd.f32 %v294, %v351
      %v357 = vadd.f32 %v295, %v351
      %v358 = vadd.f32 %v296, %v351
      %v359 = vadd.f32 %v297, %v351
      %v360 = vadd.f32 %v298, %v351
      %v361 = vadd.f32 %v299, %v351
      %v362 = vadd.f32 %v300, %v351
      %v363 = vadd.f32 %v301, %v351
      %v364 = vadd.f32 %v302, %v351
      %v365 = vadd.f32 %v303, %v351
      %v366 = vadd.f32 %v304, %v351
      %v367 = vadd.f32 %v305, %v351
      %v368 = vadd.f32 %v306, %v351
      %v369 = vadd.f32 %v307, %v351
      %v370 = vadd.f32 %v308, %v351
      %v371 = vadd.f32 %v309, %v351
      %v372 = vadd.f32 %v310, %v351
      %v373 = vadd.f32 %v311, %v351
      %v374 = vadd.f32 %v312, %v351
      %v375 = vadd.f32 %v313, %v351
      %v376 = vadd.f32 %v314, %v351
      %v377 = vadd.f32 %v315, %v351
      %v378 = vadd.f32 %v316, %v351
      %v379 = vadd.f32 %v317, %v351
      %v380 = vadd.f32 %v318, %v351
      %v381 = vadd.f32 %v319, %v351
      %v382 = vadd.f32 %v320, %v351
      %v383 = vadd.f32 %v321, %v351
      %v384 = vadd.f32 %v322, %v351
      %v385 = vadd.f32 %v323, %v351
      %v386 = vadd.f32 %v324, %v351
      %v387 = vadd.f32 %v325, %v351
      %v388 = vadd.f32 %v326, %v351
      %v389 = vadd.f32 %v327, %v351
      %v390 = vadd.f32 %v328, %v351
      %v391 = vadd.f32 %v329, %v351
      %v392 = vadd.f32 %v330, %v351
      %v393 = vadd.f32 %v331, %v351
      %v394 = vadd.f32 %v332, %v351
      %v395 = vadd.f32 %v333, %v351
      %v396 = vadd.f32 %v334, %v351
      %v397 = vadd.f32 %v335, %v351
      %v398 = vadd.f32 %v336, %v351
      %v399 = vadd.f32 %v337, %v351
      %v400 = vadd.f32 %v338, %v351
      %v401 = vadd.f32 %v339, %v351
      %v402 = vadd.f32 %v340, %v351
      %v403 = vadd.f32 %v341, %v351
      %v404 = vadd.f32 %v342, %v351
      %v405 = vadd.f32 %v343, %v351
      %v406 = vadd.f32 %v344, %v351
      %v407 = vadd.f32 %v345, %v351
      %v408 = vadd.f32 %v346, %v351
      %v409 = vmul.f32 %v177, %v289
      %v410 = vmul.f32 %v178, %v289
      %v411 = vmul.f32 %v179, %v289
      %v412 = vmul.f32 %v180, %v289
      %v413 = vmul.f32 %v185, %v289
      %v414 = vmul.f32 %v186, %v289
      %v415 = vmul.f32 %v187, %v289
      %v416 = vmul.f32 %v188, %v289
      %v417 = vmul.f32 %v193, %v289
      %v418 = vmul.f32 %v194, %v289
      %v419 = vmul.f32 %v195, %v289
      %v420 = vmul.f32 %v196, %v289
      %v421 = vmul.f32 %v201, %v289
      %v422 = vmul.f32 %v202, %v289
      %v423 = vmul.f32 %v203, %v289
      %v424 = vmul.f32 %v204, %v289
      %v425 = vmul.f32 %v209, %v289
      %v426 = vmul.f32 %v210, %v289
      %v427 = vmul.f32 %v211, %v289
      %v428 = vmul.f32 %v212, %v289
      %v429 = vmul.f32 %v217, %v289
      %v430 = vmul.f32 %v218, %v289
      %v431 = vmul.f32 %v219, %v289
      %v432 = vmul.f32 %v220, %v289
      %v433 = vmul.f32 %v225, %v289
      %v434 = vmul.f32 %v226, %v289
      %v435 = vmul.f32 %v227, %v289
      %v436 = vmul.f32 %v228, %v289
      %v437 = vmul.f32 %v233, %v289
      %v438 = vmul.f32 %v234, %v289
      %v439 = vmul.f32 %v235, %v289
      %v440 = vmul.f32 %v236, %v289
      %v441 = vmul.f32 %v241, %v289
      %v442 = vmul.f32 %v242, %v289
      %v443 = vmul.f32 %v243, %v289
      %v444 = vmul.f32 %v244, %v289
      %v445 = vmul.f32 %v249, %v289
      %v446 = vmul.f32 %v250, %v289
      %v447 = vmul.f32 %v251, %v289
      %v448 = vmul.f32 %v252, %v289
      %v449 = vmul.f32 %v257, %v289
      %v450 = vmul.f32 %v258, %v289
      %v451 = vmul.f32 %v259, %v289
      %v452 = vmul.f32 %v260, %v289
      %v453 = vmul.f32 %v265, %v289
      %v454 = vmul.f32 %v266, %v289
      %v455 = vmul.f32 %v267, %v289
      %v456 = vmul.f32 %v268, %v289
      %v457 = vmul.f32 %v273, %v289
      %v458 = vmul.f32 %v274, %v289
      %v459 = vmul.f32 %v275, %v289
      %v460 = vmul.f32 %v276, %v289
      %v461 = vmul.f32 %v281, %v289
      %v462 = vmul.f32 %v282, %v289
      %v463 = vmul.f32 %v283, %v289
      %v464 = vmul.f32 %v284, %v289
      %v465 = vadd.f32 %v409, %v351
      %v466 = vadd.f32 %v410, %v351
      %v467 = vadd.f32 %v411, %v351
      %v468 = vadd.f32 %v412, %v351
      %v469 = vadd.f32 %v413, %v351
      %v470 = vadd.f32 %v414, %v351
      %v471 = vadd.f32 %v415, %v351
      %v472 = vadd.f32 %v416, %v351
      %v473 = vadd.f32 %v417, %v351
      %v474 = vadd.f32 %v418, %v351
      %v475 = vadd.f32 %v419, %v351
      %v476 = vadd.f32 %v420, %v351
      %v477 = vadd.f32 %v421, %v351
      %v478 = vadd.f32 %v422, %v351
      %v479 = vadd.f32 %v423, %v351
      %v480 = vadd.f32 %v424, %v351
      %v481 = vadd.f32 %v425, %v351
      %v482 = vadd.f32 %v426, %v351
      %v483 = vadd.f32 %v427, %v351
      %v484 = vadd.f32 %v428, %v351
      %v485 = vadd.f32 %v429, %v351
      %v486 = vadd.f32 %v430, %v351
      %v487 = vadd.f32 %v431, %v351
      %v488 = vadd.f32 %v432, %v351
      %v489 = vadd.f32 %v433, %v351
      %v490 = vadd.f32 %v434, %v351
      %v491 = vadd.f32 %v435, %v351
      %v492 = vadd.f32 %v436, %v351
      %v493 = vadd.f32 %v437, %v351
      %v494 = vadd.f32 %v438, %v351
      %v495 = vadd.f32 %v439, %v351
      %v496 = vadd.f32 %v440, %v351
      %v497 = vadd.f32 %v441, %v351
      %v498 = vadd.f32 %v442, %v351
      %v499 = vadd.f32 %v443, %v351
      %v500 = vadd.f32 %v444, %v351
      %v501 = vadd.f32 %v445, %v351
      %v502 = vadd.f32 %v446, %v351
      %v503 = vadd.f32 %v447, %v351
      %v504 = vadd.f32 %v448, %v351
      %v505 = vadd.f32 %v449, %v351
      %v506 = vadd.f32 %v450, %v351
      %v507 = vadd.f32 %v451, %v351
      %v508 = vadd.f32 %v452, %v351
      %v509 = vadd.f32 %v453, %v351
      %v510 = vadd.f32 %v454, %v351
      %v511 = vadd.f32 %v455, %v351
      %v512 = vadd.f32 %v456, %v351
      %v513 = vadd.f32 %v457, %v351
      %v514 = vadd.f32 %v458, %v351
      %v515 = vadd.f32 %v459, %v351
      %v516 = vadd.f32 %v460, %v351
      %v517 = vadd.f32 %v461, %v351
      %v518 = vadd.f32 %v462, %v351
      %v519 = vadd.f32 %v463, %v351
      %v520 = vadd.f32 %v464, %v351
      %v521 = vmax.f32 %v353, %v465
      %v522 = vmax.f32 %v354, %v466
      %v523 = vmax.f32 %v355, %v467
      %v524 = vmax.f32 %v356, %v468
      %v525 = vmax.f32 %v357, %v469
      %v526 = vmax.f32 %v358, %v470
      %v527 = vmax.f32 %v359, %v471
      %v528 = vmax.f32 %v360, %v472
      %v529 = vmax.f32 %v361, %v473
      %v530 = vmax.f32 %v362, %v474
      %v531 = vmax.f32 %v363, %v475
      %v532 = vmax.f32 %v364, %v476
      %v533 = vmax.f32 %v365, %v477
      %v534 = vmax.f32 %v366, %v478
      %v535 = vmax.f32 %v367, %v479
      %v536 = vmax.f32 %v368, %v480
      %v537 = vmax.f32 %v369, %v481
      %v538 = vmax.f32 %v370, %v482
      %v539 = vmax.f32 %v371, %v483
      %v540 = vmax.f32 %v372, %v484
      %v541 = vmax.f32 %v373, %v485
      %v542 = vmax.f32 %v374, %v486
      %v543 = vmax.f32 %v375, %v487
      %v544 = vmax.f32 %v376, %v488
      %v545 = vmax.f32 %v377, %v489
      %v546 = vmax.f32 %v378, %v490
      %v547 = vmax.f32 %v379, %v491
      %v548 = vmax.f32 %v380, %v492
      %v549 = vmax.f32 %v381, %v493
      %v550 = vmax.f32 %v382, %v494
      %v551 = vmax.f32 %v383, %v495
      %v552 = vmax.f32 %v384, %v496
      %v553 = vmax.f32 %v385, %v497
      %v554 = vmax.f32 %v386, %v498
      %v555 = vmax.f32 %v387, %v499
      %v556 = vmax.f32 %v388, %v500
      %v557 = vmax.f32 %v389, %v501
      %v558 = vmax.f32 %v390, %v502
      %v559 = vmax.f32 %v391, %v503
      %v560 = vmax.f32 %v392, %v504
      %v561 = vmax.f32 %v393, %v505
      %v562 = vmax.f32 %v394, %v506
      %v563 = vmax.f32 %v395, %v507
      %v564 = vmax.f32 %v396, %v508
      %v565 = vmax.f32 %v397, %v509
      %v566 = vmax.f32 %v398, %v510
      %v567 = vmax.f32 %v399, %v511
      %v568 = vmax.f32 %v400, %v512
      %v569 = vmax.f32 %v401, %v513
      %v570 = vmax.f32 %v402, %v514
      %v571 = vmax.f32 %v403, %v515
      %v572 = vmax.f32 %v404, %v516
      %v573 = vmax.f32 %v405, %v517
      %v574 = vmax.f32 %v406, %v518
      %v575 = vmax.f32 %v407, %v519
      %v576 = vmax.f32 %v408, %v520
      %vm577 = vcmask 130048
      %578 = vst.msk [vmem:[#allocation2] sm:$0xff] %vm577, %v521
      %579 = vst.msk [vmem:[#allocation2 + $0x8] sm:$0xff] %vm577, %v522
      %580 = vst.msk [vmem:[#allocation2 + $0x10] sm:$0xff] %vm577, %v523
      %vm581 = vcmask 125952
      %582 = vst.msk [vmem:[#allocation2 + $0x18] sm:$0xf] %vm581, %v524
      %583 = vst.msk [vmem:[#allocation2 + $0x20] sm:$0xff] %vm577, %v525
      %584 = vst.msk [vmem:[#allocation2 + $0x28] sm:$0xff] %vm577, %v526
      %585 = vst.msk [vmem:[#allocation2 + $0x30] sm:$0xff] %vm577, %v527
      %586 = vst.msk [vmem:[#allocation2 + $0x38] sm:$0xf] %vm581, %v528
      %587 = vst.msk [vmem:[#allocation2 + $0x40] sm:$0xff] %vm577, %v529
      %588 = vst.msk [vmem:[#allocation2 + $0x48] sm:$0xff] %vm577, %v530
      %589 = vst.msk [vmem:[#allocation2 + $0x50] sm:$0xff] %vm577, %v531
      %590 = vst.msk [vmem:[#allocation2 + $0x58] sm:$0xf] %vm581, %v532
      %591 = vst.msk [vmem:[#allocation2 + $0x60] sm:$0xff] %vm577, %v533
      %592 = vst.msk [vmem:[#allocation2 + $0x68] sm:$0xff] %vm577, %v534
      %593 = vst.msk [vmem:[#allocation2 + $0x70] sm:$0xff] %vm577, %v535
      %594 = vst.msk [vmem:[#allocation2 + $0x78] sm:$0xf] %vm581, %v536
      %595 = vst.msk [vmem:[#allocation2 + $0x80] sm:$0xff] %vm577, %v537
      %596 = vst.msk [vmem:[#allocation2 + $0x88] sm:$0xff] %vm577, %v538
      %597 = vst.msk [vmem:[#allocation2 + $0x90] sm:$0xff] %vm577, %v539
      %598 = vst.msk [vmem:[#allocation2 + $0x98] sm:$0xf] %vm581, %v540
      %599 = vst.msk [vmem:[#allocation2 + $0xa0] sm:$0xff] %vm577, %v541
      %600 = vst.msk [vmem:[#allocation2 + $0xa8] sm:$0xff] %vm577, %v542
      %601 = vst.msk [vmem:[#allocation2 + $0xb0] sm:$0xff] %vm577, %v543
      %602 = vst.msk [vmem:[#allocation2 + $0xb8] sm:$0xf] %vm581, %v544
      %603 = vst.msk [vmem:[#allocation2 + $0xc0] sm:$0xff] %vm577, %v545
      %604 = vst.msk [vmem:[#allocation2 + $0xc8] sm:$0xff] %vm577, %v546
      %605 = vst.msk [vmem:[#allocation2 + $0xd0] sm:$0xff] %vm577, %v547
      %606 = vst.msk [vmem:[#allocation2 + $0xd8] sm:$0xf] %vm581, %v548
      %607 = vst.msk [vmem:[#allocation2 + $0xe0] sm:$0xff] %vm577, %v549
      %608 = vst.msk [vmem:[#allocation2 + $0xe8] sm:$0xff] %vm577, %v550
      %609 = vst.msk [vmem:[#allocation2 + $0xf0] sm:$0xff] %vm577, %v551
      %610 = vst.msk [vmem:[#allocation2 + $0xf8] sm:$0xf] %vm581, %v552
      %611 = vst.msk [vmem:[#allocation2 + $0x100] sm:$0xff] %vm577, %v553
      %612 = vst.msk [vmem:[#allocation2 + $0x108] sm:$0xff] %vm577, %v554
      %613 = vst.msk [vmem:[#allocation2 + $0x110] sm:$0xff] %vm577, %v555
      %614 = vst.msk [vmem:[#allocation2 + $0x118] sm:$0xf] %vm581, %v556
      %615 = vst.msk [vmem:[#allocation2 + $0x120] sm:$0xff] %vm577, %v557
      %616 = vst.msk [vmem:[#allocation2 + $0x128] sm:$0xff] %vm577, %v558
      %617 = vst.msk [vmem:[#allocation2 + $0x130] sm:$0xff] %vm577, %v559
      %618 = vst.msk [vmem:[#allocation2 + $0x138] sm:$0xf] %vm581, %v560
      %619 = vst.msk [vmem:[#allocation2 + $0x140] sm:$0xff] %vm577, %v561
      %620 = vst.msk [vmem:[#allocation2 + $0x148] sm:$0xff] %vm577, %v562
      %621 = vst.msk [vmem:[#allocation2 + $0x150] sm:$0xff] %vm577, %v563
      %622 = vst.msk [vmem:[#allocation2 + $0x158] sm:$0xf] %vm581, %v564
      %623 = vst.msk [vmem:[#allocation2 + $0x160] sm:$0xff] %vm577, %v565
      %624 = vst.msk [vmem:[#allocation2 + $0x168] sm:$0xff] %vm577, %v566
      %625 = vst.msk [vmem:[#allocation2 + $0x170] sm:$0xff] %vm577, %v567
      %626 = vst.msk [vmem:[#allocation2 + $0x178] sm:$0xf] %vm581, %v568
      %627 = vst.msk [vmem:[#allocation2 + $0x180] sm:$0xff] %vm577, %v569
      %628 = vst.msk [vmem:[#allocation2 + $0x188] sm:$0xff] %vm577, %v570
      %629 = vst.msk [vmem:[#allocation2 + $0x190] sm:$0xff] %vm577, %v571
      %630 = vst.msk [vmem:[#allocation2 + $0x198] sm:$0xf] %vm581, %v572
      %631 = vst.msk [vmem:[#allocation2 + $0x1a0] sm:$0xff] %vm577, %v573
      %632 = vst.msk [vmem:[#allocation2 + $0x1a8] sm:$0xff] %vm577, %v574
      %633 = vst.msk [vmem:[#allocation2 + $0x1b0] sm:$0xff] %vm577, %v575
      %634 = vst.msk [vmem:[#allocation2 + $0x1b8] sm:$0xf] %vm581, %v576
      %v635 = vld [vmem:[#allocation2] ss:$2 sm:$0xff]
      %s636 = scalar_lea.vmem [#allocation2], 16
      %v637 = vld [vmem:[%s636] ss:$2 sm:$0x3f]
      %s638 = scalar_lea.vmem [#allocation2], 32
      %v639 = vld [vmem:[%s638] ss:$2 sm:$0xff]
      %s640 = scalar_lea.vmem [#allocation2], 48
      %v641 = vld [vmem:[%s640] ss:$2 sm:$0x3f]
      %s642 = scalar_lea.vmem [#allocation2], 64
      %v643 = vld [vmem:[%s642] ss:$2 sm:$0xff]
      %s644 = scalar_lea.vmem [#allocation2], 80
      %v645 = vld [vmem:[%s644] ss:$2 sm:$0x3f]
      %s646 = scalar_lea.vmem [#allocation2], 96
      %v647 = vld [vmem:[%s646] ss:$2 sm:$0xff]
      %s648 = scalar_lea.vmem [#allocation2], 112
      %v649 = vld [vmem:[%s648] ss:$2 sm:$0x3f]
      %s650 = scalar_lea.vmem [#allocation2], 128
      %v651 = vld [vmem:[%s650] ss:$2 sm:$0xff]
      %s652 = scalar_lea.vmem [#allocation2], 144
      %v653 = vld [vmem:[%s652] ss:$2 sm:$0x3f]
      %s654 = scalar_lea.vmem [#allocation2], 160
      %v655 = vld [vmem:[%s654] ss:$2 sm:$0xff]
      %s656 = scalar_lea.vmem [#allocation2], 176
      %v657 = vld [vmem:[%s656] ss:$2 sm:$0x3f]
      %s658 = scalar_lea.vmem [#allocation2], 192
      %v659 = vld [vmem:[%s658] ss:$2 sm:$0xff]
      %s660 = scalar_lea.vmem [#allocation2], 208
      %v661 = vld [vmem:[%s660] ss:$2 sm:$0x3f]
      %s662 = scalar_lea.vmem [#allocation2], 224
      %v663 = vld [vmem:[%s662] ss:$2 sm:$0xff]
      %s664 = scalar_lea.vmem [#allocation2], 240
      %v665 = vld [vmem:[%s664] ss:$2 sm:$0x3f]
      %s666 = scalar_lea.vmem [#allocation2], 256
      %v667 = vld [vmem:[%s666] ss:$2 sm:$0xff]
      %s668 = scalar_lea.vmem [#allocation2], 272
      %v669 = vld [vmem:[%s668] ss:$2 sm:$0x3f]
      %s670 = scalar_lea.vmem [#allocation2], 288
      %v671 = vld [vmem:[%s670] ss:$2 sm:$0xff]
      %s672 = scalar_lea.vmem [#allocation2], 304
      %v673 = vld [vmem:[%s672] ss:$2 sm:$0x3f]
      %s674 = scalar_lea.vmem [#allocation2], 320
      %v675 = vld [vmem:[%s674] ss:$2 sm:$0xff]
      %s676 = scalar_lea.vmem [#allocation2], 336
      %v677 = vld [vmem:[%s676] ss:$2 sm:$0x3f]
      %s678 = scalar_lea.vmem [#allocation2], 352
      %v679 = vld [vmem:[%s678] ss:$2 sm:$0xff]
      %s680 = scalar_lea.vmem [#allocation2], 368
      %v681 = vld [vmem:[%s680] ss:$2 sm:$0x3f]
      %s682 = scalar_lea.vmem [#allocation2], 384
      %v683 = vld [vmem:[%s682] ss:$2 sm:$0xff]
      %s684 = scalar_lea.vmem [#allocation2], 400
      %v685 = vld [vmem:[%s684] ss:$2 sm:$0x3f]
      %s686 = scalar_lea.vmem [#allocation2], 416
      %v687 = vld [vmem:[%s686] ss:$2 sm:$0xff]
      %s688 = scalar_lea.vmem [#allocation2], 432
      %v689 = vld [vmem:[%s688] ss:$2 sm:$0x3f]
      %s690 = scalar_lea.vmem [#allocation2], 1
      %v691 = vld [vmem:[%s690] ss:$2 sm:$0xff]
      %s692 = scalar_lea.vmem [#allocation2], 17
      %v693 = vld [vmem:[%s692] ss:$2 sm:$0x3f]
      %s694 = scalar_lea.vmem [#allocation2], 33
      %v695 = vld [vmem:[%s694] ss:$2 sm:$0xff]
      %s696 = scalar_lea.vmem [#allocation2], 49
      %v697 = vld [vmem:[%s696] ss:$2 sm:$0x3f]
      %s698 = scalar_lea.vmem [#allocation2], 65
      %v699 = vld [vmem:[%s698] ss:$2 sm:$0xff]
      %s700 = scalar_lea.vmem [#allocation2], 81
      %v701 = vld [vmem:[%s700] ss:$2 sm:$0x3f]
      %s702 = scalar_lea.vmem [#allocation2], 97
      %v703 = vld [vmem:[%s702] ss:$2 sm:$0xff]
      %s704 = scalar_lea.vmem [#allocation2], 113
      %v705 = vld [vmem:[%s704] ss:$2 sm:$0x3f]
      %s706 = scalar_lea.vmem [#allocation2], 129
      %v707 = vld [vmem:[%s706] ss:$2 sm:$0xff]
      %s708 = scalar_lea.vmem [#allocation2], 145
      %v709 = vld [vmem:[%s708] ss:$2 sm:$0x3f]
      %s710 = scalar_lea.vmem [#allocation2], 161
      %v711 = vld [vmem:[%s710] ss:$2 sm:$0xff]
      %s712 = scalar_lea.vmem [#allocation2], 177
      %v713 = vld [vmem:[%s712] ss:$2 sm:$0x3f]
      %s714 = scalar_lea.vmem [#allocation2], 193
      %v715 = vld [vmem:[%s714] ss:$2 sm:$0xff]
      %s716 = scalar_lea.vmem [#allocation2], 209
      %v717 = vld [vmem:[%s716] ss:$2 sm:$0x3f]
      %s718 = scalar_lea.vmem [#allocation2], 225
      %v719 = vld [vmem:[%s718] ss:$2 sm:$0xff]
      %s720 = scalar_lea.vmem [#allocation2], 241
      %v721 = vld [vmem:[%s720] ss:$2 sm:$0x3f]
      %s722 = scalar_lea.vmem [#allocation2], 257
      %v723 = vld [vmem:[%s722] ss:$2 sm:$0xff]
      %s724 = scalar_lea.vmem [#allocation2], 273
      %v725 = vld [vmem:[%s724] ss:$2 sm:$0x3f]
      %s726 = scalar_lea.vmem [#allocation2], 289
      %v727 = vld [vmem:[%s726] ss:$2 sm:$0xff]
      %s728 = scalar_lea.vmem [#allocation2], 305
      %v729 = vld [vmem:[%s728] ss:$2 sm:$0x3f]
      %s730 = scalar_lea.vmem [#allocation2], 321
      %v731 = vld [vmem:[%s730] ss:$2 sm:$0xff]
      %s732 = scalar_lea.vmem [#allocation2], 337
      %v733 = vld [vmem:[%s732] ss:$2 sm:$0x3f]
      %s734 = scalar_lea.vmem [#allocation2], 353
      %v735 = vld [vmem:[%s734] ss:$2 sm:$0xff]
      %s736 = scalar_lea.vmem [#allocation2], 369
      %v737 = vld [vmem:[%s736] ss:$2 sm:$0x3f]
      %s738 = scalar_lea.vmem [#allocation2], 385
      %v739 = vld [vmem:[%s738] ss:$2 sm:$0xff]
      %s740 = scalar_lea.vmem [#allocation2], 401
      %v741 = vld [vmem:[%s740] ss:$2 sm:$0x3f]
      %s742 = scalar_lea.vmem [#allocation2], 417
      %v743 = vld [vmem:[%s742] ss:$2 sm:$0xff]
      %s744 = scalar_lea.vmem [#allocation2], 433
      %v745 = vld [vmem:[%s744] ss:$2 sm:$0x3f]
      %v746 = vmax.f32 %v635, %v691
      %v747 = vmax.f32 %v637, %v693
      %v748 = vmax.f32 %v639, %v695
      %v749 = vmax.f32 %v641, %v697
      %v750 = vmax.f32 %v643, %v699
      %v751 = vmax.f32 %v645, %v701
      %v752 = vmax.f32 %v647, %v703
      %v753 = vmax.f32 %v649, %v705
      %v754 = vmax.f32 %v651, %v707
      %v755 = vmax.f32 %v653, %v709
      %v756 = vmax.f32 %v655, %v711
      %v757 = vmax.f32 %v657, %v713
      %v758 = vmax.f32 %v659, %v715
      %v759 = vmax.f32 %v661, %v717
      %v760 = vmax.f32 %v663, %v719
      %v761 = vmax.f32 %v665, %v721
      %v762 = vmax.f32 %v667, %v723
      %v763 = vmax.f32 %v669, %v725
      %v764 = vmax.f32 %v671, %v727
      %v765 = vmax.f32 %v673, %v729
      %v766 = vmax.f32 %v675, %v731
      %v767 = vmax.f32 %v677, %v733
      %v768 = vmax.f32 %v679, %v735
      %v769 = vmax.f32 %v681, %v737
      %v770 = vmax.f32 %v683, %v739
      %v771 = vmax.f32 %v685, %v741
      %v772 = vmax.f32 %v687, %v743
      %v773 = vmax.f32 %v689, %v745
      %v774 = vmax.f32 %v746, 0.0
      %v775 = vmax.f32 %v747, 0.0
      %v776 = vmax.f32 %v748, 0.0
      %v777 = vmax.f32 %v749, 0.0
      %v778 = vmax.f32 %v750, 0.0
      %v779 = vmax.f32 %v751, 0.0
      %v780 = vmax.f32 %v752, 0.0
      %v781 = vmax.f32 %v753, 0.0
      %v782 = vmax.f32 %v754, 0.0
      %v783 = vmax.f32 %v755, 0.0
      %v784 = vmax.f32 %v756, 0.0
      %v785 = vmax.f32 %v757, 0.0
      %v786 = vmax.f32 %v758, 0.0
      %v787 = vmax.f32 %v759, 0.0
      %v788 = vmax.f32 %v760, 0.0
      %v789 = vmax.f32 %v761, 0.0
      %v790 = vmax.f32 %v762, 0.0
      %v791 = vmax.f32 %v763, 0.0
      %v792 = vmax.f32 %v764, 0.0
      %v793 = vmax.f32 %v765, 0.0
      %v794 = vmax.f32 %v766, 0.0
      %v795 = vmax.f32 %v767, 0.0
      %v796 = vmax.f32 %v768, 0.0
      %v797 = vmax.f32 %v769, 0.0
      %v798 = vmax.f32 %v770, 0.0
      %v799 = vmax.f32 %v771, 0.0
      %v800 = vmax.f32 %v772, 0.0
      %v801 = vmax.f32 %v773, 0.0
      %802 = vst.msk [vmem:[%s170] sm:$0xff] %vm577, %v774
      %vm803 = vcmask 128000
      %804 = vst.msk [vmem:[%s170 + $0x8] sm:$0x3f] %vm803, %v775
      %805 = vst.msk [vmem:[%s170 + $0x10] sm:$0xff] %vm577, %v776
      %806 = vst.msk [vmem:[%s170 + $0x18] sm:$0x3f] %vm803, %v777
      %807 = vst.msk [vmem:[%s170 + $0x20] sm:$0xff] %vm577, %v778
      %808 = vst.msk [vmem:[%s170 + $0x28] sm:$0x3f] %vm803, %v779
      %809 = vst.msk [vmem:[%s170 + $0x30] sm:$0xff] %vm577, %v780
      %810 = vst.msk [vmem:[%s170 + $0x38] sm:$0x3f] %vm803, %v781
      %811 = vst.msk [vmem:[%s170 + $0x40] sm:$0xff] %vm577, %v782
      %812 = vst.msk [vmem:[%s170 + $0x48] sm:$0x3f] %vm803, %v783
      %813 = vst.msk [vmem:[%s170 + $0x50] sm:$0xff] %vm577, %v784
      %814 = vst.msk [vmem:[%s170 + $0x58] sm:$0x3f] %vm803, %v785
      %815 = vst.msk [vmem:[%s170 + $0x60] sm:$0xff] %vm577, %v786
      %816 = vst.msk [vmem:[%s170 + $0x68] sm:$0x3f] %vm803, %v787
      %817 = vst.msk [vmem:[%s170 + $0x70] sm:$0xff] %vm577, %v788
      %818 = vst.msk [vmem:[%s170 + $0x78] sm:$0x3f] %vm803, %v789
      %819 = vst.msk [vmem:[%s170 + $0x80] sm:$0xff] %vm577, %v790
      %820 = vst.msk [vmem:[%s170 + $0x88] sm:$0x3f] %vm803, %v791
      %821 = vst.msk [vmem:[%s170 + $0x90] sm:$0xff] %vm577, %v792
      %822 = vst.msk [vmem:[%s170 + $0x98] sm:$0x3f] %vm803, %v793
      %823 = vst.msk [vmem:[%s170 + $0xa0] sm:$0xff] %vm577, %v794
      %824 = vst.msk [vmem:[%s170 + $0xa8] sm:$0x3f] %vm803, %v795
      %825 = vst.msk [vmem:[%s170 + $0xb0] sm:$0xff] %vm577, %v796
      %826 = vst.msk [vmem:[%s170 + $0xb8] sm:$0x3f] %vm803, %v797
      %827 = vst.msk [vmem:[%s170 + $0xc0] sm:$0xff] %vm577, %v798
      %828 = vst.msk [vmem:[%s170 + $0xc8] sm:$0x3f] %vm803, %v799
      %829 = vst.msk [vmem:[%s170 + $0xd0] sm:$0xff] %vm577, %v800
      %830 = vst.msk [vmem:[%s170 + $0xd8] sm:$0x3f] %vm803, %v801
      %p831 = scmp.lt.s32.totalorder %s14, 1
      %s832 = scalar_select %p831, %s14, 1
      %s833 = smul.addr %s832, 28
      %s834 = smul.addr %s833, 8
      %s835 = scalar_lea.vmem %s3, %s834
      // Predicated region
      $region33: #{auto_quantized_net_forward.6} parent=31 // pred_check
        %p836 = pneg %p100
      $region34: #{auto_quantized_net_forward.6} parent=31 // pred_check_branch
        %838 = sbr.rel (%p836) target = $region36
      $region35: #{auto_quantized_net_forward.6} parent=31 // pred_region
        _
      $region36: #{auto_quantized_net_forward.6} parent=31 // pred_fallthru
        _
    $region32: #{auto_quantized_net_forward.6} parent=5 // pred_fallthru
      _
    %p839 = scmp.le.s32.totalorder 2, %s9
    // Predicated region
    $region37: #{auto_quantized_net_forward.6} parent=5 // pred_check
      %p840 = pneg %p839
    $region38: #{auto_quantized_net_forward.6} parent=5 // pred_check_branch
      %842 = sbr.rel (%p840) target = $region40
    $region39: #{auto_quantized_net_forward.6} parent=5 // pred_region
      %s843 = ssub.s32 %s9, 2
      // Predicated region
      $region41: #{auto_quantized_net_forward.6} parent=39 // pred_check
        %p844 = pneg %p106
      $region42: #{auto_quantized_net_forward.6} parent=39 // pred_check_branch
        %846 = sbr.rel (%p844) target = $region44
      $region43: #{auto_quantized_net_forward.6} parent=39 // pred_region
        %p847 = scmp.lt.s32.totalorder %s15, 1
        %s848 = scalar_select %p847, %s15, 1
        %s849 = smul.addr %s848, 28
        %s850 = smul.addr %s849, 8
        %s851 = scalar_lea.vmem %s3, %s850
      $region44: #{auto_quantized_net_forward.6} parent=39 // pred_fallthru
        _
    $region40: #{auto_quantized_net_forward.6} parent=5 // pred_fallthru
      _
  $region6: #{auto_quantized_net_forward.6} parent=0 // loop_footer
    %s13 = sadd.s32 1, %s9
  $region7: #{auto_quantized_net_forward.6} parent=0 // loop_footer_branch
    %8 = sbr.rel target = $region3
  $region8: #{auto_quantized_net_forward.6} parent=0 // loop_exit
    _

// kernel: auto_quantized_net_forward.8
$region0: #{auto_quantized_net_forward.8}
  #allocation0 [shape = 'u32[]', space=smem, size = 0x4, offset = 0x4, fixed_abs, tag = 'smem constant byte address 0x4 - core index']
  #allocation1 [shape = 'u32[144,128]{1,0:T(1,128)}', space=vmem, size = 0x12000, scoped, tag = 'internal scratch']
  #allocation2 [shape = 'f32[7,14,32]{2,1,0:T(8,128)}', space=vmem, size = 0xe000, scoped, tag = 'scratch operand']
  %s0 = inlined_call_operand.vmem [shape: f32[2,14,14,32], index: 0, kind: input, shape index: {}]
  %s1 = inlined_call_operand.vmem [shape: f32[1,32], index: 1, kind: input, shape index: {}]
  %s2 = inlined_call_operand.vmem [shape: f32[1,32], index: 2, kind: input, shape index: {}]
  %s3 = inlined_call_operand.vmem [shape: f32[2,7,7,32], index: 3, kind: output, shape index: {}]
  %s4 = sld [smem:[#allocation0]]
  $region45: #{auto_quantized_net_forward.8} parent=0
    _
  %s6 = ssub.s32 1, %s4
  %s7 = scalar_select 0, %s6, %s4
  loop: start=0, step=1, limit=4
  $region2: #{auto_quantized_net_forward.8} parent=0 // loop_pre_header
    _
  $region3: #{auto_quantized_net_forward.8} parent=0 // loop_header
    %s9 = sphi 0, %s13
    %p10 = scmp.ge.s32.totalorder %s9, 4
    %s19 = sphi 0, %s21
    %s22 = sphi 0, %s19
    %s23 = sphi 0, %s22
    %s39 = sphi 0, %s23
    %s43 = sphi 0, %s43
    %s45 = sphi 0, %s43
    %s46 = sphi 0, %s45
    %s60 = sphi 0, %s46
    %s64 = sphi 0, %s64
    %s66 = sphi 0, %s64
    %s67 = sphi 0, %s66
    %s81 = sphi 0, %s67
    %s87 = sphi 0, %s89
    %s90 = sphi 0, %s87
    %s91 = sphi 0, %s90
    %s107 = sphi 0, %s91
  $region4: #{auto_quantized_net_forward.8} parent=0 // loop_header_branch
    %12 = sbr.rel (%p10) target = $region8
  $region5: #{auto_quantized_net_forward.8} parent=0 // loop_body
    %s14 = ssub.s32 %s9, 1
    %s15 = ssub.s32 %s9, 2
    %s16 = sadd.s32 %s9, 1
    %s17 = ssub.s32 %s9, %s16
    %p18 = scmp.eq.s32.totalorder %s17, 0
    %s20 = sadd.s32 %s19, 1
    %s21 = scalar_select %p18, %s19, %s20
    %p24 = pneg %p18
    %p25 = scmp.eq.s32.totalorder %s9, 1
    %p26 = por %p24, %p25
    %p27 = scmp.ne.s32.totalorder %s19, %s22
    %p28 = scmp.eq.s32.totalorder %s9, 0
    %p29 = por %p27, %p28
    %p30 = scmp.ne.s32.totalorder %s19, %s22
    %p31 = scmp.eq.s32.totalorder %s14, 1
    %p32 = por %p30, %p31
    %p33 = scmp.ne.s32.totalorder %s22, %s23
    %p34 = scmp.eq.s32.totalorder %s14, 0
    %p35 = por %p33, %p34
    %p36 = scmp.ne.s32.totalorder %s22, %s23
    %p37 = scmp.eq.s32.totalorder %s15, 1
    %p38 = por %p36, %p37
    %p40 = scmp.ne.s32.totalorder %s23, %s39
    %p41 = scmp.eq.s32.totalorder %s15, 0
    %p42 = por %p40, %p41
    %s44 = sadd.s32 %s43, 1
    %p47 = scmp.eq.s32.totalorder %s9, 1
    %p48 = scmp.ne.s32.totalorder %s43, %s45
    %p49 = scmp.eq.s32.totalorder %s9, 0
    %p50 = por %p48, %p49
    %p51 = scmp.ne.s32.totalorder %s43, %s45
    %p52 = scmp.eq.s32.totalorder %s14, 1
    %p53 = por %p51, %p52
    %p54 = scmp.ne.s32.totalorder %s45, %s46
    %p55 = scmp.eq.s32.totalorder %s14, 0
    %p56 = por %p54, %p55
    %p57 = scmp.ne.s32.totalorder %s45, %s46
    %p58 = scmp.eq.s32.totalorder %s15, 1
    %p59 = por %p57, %p58
    %p61 = scmp.ne.s32.totalorder %s46, %s60
    %p62 = scmp.eq.s32.totalorder %s15, 0
    %p63 = por %p61, %p62
    %s65 = sadd.s32 %s64, 1
    %p68 = scmp.eq.s32.totalorder %s9, 1
    %p69 = scmp.ne.s32.totalorder %s64, %s66
    %p70 = scmp.eq.s32.totalorder %s9, 0
    %p71 = por %p69, %p70
    %p72 = scmp.ne.s32.totalorder %s64, %s66
    %p73 = scmp.eq.s32.totalorder %s14, 1
    %p74 = por %p72, %p73
    %p75 = scmp.ne.s32.totalorder %s66, %s67
    %p76 = scmp.eq.s32.totalorder %s14, 0
    %p77 = por %p75, %p76
    %p78 = scmp.ne.s32.totalorder %s66, %s67
    %p79 = scmp.eq.s32.totalorder %s15, 1
    %p80 = por %p78, %p79
    %p82 = scmp.ne.s32.totalorder %s67, %s81
    %p83 = scmp.eq.s32.totalorder %s15, 0
    %p84 = por %p82, %p83
    %s85 = ssub.s32 %s9, %s16
    %p86 = scmp.eq.s32.totalorder %s85, 0
    %s88 = sadd.s32 %s87, 1
    %s89 = scalar_select %p86, %s87, %s88
    %p92 = pneg %p86
    %p93 = scmp.eq.s32.totalorder %s9, 1
    %p94 = por %p92, %p93
    %p95 = scmp.ne.s32.totalorder %s87, %s90
    %p96 = scmp.eq.s32.totalorder %s9, 0
    %p97 = por %p95, %p96
    %p98 = scmp.ne.s32.totalorder %s87, %s90
    %p99 = scmp.eq.s32.totalorder %s14, 1
    %p100 = por %p98, %p99
    %p101 = scmp.ne.s32.totalorder %s90, %s91
    %p102 = scmp.eq.s32.totalorder %s14, 0
    %p103 = por %p101, %p102
    %p104 = scmp.ne.s32.totalorder %s90, %s91
    %p105 = scmp.eq.s32.totalorder %s15, 1
    %p106 = por %p104, %p105
    %p108 = scmp.ne.s32.totalorder %s91, %s107
    %p109 = scmp.eq.s32.totalorder %s15, 0
    %p110 = por %p108, %p109
    %p111 = scmp.le.s32.totalorder 1, %s9
    %p112 = scmp.lt.s32.totalorder %s9, 3
    %p113 = pnand %p111, %p112
    %p114 = pneg %p113
    // Predicated region
    $region9: #{auto_quantized_net_forward.8} parent=5 // pred_check
      _
    $region10: #{auto_quantized_net_forward.8} parent=5 // pred_check_branch
      %116 = sbr.rel (%p113) target = $region12
    $region11: #{auto_quantized_net_forward.8} parent=5 // pred_region
      %s117 = ssub.s32 %s9, 1
      // Predicated region
      $region13: #{auto_quantized_net_forward.8} parent=11 // pred_check
        %p118 = pneg %p56
      $region14: #{auto_quantized_net_forward.8} parent=11 // pred_check_branch
        %120 = sbr.rel (%p118) target = $region16
      $region15: #{auto_quantized_net_forward.8} parent=11 // pred_region
        _
      $region16: #{auto_quantized_net_forward.8} parent=11 // pred_fallthru
        _
      // Predicated region
      $region17: #{auto_quantized_net_forward.8} parent=11 // pred_check
        %p121 = pneg %p77
      $region18: #{auto_quantized_net_forward.8} parent=11 // pred_check_branch
        %123 = sbr.rel (%p121) target = $region20
      $region19: #{auto_quantized_net_forward.8} parent=11 // pred_region
        _
      $region20: #{auto_quantized_net_forward.8} parent=11 // pred_fallthru
        _
    $region12: #{auto_quantized_net_forward.8} parent=5 // pred_fallthru
      _
    %p124 = scmp.lt.s32.totalorder %s9, 2
    // Predicated region
    $region21: #{auto_quantized_net_forward.8} parent=5 // pred_check
      %p125 = pneg %p124
    $region22: #{auto_quantized_net_forward.8} parent=5 // pred_check_branch
      %127 = sbr.rel (%p125) target = $region24
    $region23: #{auto_quantized_net_forward.8} parent=5 // pred_region
      // Predicated region
      $region25: #{auto_quantized_net_forward.8} parent=23 // pred_check
        %p128 = pneg %p29
      $region26: #{auto_quantized_net_forward.8} parent=23 // pred_check_branch
        %130 = sbr.rel (%p128) target = $region28
      $region27: #{auto_quantized_net_forward.8} parent=23 // pred_region
        %p131 = scmp.lt.s32.totalorder %s9, 1
        %s132 = scalar_select %p131, %s9, 1
        %s133 = smul.addr %s132, 28
        %s134 = smul.addr %s133, 8
        %s135 = scalar_lea.vmem %s0, %s134
      $region28: #{auto_quantized_net_forward.8} parent=23 // pred_fallthru
        _
    $region24: #{auto_quantized_net_forward.8} parent=5 // pred_fallthru
      _
    %p136 = scmp.le.s32.totalorder 1, %s9
    %p137 = scmp.lt.s32.totalorder %s9, 3
    %p138 = pnand %p136, %p137
    %p139 = pneg %p138
    // Predicated region
    $region29: #{auto_quantized_net_forward.8} parent=5 // pred_check
      _
    $region30: #{auto_quantized_net_forward.8} parent=5 // pred_check_branch
      %141 = sbr.rel (%p138) target = $region32
    $region31: #{auto_quantized_net_forward.8} parent=5 // pred_region
      %s142 = ssub.s32 %s9, 1
      %p143 = scmp.lt.s32.totalorder %s14, 1
      %s144 = scalar_select %p143, %s14, 1
      %s145 = smul.addr %s144, 28
      %s146 = smul.addr %s145, 8
      %s147 = scalar_lea.vmem %s0, %s146
      %p148 = pneg %p35
      %p149 = pneg %p32
      %p150 = pneg %p56
      %p151 = pneg %p53
      %p152 = pneg %p77
      %p153 = pneg %p74
      %p154 = pneg %p103
      %p155 = pneg %p100
      %p156 = scmp.lt.s32.totalorder %s14, 1
      %s157 = scalar_select %p156, %s14, 1
      %s158 = smul.addr %s157, 7
      %s159 = smul.addr %s158, 8
      %s160 = scalar_lea.vmem %s3, %s159
      %p161 = scmp.lt.s32.totalorder %s14, 1
      %s162 = scalar_select %p161, %s14, 1
      %s163 = smul.addr %s162, 28
      %s164 = smul.addr %s163, 8
      %s165 = scalar_lea.vmem %s0, %s164
      %p166 = scmp.lt.s32.totalorder %s14, 1
      %s167 = scalar_select %p166, %s14, 1
      %s168 = smul.addr %s167, 7
      %s169 = smul.addr %s168, 8
      %s170 = scalar_lea.vmem %s3, %s169
      %v171 = vld [vmem:[%s1] sm:$0x1]
      %v172 = vld [vmem:[%s2] sm:$0x1]
      %v173 = vld [vmem:[%s165] sm:$0xff]
      %v174 = vld [vmem:[%s165 + $0x8] sm:$0x3f]
      %v175 = vld [vmem:[%s165 + $0x10] sm:$0xff]
      %v176 = vld [vmem:[%s165 + $0x18] sm:$0x3f]
      %v177 = vld [vmem:[%s165 + $0x20] sm:$0xff]
      %v178 = vld [vmem:[%s165 + $0x28] sm:$0x3f]
      %v179 = vld [vmem:[%s165 + $0x30] sm:$0xff]
      %v180 = vld [vmem:[%s165 + $0x38] sm:$0x3f]
      %v181 = vld [vmem:[%s165 + $0x40] sm:$0xff]
      %v182 = vld [vmem:[%s165 + $0x48] sm:$0x3f]
      %v183 = vld [vmem:[%s165 + $0x50] sm:$0xff]
      %v184 = vld [vmem:[%s165 + $0x58] sm:$0x3f]
      %v185 = vld [vmem:[%s165 + $0x60] sm:$0xff]
      %v186 = vld [vmem:[%s165 + $0x68] sm:$0x3f]
      %v187 = vld [vmem:[%s165 + $0x70] sm:$0xff]
      %v188 = vld [vmem:[%s165 + $0x78] sm:$0x3f]
      %v189 = vld [vmem:[%s165 + $0x80] sm:$0xff]
      %v190 = vld [vmem:[%s165 + $0x88] sm:$0x3f]
      %v191 = vld [vmem:[%s165 + $0x90] sm:$0xff]
      %v192 = vld [vmem:[%s165 + $0x98] sm:$0x3f]
      %v193 = vld [vmem:[%s165 + $0xa0] sm:$0xff]
      %v194 = vld [vmem:[%s165 + $0xa8] sm:$0x3f]
      %v195 = vld [vmem:[%s165 + $0xb0] sm:$0xff]
      %v196 = vld [vmem:[%s165 + $0xb8] sm:$0x3f]
      %v197 = vld [vmem:[%s165 + $0xc0] sm:$0xff]
      %v198 = vld [vmem:[%s165 + $0xc8] sm:$0x3f]
      %v199 = vld [vmem:[%s165 + $0xd0] sm:$0xff]
      %v200 = vld [vmem:[%s165 + $0xd8] sm:$0x3f]
      %v202 = vlaneseq
      %v203 = vshrl.u32 %v202, 7
      %v204 = vsub.s32 0, %v203
      %v205 = vrot.slane %v171, %v204
      %v207 = vmul.f32 %v173, %v205
      %v208 = vmul.f32 %v174, %v205
      %v209 = vmul.f32 %v177, %v205
      %v210 = vmul.f32 %v178, %v205
      %v211 = vmul.f32 %v181, %v205
      %v212 = vmul.f32 %v182, %v205
      %v213 = vmul.f32 %v185, %v205
      %v214 = vmul.f32 %v186, %v205
      %v215 = vmul.f32 %v189, %v205
      %v216 = vmul.f32 %v190, %v205
      %v217 = vmul.f32 %v193, %v205
      %v218 = vmul.f32 %v194, %v205
      %v219 = vmul.f32 %v197, %v205
      %v220 = vmul.f32 %v198, %v205
      %v222 = vlaneseq
      %v223 = vshrl.u32 %v222, 7
      %v224 = vsub.s32 0, %v223
      %v225 = vrot.slane %v172, %v224
      %v227 = vadd.f32 %v207, %v225
      %v228 = vadd.f32 %v208, %v225
      %v229 = vadd.f32 %v209, %v225
      %v230 = vadd.f32 %v210, %v225
      %v231 = vadd.f32 %v211, %v225
      %v232 = vadd.f32 %v212, %v225
      %v233 = vadd.f32 %v213, %v225
      %v234 = vadd.f32 %v214, %v225
      %v235 = vadd.f32 %v215, %v225
      %v236 = vadd.f32 %v216, %v225
      %v237 = vadd.f32 %v217, %v225
      %v238 = vadd.f32 %v218, %v225
      %v239 = vadd.f32 %v219, %v225
      %v240 = vadd.f32 %v220, %v225
      %v241 = vmul.f32 %v175, %v205
      %v242 = vmul.f32 %v176, %v205
      %v243 = vmul.f32 %v179, %v205
      %v244 = vmul.f32 %v180, %v205
      %v245 = vmul.f32 %v183, %v205
      %v246 = vmul.f32 %v184, %v205
      %v247 = vmul.f32 %v187, %v205
      %v248 = vmul.f32 %v188, %v205
      %v249 = vmul.f32 %v191, %v205
      %v250 = vmul.f32 %v192, %v205
      %v251 = vmul.f32 %v195, %v205
      %v252 = vmul.f32 %v196, %v205
      %v253 = vmul.f32 %v199, %v205
      %v254 = vmul.f32 %v200, %v205
      %v255 = vadd.f32 %v241, %v225
      %v256 = vadd.f32 %v242, %v225
      %v257 = vadd.f32 %v243, %v225
      %v258 = vadd.f32 %v244, %v225
      %v259 = vadd.f32 %v245, %v225
      %v260 = vadd.f32 %v246, %v225
      %v261 = vadd.f32 %v247, %v225
      %v262 = vadd.f32 %v248, %v225
      %v263 = vadd.f32 %v249, %v225
      %v264 = vadd.f32 %v250, %v225
      %v265 = vadd.f32 %v251, %v225
      %v266 = vadd.f32 %v252, %v225
      %v267 = vadd.f32 %v253, %v225
      %v268 = vadd.f32 %v254, %v225
      %v269 = vmax.f32 %v227, %v255
      %v270 = vmax.f32 %v228, %v256
      %v271 = vmax.f32 %v229, %v257
      %v272 = vmax.f32 %v230, %v258
      %v273 = vmax.f32 %v231, %v259
      %v274 = vmax.f32 %v232, %v260
      %v275 = vmax.f32 %v233, %v261
      %v276 = vmax.f32 %v234, %v262
      %v277 = vmax.f32 %v235, %v263
      %v278 = vmax.f32 %v236, %v264
      %v279 = vmax.f32 %v237, %v265
      %v280 = vmax.f32 %v238, %v266
      %v281 = vmax.f32 %v239, %v267
      %v282 = vmax.f32 %v240, %v268
      %vm283 = vcmask 261120
      %284 = vst.msk [vmem:[#allocation2] sm:$0xff] %vm283, %v269
      %vm285 = vcmask 259072
      %286 = vst.msk [vmem:[#allocation2 + $0x8] sm:$0x3f] %vm285, %v270
      %287 = vst.msk [vmem:[#allocation2 + $0x10] sm:$0xff] %vm283, %v271
      %288 = vst.msk [vmem:[#allocation2 + $0x18] sm:$0x3f] %vm285, %v272
      %289 = vst.msk [vmem:[#allocation2 + $0x20] sm:$0xff] %vm283, %v273
      %290 = vst.msk [vmem:[#allocation2 + $0x28] sm:$0x3f] %vm285, %v274
      %291 = vst.msk [vmem:[#allocation2 + $0x30] sm:$0xff] %vm283, %v275
      %292 = vst.msk [vmem:[#allocation2 + $0x38] sm:$0x3f] %vm285, %v276
      %293 = vst.msk [vmem:[#allocation2 + $0x40] sm:$0xff] %vm283, %v277
      %294 = vst.msk [vmem:[#allocation2 + $0x48] sm:$0x3f] %vm285, %v278
      %295 = vst.msk [vmem:[#allocation2 + $0x50] sm:$0xff] %vm283, %v279
      %296 = vst.msk [vmem:[#allocation2 + $0x58] sm:$0x3f] %vm285, %v280
      %297 = vst.msk [vmem:[#allocation2 + $0x60] sm:$0xff] %vm283, %v281
      %298 = vst.msk [vmem:[#allocation2 + $0x68] sm:$0x3f] %vm285, %v282
      %v299 = vld [vmem:[#allocation2] ss:$2 sm:$0x7f]
      %s300 = scalar_lea.vmem [#allocation2], 16
      %v301 = vld [vmem:[%s300] ss:$2 sm:$0x7f]
      %s302 = scalar_lea.vmem [#allocation2], 32
      %v303 = vld [vmem:[%s302] ss:$2 sm:$0x7f]
      %s304 = scalar_lea.vmem [#allocation2], 48
      %v305 = vld [vmem:[%s304] ss:$2 sm:$0x7f]
      %s306 = scalar_lea.vmem [#allocation2], 64
      %v307 = vld [vmem:[%s306] ss:$2 sm:$0x7f]
      %s308 = scalar_lea.vmem [#allocation2], 80
      %v309 = vld [vmem:[%s308] ss:$2 sm:$0x7f]
      %s310 = scalar_lea.vmem [#allocation2], 96
      %v311 = vld [vmem:[%s310] ss:$2 sm:$0x7f]
      %s312 = scalar_lea.vmem [#allocation2], 1
      %v313 = vld [vmem:[%s312] ss:$2 sm:$0x7f]
      %s314 = scalar_lea.vmem [#allocation2], 17
      %v315 = vld [vmem:[%s314] ss:$2 sm:$0x7f]
      %s316 = scalar_lea.vmem [#allocation2], 33
      %v317 = vld [vmem:[%s316] ss:$2 sm:$0x7f]
      %s318 = scalar_lea.vmem [#allocation2], 49
      %v319 = vld [vmem:[%s318] ss:$2 sm:$0x7f]
      %s320 = scalar_lea.vmem [#allocation2], 65
      %v321 = vld [vmem:[%s320] ss:$2 sm:$0x7f]
      %s322 = scalar_lea.vmem [#allocation2], 81
      %v323 = vld [vmem:[%s322] ss:$2 sm:$0x7f]
      %s324 = scalar_lea.vmem [#allocation2], 97
      %v325 = vld [vmem:[%s324] ss:$2 sm:$0x7f]
      %v326 = vmax.f32 %v299, %v313
      %v327 = vmax.f32 %v301, %v315
      %v328 = vmax.f32 %v303, %v317
      %v329 = vmax.f32 %v305, %v319
      %v330 = vmax.f32 %v307, %v321
      %v331 = vmax.f32 %v309, %v323
      %v332 = vmax.f32 %v311, %v325
      %v333 = vmax.f32 %v326, 0.0
      %v334 = vmax.f32 %v327, 0.0
      %v335 = vmax.f32 %v328, 0.0
      %v336 = vmax.f32 %v329, 0.0
      %v337 = vmax.f32 %v330, 0.0
      %v338 = vmax.f32 %v331, 0.0
      %v339 = vmax.f32 %v332, 0.0
      %vm340 = vcmask 260096
      %341 = vst.msk [vmem:[%s170] sm:$0x7f] %vm340, %v333
      %342 = vst.msk [vmem:[%s170 + $0x8] sm:$0x7f] %vm340, %v334
      %343 = vst.msk [vmem:[%s170 + $0x10] sm:$0x7f] %vm340, %v335
      %344 = vst.msk [vmem:[%s170 + $0x18] sm:$0x7f] %vm340, %v336
      %345 = vst.msk [vmem:[%s170 + $0x20] sm:$0x7f] %vm340, %v337
      %346 = vst.msk [vmem:[%s170 + $0x28] sm:$0x7f] %vm340, %v338
      %347 = vst.msk [vmem:[%s170 + $0x30] sm:$0x7f] %vm340, %v339
      %p348 = scmp.lt.s32.totalorder %s14, 1
      %s349 = scalar_select %p348, %s14, 1
      %s350 = smul.addr %s349, 7
      %s351 = smul.addr %s350, 8
      %s352 = scalar_lea.vmem %s3, %s351
      // Predicated region
      $region33: #{auto_quantized_net_forward.8} parent=31 // pred_check
        %p353 = pneg %p100
      $region34: #{auto_quantized_net_forward.8} parent=31 // pred_check_branch
        %355 = sbr.rel (%p353) target = $region36
      $region35: #{auto_quantized_net_forward.8} parent=31 // pred_region
        _
      $region36: #{auto_quantized_net_forward.8} parent=31 // pred_fallthru
        _
    $region32: #{auto_quantized_net_forward.8} parent=5 // pred_fallthru
      _
    %p356 = scmp.le.s32.totalorder 2, %s9
    // Predicated region
    $region37: #{auto_quantized_net_forward.8} parent=5 // pred_check
      %p357 = pneg %p356
    $region38: #{auto_quantized_net_forward.8} parent=5 // pred_check_branch
      %359 = sbr.rel (%p357) target = $region40
    $region39: #{auto_quantized_net_forward.8} parent=5 // pred_region
      %s360 = ssub.s32 %s9, 2
      // Predicated region
      $region41: #{auto_quantized_net_forward.8} parent=39 // pred_check
        %p361 = pneg %p106
      $region42: #{auto_quantized_net_forward.8} parent=39 // pred_check_branch
        %363 = sbr.rel (%p361) target = $region44
      $region43: #{auto_quantized_net_forward.8} parent=39 // pred_region
        %p364 = scmp.lt.s32.totalorder %s15, 1
        %s365 = scalar_select %p364, %s15, 1
        %s366 = smul.addr %s365, 7
        %s367 = smul.addr %s366, 8
        %s368 = scalar_lea.vmem %s3, %s367
      $region44: #{auto_quantized_net_forward.8} parent=39 // pred_fallthru
        _
    $region40: #{auto_quantized_net_forward.8} parent=5 // pred_fallthru
      _
  $region6: #{auto_quantized_net_forward.8} parent=0 // loop_footer
    %s13 = sadd.s32 1, %s9
  $region7: #{auto_quantized_net_forward.8} parent=0 // loop_footer_branch
    %8 = sbr.rel target = $region3
  $region8: #{auto_quantized_net_forward.8} parent=0 // loop_exit
    _

// kernel: auto_quantized_net_forward.7
$region0: #{auto_quantized_net_forward.7}
  #allocation0 [shape = 'u32[]', space=smem, size = 0x4, offset = 0x4, fixed_abs, tag = 'smem constant byte address 0x4 - core index']
  #allocation1 [shape = 'u32[144,128]{1,0:T(1,128)}', space=vmem, size = 0x12000, scoped, tag = 'internal scratch']
  %s0 = inlined_call_operand.vmem [shape: bf16[392,400], index: 0, kind: input, shape index: {}]
  %s1 = inlined_call_operand.vmem [shape: bf16[400,32], index: 1, kind: input, shape index: {}]
  %s2 = inlined_call_operand.vmem [shape: f32[392,32], index: 2, kind: output, shape index: {0}]
  %s3 = inlined_call_operand.vmem [shape: f32[1,32], index: 3, kind: output, shape index: {1}]
  %s4 = inlined_call_operand.vmem [shape: f32[1,32], index: 4, kind: output, shape index: {2}]
  %5 = xla_tuple %s2, %s3, %s4
  %s6 = sld [smem:[#allocation0]]
  $region38: #{auto_quantized_net_forward.7} parent=0
    _
  %s8 = ssub.s32 1, %s6
  %s9 = scalar_select 0, %s8, %s6
  // Predicated region
  $region2: #{auto_quantized_net_forward.7} parent=0 // pred_check
    _
  $region3: #{auto_quantized_net_forward.7} parent=0 // pred_check_branch
    %11 = sbr.rel (0) target = $region5
  $region4: #{auto_quantized_net_forward.7} parent=0 // pred_region
    _
  $region5: #{auto_quantized_net_forward.7} parent=0 // pred_fallthru
    _
  // Predicated region
  $region6: #{auto_quantized_net_forward.7} parent=0 // pred_check
    _
  $region7: #{auto_quantized_net_forward.7} parent=0 // pred_check_branch
    %13 = sbr.rel (0) target = $region9
  $region8: #{auto_quantized_net_forward.7} parent=0 // pred_region
    _
  $region9: #{auto_quantized_net_forward.7} parent=0 // pred_fallthru
    _
  %v15 = vld [vmem:[%s0] sm:$0xff]
  %v16 = vld [vmem:[%s0 + $0x8] sm:$0xff]
  %v17 = vld [vmem:[%s0 + $0x10] sm:$0xff]
  %v18 = vld [vmem:[%s0 + $0x18] sm:$0xff]
  %v19 = vld [vmem:[%s0 + $0x20] sm:$0xff]
  %v20 = vld [vmem:[%s0 + $0x28] sm:$0xff]
  %v21 = vld [vmem:[%s0 + $0x30] sm:$0xff]
  %v22 = vld [vmem:[%s0 + $0x38] sm:$0xff]
  %v23 = vld [vmem:[%s0 + $0x40] sm:$0xff]
  %v24 = vld [vmem:[%s0 + $0x48] sm:$0xff]
  %v25 = vld [vmem:[%s0 + $0x50] sm:$0xff]
  %v26 = vld [vmem:[%s0 + $0x58] sm:$0xff]
  %v27 = vld [vmem:[%s0 + $0x60] sm:$0xff]
  %v28 = vld [vmem:[%s0 + $0x68] sm:$0xff]
  %v29 = vld [vmem:[%s0 + $0x70] sm:$0xff]
  %v30 = vld [vmem:[%s0 + $0x78] sm:$0xff]
  %v31 = vld [vmem:[%s0 + $0x80] sm:$0xff]
  %v32 = vld [vmem:[%s0 + $0x88] sm:$0xff]
  %v33 = vld [vmem:[%s0 + $0x90] sm:$0xff]
  %v34 = vld [vmem:[%s0 + $0x98] sm:$0xff]
  %v35 = vld [vmem:[%s0 + $0xa0] sm:$0xff]
  %v36 = vld [vmem:[%s0 + $0xa8] sm:$0xff]
  %v37 = vld [vmem:[%s0 + $0xb0] sm:$0xff]
  %v38 = vld [vmem:[%s0 + $0xb8] sm:$0xff]
  %v39 = vld [vmem:[%s0 + $0xc0] sm:$0xff]
  %v40 = vld [vmem:[%s0 + $0xc8] sm:$0xff]
  %v41 = vld [vmem:[%s0 + $0xd0] sm:$0xff]
  %v42 = vld [vmem:[%s0 + $0xd8] sm:$0xff]
  %v43 = vld [vmem:[%s0 + $0xe0] sm:$0xff]
  %v44 = vld [vmem:[%s0 + $0xe8] sm:$0xff]
  %v45 = vld [vmem:[%s0 + $0xf0] sm:$0xff]
  %v46 = vld [vmem:[%s0 + $0xf8] sm:$0xff]
  %v47 = vld [vmem:[%s0 + $0x100] sm:$0xff]
  %v48 = vld [vmem:[%s0 + $0x108] sm:$0xff]
  %v49 = vld [vmem:[%s0 + $0x110] sm:$0xff]
  %v50 = vld [vmem:[%s0 + $0x118] sm:$0xff]
  %v51 = vld [vmem:[%s0 + $0x120] sm:$0xff]
  %v52 = vld [vmem:[%s0 + $0x128] sm:$0xff]
  %v53 = vld [vmem:[%s0 + $0x130] sm:$0xff]
  %v54 = vld [vmem:[%s0 + $0x138] sm:$0xff]
  %v55 = vld [vmem:[%s0 + $0x140] sm:$0xff]
  %v56 = vld [vmem:[%s0 + $0x148] sm:$0xff]
  %v57 = vld [vmem:[%s0 + $0x150] sm:$0xff]
  %v58 = vld [vmem:[%s0 + $0x158] sm:$0xff]
  %v59 = vld [vmem:[%s0 + $0x160] sm:$0xff]
  %v60 = vld [vmem:[%s0 + $0x168] sm:$0xff]
  %v61 = vld [vmem:[%s0 + $0x170] sm:$0xff]
  %v62 = vld [vmem:[%s0 + $0x178] sm:$0xff]
  %v63 = vld [vmem:[%s0 + $0x180] sm:$0xff]
  %v64 = vld [vmem:[%s0 + $0x188] sm:$0xff]
  %v65 = vld [vmem:[%s0 + $0x190] sm:$0xff]
  %v66 = vld [vmem:[%s0 + $0x198] sm:$0xff]
  %v67 = vld [vmem:[%s0 + $0x1a0] sm:$0xff]
  %v68 = vld [vmem:[%s0 + $0x1a8] sm:$0xff]
  %v69 = vld [vmem:[%s0 + $0x1b0] sm:$0xff]
  %v70 = vld [vmem:[%s0 + $0x1b8] sm:$0xff]
  %v71 = vld [vmem:[%s0 + $0x1c0] sm:$0xff]
  %v72 = vld [vmem:[%s0 + $0x1c8] sm:$0xff]
  %v73 = vld [vmem:[%s0 + $0x1d0] sm:$0xff]
  %v74 = vld [vmem:[%s0 + $0x1d8] sm:$0xff]
  %v75 = vld [vmem:[%s0 + $0x1e0] sm:$0xff]
  %v76 = vld [vmem:[%s0 + $0x1e8] sm:$0xff]
  %v77 = vld [vmem:[%s0 + $0x1f0] sm:$0xff]
  %v78 = vld [vmem:[%s0 + $0x1f8] sm:$0xff]
  %v79 = vld [vmem:[%s0 + $0x200] sm:$0xff]
  %v80 = vld [vmem:[%s0 + $0x208] sm:$0xff]
  %v81 = vld [vmem:[%s0 + $0x210] sm:$0xff]
  %v82 = vld [vmem:[%s0 + $0x218] sm:$0xff]
  %v83 = vld [vmem:[%s0 + $0x220] sm:$0xff]
  %v84 = vld [vmem:[%s0 + $0x228] sm:$0xff]
  %v85 = vld [vmem:[%s0 + $0x230] sm:$0xff]
  %v86 = vld [vmem:[%s0 + $0x238] sm:$0xff]
  %v87 = vld [vmem:[%s0 + $0x240] sm:$0xff]
  %v88 = vld [vmem:[%s0 + $0x248] sm:$0xff]
  %v89 = vld [vmem:[%s0 + $0x250] sm:$0xff]
  %v90 = vld [vmem:[%s0 + $0x258] sm:$0xff]
  %v91 = vld [vmem:[%s0 + $0x260] sm:$0xff]
  %v92 = vld [vmem:[%s0 + $0x268] sm:$0xff]
  %v93 = vld [vmem:[%s0 + $0x270] sm:$0xff]
  %v94 = vld [vmem:[%s0 + $0x278] sm:$0xff]
  %v95 = vld [vmem:[%s0 + $0x280] sm:$0xff]
  %v96 = vld [vmem:[%s0 + $0x288] sm:$0xff]
  %v97 = vld [vmem:[%s0 + $0x290] sm:$0xff]
  %v98 = vld [vmem:[%s0 + $0x298] sm:$0xff]
  %v99 = vld [vmem:[%s0 + $0x2a0] sm:$0xff]
  %v100 = vld [vmem:[%s0 + $0x2a8] sm:$0xff]
  %v101 = vld [vmem:[%s0 + $0x2b0] sm:$0xff]
  %v102 = vld [vmem:[%s0 + $0x2b8] sm:$0xff]
  %v103 = vld [vmem:[%s0 + $0x2c0] sm:$0xff]
  %v104 = vld [vmem:[%s0 + $0x2c8] sm:$0xff]
  %v105 = vld [vmem:[%s0 + $0x2d0] sm:$0xff]
  %v106 = vld [vmem:[%s0 + $0x2d8] sm:$0xff]
  %v107 = vld [vmem:[%s0 + $0x2e0] sm:$0xff]
  %v108 = vld [vmem:[%s0 + $0x2e8] sm:$0xff]
  %v109 = vld [vmem:[%s0 + $0x2f0] sm:$0xff]
  %v110 = vld [vmem:[%s0 + $0x2f8] sm:$0xff]
  %v111 = vld [vmem:[%s0 + $0x300] sm:$0xff]
  %v112 = vld [vmem:[%s0 + $0x308] sm:$0xff]
  %v113 = vld [vmem:[%s1] sm:$0xf]
  %v114 = vld [vmem:[%s1 + $0x4] sm:$0xf]
  %v115 = vld [vmem:[%s1 + $0x8] sm:$0xf]
  %v116 = vld [vmem:[%s1 + $0xc] sm:$0xf]
  %v117 = vld [vmem:[%s1 + $0x10] sm:$0xf]
  %v118 = vld [vmem:[%s1 + $0x14] sm:$0xf]
  %v119 = vld [vmem:[%s1 + $0x18] sm:$0xf]
  %v120 = vld [vmem:[%s1 + $0x1c] sm:$0xf]
  %v121 = vld [vmem:[%s1 + $0x20] sm:$0xf]
  %v122 = vld [vmem:[%s1 + $0x24] sm:$0xf]
  %v123 = vld [vmem:[%s1 + $0x28] sm:$0xf]
  %v124 = vld [vmem:[%s1 + $0x2c] sm:$0xf]
  %v125 = vld [vmem:[%s1 + $0x30] sm:$0xf]
  %v126 = vld [vmem:[%s1 + $0x34] sm:$0xf]
  %v127 = vld [vmem:[%s1 + $0x38] sm:$0xf]
  %v128 = vld [vmem:[%s1 + $0x3c] sm:$0xf]
  %v129 = vld [vmem:[%s1 + $0x40] sm:$0xf]
  %v130 = vld [vmem:[%s1 + $0x44] sm:$0xf]
  %v131 = vld [vmem:[%s1 + $0x48] sm:$0xf]
  %v132 = vld [vmem:[%s1 + $0x4c] sm:$0xf]
  %v133 = vld [vmem:[%s1 + $0x50] sm:$0xf]
  %v134 = vld [vmem:[%s1 + $0x54] sm:$0xf]
  %v135 = vld [vmem:[%s1 + $0x58] sm:$0xf]
  %v136 = vld [vmem:[%s1 + $0x5c] sm:$0xf]
  %v137 = vld [vmem:[%s1 + $0x60] sm:$0xf]
  %v138 = vld [vmem:[%s1 + $0x64] sm:$0xf]
  %v139 = vld [vmem:[%s1 + $0x68] sm:$0xf]
  %v140 = vld [vmem:[%s1 + $0x6c] sm:$0xf]
  %v141 = vld [vmem:[%s1 + $0x70] sm:$0xf]
  %v142 = vld [vmem:[%s1 + $0x74] sm:$0xf]
  %v143 = vld [vmem:[%s1 + $0x78] sm:$0xf]
  %v144 = vld [vmem:[%s1 + $0x7c] sm:$0xf]
  %v145 = vld [vmem:[%s1 + $0x80] sm:$0xf]
  %v146 = vld [vmem:[%s1 + $0x84] sm:$0xf]
  %v147 = vld [vmem:[%s1 + $0x88] sm:$0xf]
  %v148 = vld [vmem:[%s1 + $0x8c] sm:$0xf]
  %v149 = vld [vmem:[%s1 + $0x90] sm:$0xf]
  %v150 = vld [vmem:[%s1 + $0x94] sm:$0xf]
  %v151 = vld [vmem:[%s1 + $0x98] sm:$0xf]
  %v152 = vld [vmem:[%s1 + $0x9c] sm:$0xf]
  %v153 = vld [vmem:[%s1 + $0xa0] sm:$0xf]
  %v154 = vld [vmem:[%s1 + $0xa4] sm:$0xf]
  %v155 = vld [vmem:[%s1 + $0xa8] sm:$0xf]
  %v156 = vld [vmem:[%s1 + $0xac] sm:$0xf]
  %v157 = vld [vmem:[%s1 + $0xb0] sm:$0xf]
  %v158 = vld [vmem:[%s1 + $0xb4] sm:$0xf]
  %v159 = vld [vmem:[%s1 + $0xb8] sm:$0xf]
  %v160 = vld [vmem:[%s1 + $0xbc] sm:$0xf]
  %v161 = vld [vmem:[%s1 + $0xc0] sm:$0xf]
  %v162 = vld [vmem:[%s1 + $0xc4] sm:$0xf]
  %v261 = vunpack.c.l.b16 %v15
  %v262 = vunpack.c.h.b16 %v15
  %v263 = vunpack.c.l.b16 %v16
  %v264 = vunpack.c.h.b16 %v16
  %v265 = vunpack.c.l.b16 %v17
  %v266 = vunpack.c.h.b16 %v17
  %v267 = vunpack.c.l.b16 %v18
  %v268 = vunpack.c.h.b16 %v18
  %v269 = vunpack.c.l.b16 %v19
  %v270 = vunpack.c.h.b16 %v19
  %v271 = vunpack.c.l.b16 %v20
  %v272 = vunpack.c.h.b16 %v20
  %v273 = vunpack.c.l.b16 %v21
  %v274 = vunpack.c.h.b16 %v21
  %v275 = vunpack.c.l.b16 %v22
  %v276 = vunpack.c.h.b16 %v22
  %v277 = vunpack.c.l.b16 %v23
  %v278 = vunpack.c.h.b16 %v23
  %v279 = vunpack.c.l.b16 %v24
  %v280 = vunpack.c.h.b16 %v24
  %v281 = vunpack.c.l.b16 %v25
  %v282 = vunpack.c.h.b16 %v25
  %v283 = vunpack.c.l.b16 %v26
  %v284 = vunpack.c.h.b16 %v26
  %v285 = vunpack.c.l.b16 %v27
  %v286 = vunpack.c.h.b16 %v27
  %v287 = vunpack.c.l.b16 %v28
  %v288 = vunpack.c.h.b16 %v28
  %v289 = vunpack.c.l.b16 %v29
  %v290 = vunpack.c.h.b16 %v29
  %v291 = vunpack.c.l.b16 %v30
  %v292 = vunpack.c.h.b16 %v30
  %v293 = vunpack.c.l.b16 %v31
  %v294 = vunpack.c.h.b16 %v31
  %v295 = vunpack.c.l.b16 %v32
  %v296 = vunpack.c.h.b16 %v32
  %v297 = vunpack.c.l.b16 %v33
  %v298 = vunpack.c.h.b16 %v33
  %v299 = vunpack.c.l.b16 %v34
  %v300 = vunpack.c.h.b16 %v34
  %v301 = vunpack.c.l.b16 %v35
  %v302 = vunpack.c.h.b16 %v35
  %v303 = vunpack.c.l.b16 %v36
  %v304 = vunpack.c.h.b16 %v36
  %v305 = vunpack.c.l.b16 %v37
  %v306 = vunpack.c.h.b16 %v37
  %v307 = vunpack.c.l.b16 %v38
  %v308 = vunpack.c.h.b16 %v38
  %v309 = vunpack.c.l.b16 %v39
  %v310 = vunpack.c.h.b16 %v39
  %v311 = vunpack.c.l.b16 %v40
  %v312 = vunpack.c.h.b16 %v40
  %v313 = vunpack.c.l.b16 %v41
  %v314 = vunpack.c.h.b16 %v41
  %v315 = vunpack.c.l.b16 %v42
  %v316 = vunpack.c.h.b16 %v42
  %v317 = vunpack.c.l.b16 %v43
  %v318 = vunpack.c.h.b16 %v43
  %v319 = vunpack.c.l.b16 %v44
  %v320 = vunpack.c.h.b16 %v44
  %v321 = vunpack.c.l.b16 %v45
  %v322 = vunpack.c.h.b16 %v45
  %v323 = vunpack.c.l.b16 %v46
  %v324 = vunpack.c.h.b16 %v46
  %v325 = vunpack.c.l.b16 %v47
  %v326 = vunpack.c.h.b16 %v47
  %v327 = vunpack.c.l.b16 %v48
  %v328 = vunpack.c.h.b16 %v48
  %v329 = vunpack.c.l.b16 %v49
  %v330 = vunpack.c.h.b16 %v49
  %v331 = vunpack.c.l.b16 %v50
  %v332 = vunpack.c.h.b16 %v50
  %v333 = vunpack.c.l.b16 %v51
  %v334 = vunpack.c.h.b16 %v51
  %v335 = vunpack.c.l.b16 %v52
  %v336 = vunpack.c.h.b16 %v52
  %v337 = vunpack.c.l.b16 %v53
  %v338 = vunpack.c.h.b16 %v53
  %v339 = vunpack.c.l.b16 %v54
  %v340 = vunpack.c.h.b16 %v54
  %v341 = vunpack.c.l.b16 %v55
  %v342 = vunpack.c.h.b16 %v55
  %v343 = vunpack.c.l.b16 %v56
  %v344 = vunpack.c.h.b16 %v56
  %v345 = vunpack.c.l.b16 %v57
  %v346 = vunpack.c.h.b16 %v57
  %v347 = vunpack.c.l.b16 %v58
  %v348 = vunpack.c.h.b16 %v58
  %v349 = vunpack.c.l.b16 %v59
  %v350 = vunpack.c.h.b16 %v59
  %v351 = vunpack.c.l.b16 %v60
  %v352 = vunpack.c.h.b16 %v60
  %v353 = vunpack.c.l.b16 %v61
  %v354 = vunpack.c.h.b16 %v61
  %v355 = vunpack.c.l.b16 %v62
  %v356 = vunpack.c.h.b16 %v62
  %v357 = vunpack.c.l.b16 %v63
  %v358 = vunpack.c.h.b16 %v63
  %v359 = vunpack.c.l.b16 %v64
  %v360 = vunpack.c.h.b16 %v64
  %v361 = vunpack.c.l.b16 %v65
  %v362 = vunpack.c.h.b16 %v65
  %v363 = vunpack.c.l.b16 %v66
  %v364 = vunpack.c.h.b16 %v66
  %v365 = vunpack.c.l.b16 %v67
  %v366 = vunpack.c.h.b16 %v67
  %v367 = vunpack.c.l.b16 %v68
  %v368 = vunpack.c.h.b16 %v68
  %v369 = vunpack.c.l.b16 %v69
  %v370 = vunpack.c.h.b16 %v69
  %v371 = vunpack.c.l.b16 %v70
  %v372 = vunpack.c.h.b16 %v70
  %v373 = vunpack.c.l.b16 %v71
  %v374 = vunpack.c.h.b16 %v71
  %v375 = vunpack.c.l.b16 %v72
  %v376 = vunpack.c.h.b16 %v72
  %v377 = vunpack.c.l.b16 %v73
  %v378 = vunpack.c.h.b16 %v73
  %v379 = vunpack.c.l.b16 %v74
  %v380 = vunpack.c.h.b16 %v74
  %v381 = vunpack.c.l.b16 %v75
  %v382 = vunpack.c.h.b16 %v75
  %v383 = vunpack.c.l.b16 %v76
  %v384 = vunpack.c.h.b16 %v76
  %v385 = vunpack.c.l.b16 %v77
  %v386 = vunpack.c.h.b16 %v77
  %v387 = vunpack.c.l.b16 %v78
  %v388 = vunpack.c.h.b16 %v78
  %v389 = vunpack.c.l.b16 %v79
  %v390 = vunpack.c.h.b16 %v79
  %v391 = vunpack.c.l.b16 %v80
  %v392 = vunpack.c.h.b16 %v80
  %v393 = vunpack.c.l.b16 %v81
  %v394 = vunpack.c.h.b16 %v81
  %v395 = vunpack.c.l.b16 %v82
  %v396 = vunpack.c.h.b16 %v82
  %v397 = vunpack.c.l.b16 %v83
  %v398 = vunpack.c.h.b16 %v83
  %v399 = vunpack.c.l.b16 %v84
  %v400 = vunpack.c.h.b16 %v84
  %v401 = vunpack.c.l.b16 %v85
  %v402 = vunpack.c.h.b16 %v85
  %v403 = vunpack.c.l.b16 %v86
  %v404 = vunpack.c.h.b16 %v86
  %v405 = vunpack.c.l.b16 %v87
  %v406 = vunpack.c.h.b16 %v87
  %v407 = vunpack.c.l.b16 %v88
  %v408 = vunpack.c.h.b16 %v88
  %v409 = vunpack.c.l.b16 %v89
  %v410 = vunpack.c.h.b16 %v89
  %v411 = vunpack.c.l.b16 %v90
  %v412 = vunpack.c.h.b16 %v90
  %v413 = vunpack.c.l.b16 %v91
  %v414 = vunpack.c.h.b16 %v91
  %v415 = vunpack.c.l.b16 %v92
  %v416 = vunpack.c.h.b16 %v92
  %v417 = vunpack.c.l.b16 %v93
  %v418 = vunpack.c.h.b16 %v93
  %v419 = vunpack.c.l.b16 %v94
  %v420 = vunpack.c.h.b16 %v94
  %v421 = vunpack.c.l.b16 %v95
  %v422 = vunpack.c.h.b16 %v95
  %v423 = vunpack.c.l.b16 %v96
  %v424 = vunpack.c.h.b16 %v96
  %v425 = vunpack.c.l.b16 %v97
  %v426 = vunpack.c.h.b16 %v97
  %v427 = vunpack.c.l.b16 %v98
  %v428 = vunpack.c.h.b16 %v98
  %v429 = vunpack.c.l.b16 %v99
  %v430 = vunpack.c.h.b16 %v99
  %v431 = vunpack.c.l.b16 %v100
  %v432 = vunpack.c.h.b16 %v100
  %v433 = vunpack.c.l.b16 %v101
  %v434 = vunpack.c.h.b16 %v101
  %v435 = vunpack.c.l.b16 %v102
  %v436 = vunpack.c.h.b16 %v102
  %v437 = vunpack.c.l.b16 %v103
  %v438 = vunpack.c.h.b16 %v103
  %v439 = vunpack.c.l.b16 %v104
  %v440 = vunpack.c.h.b16 %v104
  %v441 = vunpack.c.l.b16 %v105
  %v442 = vunpack.c.h.b16 %v105
  %v443 = vunpack.c.l.b16 %v106
  %v444 = vunpack.c.h.b16 %v106
  %v445 = vunpack.c.l.b16 %v107
  %v446 = vunpack.c.h.b16 %v107
  %v447 = vunpack.c.l.b16 %v108
  %v448 = vunpack.c.h.b16 %v108
  %v449 = vunpack.c.l.b16 %v109
  %v450 = vunpack.c.h.b16 %v109
  %v451 = vunpack.c.l.b16 %v110
  %v452 = vunpack.c.h.b16 %v110
  %v453 = vunpack.c.l.b16 %v111
  %v454 = vunpack.c.h.b16 %v111
  %v455 = vunpack.c.l.b16 %v112
  %v456 = vunpack.c.h.b16 %v112
  %v457 = vpack.c.b16 %v265, %v261
  %v458 = vpack.c.b16 %v266, %v262
  %v459 = vpack.c.b16 %v267, %v263
  %v460 = vpack.c.b16 %v268, %v264
  %v461 = vpack.c.b16 %v273, %v269
  %v462 = vpack.c.b16 %v274, %v270
  %v463 = vpack.c.b16 %v275, %v271
  %v464 = vpack.c.b16 %v276, %v272
  %v465 = vpack.c.b16 %v281, %v277
  %v466 = vpack.c.b16 %v282, %v278
  %v467 = vpack.c.b16 %v283, %v279
  %v468 = vpack.c.b16 %v284, %v280
  %v469 = vpack.c.b16 %v289, %v285
  %v470 = vpack.c.b16 %v290, %v286
  %v471 = vpack.c.b16 %v291, %v287
  %v472 = vpack.c.b16 %v292, %v288
  %v473 = vpack.c.b16 %v297, %v293
  %v474 = vpack.c.b16 %v298, %v294
  %v475 = vpack.c.b16 %v299, %v295
  %v476 = vpack.c.b16 %v300, %v296
  %v477 = vpack.c.b16 %v305, %v301
  %v478 = vpack.c.b16 %v306, %v302
  %v479 = vpack.c.b16 %v307, %v303
  %v480 = vpack.c.b16 %v308, %v304
  %v481 = vpack.c.b16 %v313, %v309
  %v482 = vpack.c.b16 %v314, %v310
  %v483 = vpack.c.b16 %v315, %v311
  %v484 = vpack.c.b16 %v316, %v312
  %v485 = vpack.c.b16 %v321, %v317
  %v486 = vpack.c.b16 %v322, %v318
  %v487 = vpack.c.b16 %v323, %v319
  %v488 = vpack.c.b16 %v324, %v320
  %v489 = vpack.c.b16 %v329, %v325
  %v490 = vpack.c.b16 %v330, %v326
  %v491 = vpack.c.b16 %v331, %v327
  %v492 = vpack.c.b16 %v332, %v328
  %v493 = vpack.c.b16 %v337, %v333
  %v494 = vpack.c.b16 %v338, %v334
  %v495 = vpack.c.b16 %v339, %v335
  %v496 = vpack.c.b16 %v340, %v336
  %v497 = vpack.c.b16 %v345, %v341
  %v498 = vpack.c.b16 %v346, %v342
  %v499 = vpack.c.b16 %v347, %v343
  %v500 = vpack.c.b16 %v348, %v344
  %v501 = vpack.c.b16 %v353, %v349
  %v502 = vpack.c.b16 %v354, %v350
  %v503 = vpack.c.b16 %v355, %v351
  %v504 = vpack.c.b16 %v356, %v352
  %v505 = vpack.c.b16 %v361, %v357
  %v506 = vpack.c.b16 %v362, %v358
  %v507 = vpack.c.b16 %v363, %v359
  %v508 = vpack.c.b16 %v364, %v360
  %v509 = vpack.c.b16 %v369, %v365
  %v510 = vpack.c.b16 %v370, %v366
  %v511 = vpack.c.b16 %v371, %v367
  %v512 = vpack.c.b16 %v372, %v368
  %v513 = vpack.c.b16 %v377, %v373
  %v514 = vpack.c.b16 %v378, %v374
  %v515 = vpack.c.b16 %v379, %v375
  %v516 = vpack.c.b16 %v380, %v376
  %v517 = vpack.c.b16 %v385, %v381
  %v518 = vpack.c.b16 %v386, %v382
  %v519 = vpack.c.b16 %v387, %v383
  %v520 = vpack.c.b16 %v388, %v384
  %v521 = vpack.c.b16 %v393, %v389
  %v522 = vpack.c.b16 %v394, %v390
  %v523 = vpack.c.b16 %v395, %v391
  %v524 = vpack.c.b16 %v396, %v392
  %v525 = vpack.c.b16 %v401, %v397
  %v526 = vpack.c.b16 %v402, %v398
  %v527 = vpack.c.b16 %v403, %v399
  %v528 = vpack.c.b16 %v404, %v400
  %v529 = vpack.c.b16 %v409, %v405
  %v530 = vpack.c.b16 %v410, %v406
  %v531 = vpack.c.b16 %v411, %v407
  %v532 = vpack.c.b16 %v412, %v408
  %v533 = vpack.c.b16 %v417, %v413
  %v534 = vpack.c.b16 %v418, %v414
  %v535 = vpack.c.b16 %v419, %v415
  %v536 = vpack.c.b16 %v420, %v416
  %v537 = vpack.c.b16 %v425, %v421
  %v538 = vpack.c.b16 %v426, %v422
  %v539 = vpack.c.b16 %v427, %v423
  %v540 = vpack.c.b16 %v428, %v424
  %v541 = vpack.c.b16 %v433, %v429
  %v542 = vpack.c.b16 %v434, %v430
  %v543 = vpack.c.b16 %v435, %v431
  %v544 = vpack.c.b16 %v436, %v432
  %v545 = vpack.c.b16 %v441, %v437
  %v546 = vpack.c.b16 %v442, %v438
  %v547 = vpack.c.b16 %v443, %v439
  %v548 = vpack.c.b16 %v444, %v440
  %v549 = vpack.c.b16 %v449, %v445
  %v550 = vpack.c.b16 %v450, %v446
  %v551 = vpack.c.b16 %v451, %v447
  %v552 = vpack.c.b16 %v452, %v448
  %v553 = vpack.c.b16 %v453, %v453
  %v554 = vpack.c.b16 %v454, %v454
  %v555 = vpack.c.b16 %v455, %v455
  %v556 = vpack.c.b16 %v456, %v456
  %v682 = vunpack.c.l.b16 %v113
  %v683 = vunpack.c.l.b16 %v114
  %v684 = vunpack.c.l.b16 %v115
  %v685 = vunpack.c.l.b16 %v116
  %v686 = vunpack.c.l.b16 %v117
  %v687 = vunpack.c.l.b16 %v118
  %v688 = vunpack.c.l.b16 %v119
  %v689 = vunpack.c.l.b16 %v120
  %v690 = vunpack.c.l.b16 %v121
  %v691 = vunpack.c.l.b16 %v122
  %v692 = vunpack.c.l.b16 %v123
  %v693 = vunpack.c.l.b16 %v124
  %v694 = vunpack.c.l.b16 %v125
  %v695 = vunpack.c.l.b16 %v126
  %v696 = vunpack.c.l.b16 %v127
  %v697 = vunpack.c.l.b16 %v128
  %v698 = vunpack.c.l.b16 %v129
  %v699 = vunpack.c.l.b16 %v130
  %v700 = vunpack.c.l.b16 %v131
  %v701 = vunpack.c.l.b16 %v132
  %v702 = vunpack.c.l.b16 %v133
  %v703 = vunpack.c.l.b16 %v134
  %v704 = vunpack.c.l.b16 %v135
  %v705 = vunpack.c.l.b16 %v136
  %v706 = vunpack.c.l.b16 %v137
  %v707 = vunpack.c.l.b16 %v138
  %v708 = vunpack.c.l.b16 %v139
  %v709 = vunpack.c.l.b16 %v140
  %v710 = vunpack.c.l.b16 %v141
  %v711 = vunpack.c.l.b16 %v142
  %v712 = vunpack.c.l.b16 %v143
  %v713 = vunpack.c.l.b16 %v144
  %v714 = vunpack.c.l.b16 %v145
  %v715 = vunpack.c.l.b16 %v146
  %v716 = vunpack.c.l.b16 %v147
  %v717 = vunpack.c.l.b16 %v148
  %v718 = vunpack.c.l.b16 %v149
  %v719 = vunpack.c.l.b16 %v150
  %v720 = vunpack.c.l.b16 %v151
  %v721 = vunpack.c.l.b16 %v152
  %v722 = vunpack.c.l.b16 %v153
  %v723 = vunpack.c.l.b16 %v154
  %v724 = vunpack.c.l.b16 %v155
  %v725 = vunpack.c.l.b16 %v156
  %v726 = vunpack.c.l.b16 %v157
  %v727 = vunpack.c.l.b16 %v158
  %v728 = vunpack.c.l.b16 %v159
  %v729 = vunpack.c.l.b16 %v160
  %v730 = vunpack.c.l.b16 %v161
  %v731 = vunpack.c.l.b16 %v162
  %v732 = vpack.c.b16 %v683, %v682
  %v733 = vpack.c.b16 %v685, %v684
  %v734 = vpack.c.b16 %v687, %v686
  %v735 = vpack.c.b16 %v689, %v688
  %v736 = vpack.c.b16 %v691, %v690
  %v737 = vpack.c.b16 %v693, %v692
  %v738 = vpack.c.b16 %v695, %v694
  %v739 = vpack.c.b16 %v697, %v696
  %v740 = vpack.c.b16 %v699, %v698
  %v741 = vpack.c.b16 %v701, %v700
  %v742 = vpack.c.b16 %v703, %v702
  %v743 = vpack.c.b16 %v705, %v704
  %v744 = vpack.c.b16 %v707, %v706
  %v745 = vpack.c.b16 %v709, %v708
  %v746 = vpack.c.b16 %v711, %v710
  %v747 = vpack.c.b16 %v713, %v712
  %v748 = vpack.c.b16 %v715, %v714
  %v749 = vpack.c.b16 %v717, %v716
  %v750 = vpack.c.b16 %v719, %v718
  %v751 = vpack.c.b16 %v721, %v720
  %v752 = vpack.c.b16 %v723, %v722
  %v753 = vpack.c.b16 %v725, %v724
  %v754 = vpack.c.b16 %v727, %v726
  %v755 = vpack.c.b16 %v729, %v728
  %v756 = vpack.c.b16 %v731, %v730
  %vm782 = vcmask 130048
  %v784 = vsel %vm782, %v460, 0
  %v787 = vsel %vm782, %v464, 0
  %v790 = vsel %vm782, %v468, 0
  %v793 = vsel %vm782, %v472, 0
  %v796 = vsel %vm782, %v476, 0
  %v799 = vsel %vm782, %v480, 0
  %v802 = vsel %vm782, %v484, 0
  %v805 = vsel %vm782, %v488, 0
  %v808 = vsel %vm782, %v492, 0
  %v811 = vsel %vm782, %v496, 0
  %v814 = vsel %vm782, %v500, 0
  %v817 = vsel %vm782, %v504, 0
  %v820 = vsel %vm782, %v508, 0
  %v823 = vsel %vm782, %v512, 0
  %v826 = vsel %vm782, %v516, 0
  %v829 = vsel %vm782, %v520, 0
  %v832 = vsel %vm782, %v524, 0
  %v835 = vsel %vm782, %v528, 0
  %v838 = vsel %vm782, %v532, 0
  %v841 = vsel %vm782, %v536, 0
  %v844 = vsel %vm782, %v540, 0
  %v847 = vsel %vm782, %v544, 0
  %v850 = vsel %vm782, %v548, 0
  %v853 = vsel %vm782, %v552, 0
  %v856 = vsel %vm782, %v556, 0
  %858 = vmatprep.subr.bf16.mxu0 0
  %859 = vmatpush1.bf16.msra.mxu0 %v732
  %860 = vmatprep.subr.bf16.mxu0 0
  %861 = vmatpush1.bf16.msra.mxu0 %v733
  %862 = vmatprep.subr.bf16.mxu0 0
  %863 = vmatpush1.bf16.msra.mxu0 %v734
  %864 = vmatprep.subr.bf16.mxu0 0
  %865 = vmatpush1.bf16.msra.mxu0 %v735
  %866 = vmatprep.subr.bf16.mxu0 0
  %867 = vmatpush1.bf16.msra.mxu0 %v736
  %868 = vmatprep.subr.bf16.mxu0 0
  %869 = vmatpush1.bf16.msra.mxu0 %v737
  %870 = vmatprep.subr.bf16.mxu0 0
  %871 = vmatpush1.bf16.msra.mxu0 %v738
  %872 = vmatprep.subr.bf16.mxu0 0
  %873 = vmatpush1.bf16.msra.mxu0 %v739
  %874 = vmatprep.subr.bf16.mxu0 0
  %875 = vmatpush1.bf16.msra.mxu0 %v740
  %876 = vmatprep.subr.bf16.mxu0 0
  %877 = vmatpush1.bf16.msra.mxu0 %v741
  %878 = vmatprep.subr.bf16.mxu0 0
  %879 = vmatpush1.bf16.msra.mxu0 %v742
  %880 = vmatprep.subr.bf16.mxu0 0
  %881 = vmatpush1.bf16.msra.mxu0 %v743
  %882 = vmatprep.subr.bf16.mxu0 0
  %883 = vmatpush1.bf16.msra.mxu0 %v744
  %884 = vmatprep.subr.bf16.mxu0 0
  %885 = vmatpush1.bf16.msra.mxu0 %v745
  %886 = vmatprep.subr.bf16.mxu0 0
  %887 = vmatpush1.bf16.msra.mxu0 %v746
  %888 = vmatprep.subr.bf16.mxu0 0
  %889 = vmatpush1.bf16.msra.mxu0 %v747
  %890 = vmatprep.mubr.bf16.mxu0 %v458
  %891 = vmatmul.mubr.bf16.gmra.mrb[0].mxu0 %v457
  %v892 = vpop.f32.mrb[0].mxu0
  %v893 = vadd.f32 0.0, %v892
  %v894 = vpop.f32.mrb[0].mxu0
  %v895 = vpop.f32.mrb[0].mxu0
  %v896 = vadd.f32 0.0, %v895
  %v897 = vpop.f32.mrb[0].mxu0
  %898 = vmatprep.mubr.bf16.mxu0 %v462
  %899 = vmatmul.mubr.bf16.gmra.mrb[0].mxu0 %v461
  %v900 = vpop.f32.mrb[0].mxu0
  %v901 = vadd.f32 0.0, %v900
  %v902 = vpop.f32.mrb[0].mxu0
  %v903 = vpop.f32.mrb[0].mxu0
  %v904 = vadd.f32 0.0, %v903
  %v905 = vpop.f32.mrb[0].mxu0
  %906 = vmatprep.mubr.bf16.mxu0 %v466
  %907 = vmatmul.mubr.bf16.gmra.mrb[0].mxu0 %v465
  %v908 = vpop.f32.mrb[0].mxu0
  %v909 = vadd.f32 0.0, %v908
  %v910 = vpop.f32.mrb[0].mxu0
  %v911 = vpop.f32.mrb[0].mxu0
  %v912 = vadd.f32 0.0, %v911
  %v913 = vpop.f32.mrb[0].mxu0
  %914 = vmatprep.mubr.bf16.mxu0 %v470
  %915 = vmatmul.mubr.bf16.gmra.mrb[0].mxu0 %v469
  %v916 = vpop.f32.mrb[0].mxu0
  %v917 = vadd.f32 0.0, %v916
  %v918 = vpop.f32.mrb[0].mxu0
  %v919 = vpop.f32.mrb[0].mxu0
  %v920 = vadd.f32 0.0, %v919
  %v921 = vpop.f32.mrb[0].mxu0
  %922 = vmatprep.mubr.bf16.mxu0 %v474
  %923 = vmatmul.mubr.bf16.gmra.mrb[0].mxu0 %v473
  %v924 = vpop.f32.mrb[0].mxu0
  %v925 = vadd.f32 0.0, %v924
  %v926 = vpop.f32.mrb[0].mxu0
  %v927 = vpop.f32.mrb[0].mxu0
  %v928 = vadd.f32 0.0, %v927
  %v929 = vpop.f32.mrb[0].mxu0
  %930 = vmatprep.mubr.bf16.mxu0 %v478
  %931 = vmatmul.mubr.bf16.gmra.mrb[0].mxu0 %v477
  %v932 = vpop.f32.mrb[0].mxu0
  %v933 = vadd.f32 0.0, %v932
  %v934 = vpop.f32.mrb[0].mxu0
  %v935 = vpop.f32.mrb[0].mxu0
  %v936 = vadd.f32 0.0, %v935
  %v937 = vpop.f32.mrb[0].mxu0
  %938 = vmatprep.mubr.bf16.mxu0 %v482
  %939 = vmatmul.mubr.bf16.gmra.mrb[0].mxu0 %v481
  %v940 = vpop.f32.mrb[0].mxu0
  %v941 = vadd.f32 0.0, %v940
  %v942 = vpop.f32.mrb[0].mxu0
  %v943 = vpop.f32.mrb[0].mxu0
  %v944 = vadd.f32 0.0, %v943
  %v945 = vpop.f32.mrb[0].mxu0
  %946 = vmatprep.mubr.bf16.mxu0 %v486
  %947 = vmatmul.mubr.bf16.gmra.mrb[0].mxu0 %v485
  %v948 = vpop.f32.mrb[0].mxu0
  %v949 = vadd.f32 0.0, %v948
  %v950 = vpop.f32.mrb[0].mxu0
  %v951 = vpop.f32.mrb[0].mxu0
  %v952 = vadd.f32 0.0, %v951
  %v953 = vpop.f32.mrb[0].mxu0
  %954 = vmatprep.mubr.bf16.mxu0 %v490
  %955 = vmatmul.mubr.bf16.gmra.mrb[0].mxu0 %v489
  %v956 = vpop.f32.mrb[0].mxu0
  %v957 = vadd.f32 0.0, %v956
  %v958 = vpop.f32.mrb[0].mxu0
  %v959 = vpop.f32.mrb[0].mxu0
  %v960 = vadd.f32 0.0, %v959
  %v961 = vpop.f32.mrb[0].mxu0
  %962 = vmatprep.mubr.bf16.mxu0 %v494
  %963 = vmatmul.mubr.bf16.gmra.mrb[0].mxu0 %v493
  %v964 = vpop.f32.mrb[0].mxu0
  %v965 = vadd.f32 0.0, %v964
  %v966 = vpop.f32.mrb[0].mxu0
  %v967 = vpop.f32.mrb[0].mxu0
  %v968 = vadd.f32 0.0, %v967
  %v969 = vpop.f32.mrb[0].mxu0
  %970 = vmatprep.mubr.bf16.mxu0 %v498
  %971 = vmatmul.mubr.bf16.gmra.mrb[0].mxu0 %v497
  %v972 = vpop.f32.mrb[0].mxu0
  %v973 = vadd.f32 0.0, %v972
  %v974 = vpop.f32.mrb[0].mxu0
  %v975 = vpop.f32.mrb[0].mxu0
  %v976 = vadd.f32 0.0, %v975
  %v977 = vpop.f32.mrb[0].mxu0
  %978 = vmatprep.mubr.bf16.mxu0 %v502
  %979 = vmatmul.mubr.bf16.gmra.mrb[0].mxu0 %v501
  %v980 = vpop.f32.mrb[0].mxu0
  %v981 = vadd.f32 0.0, %v980
  %v982 = vpop.f32.mrb[0].mxu0
  %v983 = vpop.f32.mrb[0].mxu0
  %v984 = vadd.f32 0.0, %v983
  %v985 = vpop.f32.mrb[0].mxu0
  %986 = vmatprep.mubr.bf16.mxu0 %v506
  %987 = vmatmul.mubr.bf16.gmra.mrb[0].mxu0 %v505
  %v988 = vpop.f32.mrb[0].mxu0
  %v989 = vadd.f32 0.0, %v988
  %v990 = vpop.f32.mrb[0].mxu0
  %v991 = vpop.f32.mrb[0].mxu0
  %v992 = vadd.f32 0.0, %v991
  %v993 = vpop.f32.mrb[0].mxu0
  %994 = vmatprep.mubr.bf16.mxu0 %v510
  %995 = vmatmul.mubr.bf16.gmra.mrb[0].mxu0 %v509
  %v996 = vpop.f32.mrb[0].mxu0
  %v997 = vadd.f32 0.0, %v996
  %v998 = vpop.f32.mrb[0].mxu0
  %v999 = vpop.f32.mrb[0].mxu0
  %v1000 = vadd.f32 0.0, %v999
  %v1001 = vpop.f32.mrb[0].mxu0
  %1002 = vmatprep.mubr.bf16.mxu0 %v514
  %1003 = vmatmul.mubr.bf16.gmra.mrb[0].mxu0 %v513
  %v1004 = vpop.f32.mrb[0].mxu0
  %v1005 = vadd.f32 0.0, %v1004
  %v1006 = vpop.f32.mrb[0].mxu0
  %v1007 = vpop.f32.mrb[0].mxu0
  %v1008 = vadd.f32 0.0, %v1007
  %v1009 = vpop.f32.mrb[0].mxu0
  %1010 = vmatprep.mubr.bf16.mxu0 %v518
  %1011 = vmatmul.mubr.bf16.gmra.mrb[0].mxu0 %v517
  %v1012 = vpop.f32.mrb[0].mxu0
  %v1013 = vadd.f32 0.0, %v1012
  %v1014 = vpop.f32.mrb[0].mxu0
  %v1015 = vpop.f32.mrb[0].mxu0
  %v1016 = vadd.f32 0.0, %v1015
  %v1017 = vpop.f32.mrb[0].mxu0
  %1018 = vmatprep.mubr.bf16.mxu0 %v522
  %1019 = vmatmul.mubr.bf16.gmra.mrb[0].mxu0 %v521
  %v1020 = vpop.f32.mrb[0].mxu0
  %v1021 = vadd.f32 0.0, %v1020
  %v1022 = vpop.f32.mrb[0].mxu0
  %v1023 = vpop.f32.mrb[0].mxu0
  %v1024 = vadd.f32 0.0, %v1023
  %v1025 = vpop.f32.mrb[0].mxu0
  %1026 = vmatprep.mubr.bf16.mxu0 %v526
  %1027 = vmatmul.mubr.bf16.gmra.mrb[0].mxu0 %v525
  %v1028 = vpop.f32.mrb[0].mxu0
  %v1029 = vadd.f32 0.0, %v1028
  %v1030 = vpop.f32.mrb[0].mxu0
  %v1031 = vpop.f32.mrb[0].mxu0
  %v1032 = vadd.f32 0.0, %v1031
  %v1033 = vpop.f32.mrb[0].mxu0
  %1034 = vmatprep.mubr.bf16.mxu0 %v530
  %1035 = vmatmul.mubr.bf16.gmra.mrb[0].mxu0 %v529
  %v1036 = vpop.f32.mrb[0].mxu0
  %v1037 = vadd.f32 0.0, %v1036
  %v1038 = vpop.f32.mrb[0].mxu0
  %v1039 = vpop.f32.mrb[0].mxu0
  %v1040 = vadd.f32 0.0, %v1039
  %v1041 = vpop.f32.mrb[0].mxu0
  %1042 = vmatprep.mubr.bf16.mxu0 %v534
  %1043 = vmatmul.mubr.bf16.gmra.mrb[0].mxu0 %v533
  %v1044 = vpop.f32.mrb[0].mxu0
  %v1045 = vadd.f32 0.0, %v1044
  %v1046 = vpop.f32.mrb[0].mxu0
  %v1047 = vpop.f32.mrb[0].mxu0
  %v1048 = vadd.f32 0.0, %v1047
  %v1049 = vpop.f32.mrb[0].mxu0
  %1050 = vmatprep.mubr.bf16.mxu0 %v538
  %1051 = vmatmul.mubr.bf16.gmra.mrb[0].mxu0 %v537
  %v1052 = vpop.f32.mrb[0].mxu0
  %v1053 = vadd.f32 0.0, %v1052
  %v1054 = vpop.f32.mrb[0].mxu0
  %v1055 = vpop.f32.mrb[0].mxu0
  %v1056 = vadd.f32 0.0, %v1055
  %v1057 = vpop.f32.mrb[0].mxu0
  %1058 = vmatprep.mubr.bf16.mxu0 %v542
  %1059 = vmatmul.mubr.bf16.gmra.mrb[0].mxu0 %v541
  %v1060 = vpop.f32.mrb[0].mxu0
  %v1061 = vadd.f32 0.0, %v1060
  %v1062 = vpop.f32.mrb[0].mxu0
  %v1063 = vpop.f32.mrb[0].mxu0
  %v1064 = vadd.f32 0.0, %v1063
  %v1065 = vpop.f32.mrb[0].mxu0
  %1066 = vmatprep.mubr.bf16.mxu0 %v546
  %1067 = vmatmul.mubr.bf16.gmra.mrb[0].mxu0 %v545
  %v1068 = vpop.f32.mrb[0].mxu0
  %v1069 = vadd.f32 0.0, %v1068
  %v1070 = vpop.f32.mrb[0].mxu0
  %v1071 = vpop.f32.mrb[0].mxu0
  %v1072 = vadd.f32 0.0, %v1071
  %v1073 = vpop.f32.mrb[0].mxu0
  %1074 = vmatprep.mubr.bf16.mxu0 %v550
  %1075 = vmatmul.mubr.bf16.gmra.mrb[0].mxu0 %v549
  %v1076 = vpop.f32.mrb[0].mxu0
  %v1077 = vadd.f32 0.0, %v1076
  %v1078 = vpop.f32.mrb[0].mxu0
  %v1079 = vpop.f32.mrb[0].mxu0
  %v1080 = vadd.f32 0.0, %v1079
  %v1081 = vpop.f32.mrb[0].mxu0
  %1082 = vmatprep.mubr.bf16.mxu0 %v554
  %1083 = vmatmul.mubr.bf16.gmra.mrb[0].mxu0 %v553
  %v1084 = vpop.f32.mrb[0].mxu0
  %v1085 = vadd.f32 0.0, %v1084
  %v1086 = vpop.f32.mrb[0].mxu0
  %v1087 = vpop.f32.mrb[0].mxu0
  %v1088 = vpop.f32.mrb[0].mxu0
  %1089 = vdwg.mxu0
  %1090 = vmatprep.subr.bf16.mxu0 0
  %1091 = vmatpush1.bf16.msra.mxu0 %v748
  %1092 = vmatprep.subr.bf16.mxu0 0
  %1093 = vmatpush1.bf16.msra.mxu0 %v749
  %1094 = vmatprep.subr.bf16.mxu0 0
  %1095 = vmatpush1.bf16.msra.mxu0 %v750
  %1096 = vmatprep.subr.bf16.mxu0 0
  %1097 = vmatpush1.bf16.msra.mxu0 %v751
  %1098 = vmatprep.subr.bf16.mxu0 0
  %1099 = vmatpush1.bf16.msra.mxu0 %v752
  %1100 = vmatprep.subr.bf16.mxu0 0
  %1101 = vmatpush1.bf16.msra.mxu0 %v753
  %1102 = vmatprep.subr.bf16.mxu0 0
  %1103 = vmatpush1.bf16.msra.mxu0 %v754
  %1104 = vmatprep.subr.bf16.mxu0 0
  %1105 = vmatpush1.bf16.msra.mxu0 %v755
  %1106 = vmatprep.subr.bf16.mxu0 0
  %1107 = vmatpush1.bf16.msra.mxu0 %v756
  %1108 = vmatprep.subr.bf16.mxu0 0
  %1109 = vmatpush1.bf16.msra.mxu0 0
  %1110 = vmatprep.subr.bf16.mxu0 0
  %1111 = vmatpush1.bf16.msra.mxu0 0
  %1112 = vmatprep.subr.bf16.mxu0 0
  %1113 = vmatpush1.bf16.msra.mxu0 0
  %1114 = vmatprep.subr.bf16.mxu0 0
  %1115 = vmatpush1.bf16.msra.mxu0 0
  %1116 = vmatprep.subr.bf16.mxu0 0
  %1117 = vmatpush1.bf16.msra.mxu0 0
  %1118 = vmatprep.subr.bf16.mxu0 0
  %1119 = vmatpush1.bf16.msra.mxu0 0
  %1120 = vmatprep.subr.bf16.mxu0 0
  %1121 = vmatpush1.bf16.msra.mxu0 0
  %1122 = vmatprep.mubr.bf16.mxu0 %v784
  %1123 = vmatmul.mubr.bf16.gmra.mrb[0].mxu0 %v459
  %v1124 = vpop.f32.mrb[0].mxu0
  %v1125 = vadd.f32 %v893, %v1124
  %v1126 = vpop.f32.mrb[0].mxu0
  %v1127 = vpop.f32.mrb[0].mxu0
  %v1128 = vadd.f32 %v896, %v1127
  %v1129 = vpop.f32.mrb[0].mxu0
  %1130 = vmatprep.mubr.bf16.mxu0 %v787
  %1131 = vmatmul.mubr.bf16.gmra.mrb[0].mxu0 %v463
  %v1132 = vpop.f32.mrb[0].mxu0
  %v1133 = vadd.f32 %v901, %v1132
  %v1134 = vpop.f32.mrb[0].mxu0
  %v1135 = vpop.f32.mrb[0].mxu0
  %v1136 = vadd.f32 %v904, %v1135
  %v1137 = vpop.f32.mrb[0].mxu0
  %1138 = vmatprep.mubr.bf16.mxu0 %v790
  %1139 = vmatmul.mubr.bf16.gmra.mrb[0].mxu0 %v467
  %v1140 = vpop.f32.mrb[0].mxu0
  %v1141 = vadd.f32 %v909, %v1140
  %v1142 = vpop.f32.mrb[0].mxu0
  %v1143 = vpop.f32.mrb[0].mxu0
  %v1144 = vadd.f32 %v912, %v1143
  %v1145 = vpop.f32.mrb[0].mxu0
  %1146 = vmatprep.mubr.bf16.mxu0 %v793
  %1147 = vmatmul.mubr.bf16.gmra.mrb[0].mxu0 %v471
  %v1148 = vpop.f32.mrb[0].mxu0
  %v1149 = vadd.f32 %v917, %v1148
  %v1150 = vpop.f32.mrb[0].mxu0
  %v1151 = vpop.f32.mrb[0].mxu0
  %v1152 = vadd.f32 %v920, %v1151
  %v1153 = vpop.f32.mrb[0].mxu0
  %1154 = vmatprep.mubr.bf16.mxu0 %v796
  %1155 = vmatmul.mubr.bf16.gmra.mrb[0].mxu0 %v475
  %v1156 = vpop.f32.mrb[0].mxu0
  %v1157 = vadd.f32 %v925, %v1156
  %v1158 = vpop.f32.mrb[0].mxu0
  %v1159 = vpop.f32.mrb[0].mxu0
  %v1160 = vadd.f32 %v928, %v1159
  %v1161 = vpop.f32.mrb[0].mxu0
  %1162 = vmatprep.mubr.bf16.mxu0 %v799
  %1163 = vmatmul.mubr.bf16.gmra.mrb[0].mxu0 %v479
  %v1164 = vpop.f32.mrb[0].mxu0
  %v1165 = vadd.f32 %v933, %v1164
  %v1166 = vpop.f32.mrb[0].mxu0
  %v1167 = vpop.f32.mrb[0].mxu0
  %v1168 = vadd.f32 %v936, %v1167
  %v1169 = vpop.f32.mrb[0].mxu0
  %1170 = vmatprep.mubr.bf16.mxu0 %v802
  %1171 = vmatmul.mubr.bf16.gmra.mrb[0].mxu0 %v483
  %v1172 = vpop.f32.mrb[0].mxu0
  %v1173 = vadd.f32 %v941, %v1172
  %v1174 = vpop.f32.mrb[0].mxu0
  %v1175 = vpop.f32.mrb[0].mxu0
  %v1176 = vadd.f32 %v944, %v1175
  %v1177 = vpop.f32.mrb[0].mxu0
  %1178 = vmatprep.mubr.bf16.mxu0 %v805
  %1179 = vmatmul.mubr.bf16.gmra.mrb[0].mxu0 %v487
  %v1180 = vpop.f32.mrb[0].mxu0
  %v1181 = vadd.f32 %v949, %v1180
  %v1182 = vpop.f32.mrb[0].mxu0
  %v1183 = vpop.f32.mrb[0].mxu0
  %v1184 = vadd.f32 %v952, %v1183
  %v1185 = vpop.f32.mrb[0].mxu0
  %1186 = vmatprep.mubr.bf16.mxu0 %v808
  %1187 = vmatmul.mubr.bf16.gmra.mrb[0].mxu0 %v491
  %v1188 = vpop.f32.mrb[0].mxu0
  %v1189 = vadd.f32 %v957, %v1188
  %v1190 = vpop.f32.mrb[0].mxu0
  %v1191 = vpop.f32.mrb[0].mxu0
  %v1192 = vadd.f32 %v960, %v1191
  %v1193 = vpop.f32.mrb[0].mxu0
  %1194 = vmatprep.mubr.bf16.mxu0 %v811
  %1195 = vmatmul.mubr.bf16.gmra.mrb[0].mxu0 %v495
  %v1196 = vpop.f32.mrb[0].mxu0
  %v1197 = vadd.f32 %v965, %v1196
  %v1198 = vpop.f32.mrb[0].mxu0
  %v1199 = vpop.f32.mrb[0].mxu0
  %v1200 = vadd.f32 %v968, %v1199
  %v1201 = vpop.f32.mrb[0].mxu0
  %1202 = vmatprep.mubr.bf16.mxu0 %v814
  %1203 = vmatmul.mubr.bf16.gmra.mrb[0].mxu0 %v499
  %v1204 = vpop.f32.mrb[0].mxu0
  %v1205 = vadd.f32 %v973, %v1204
  %v1206 = vpop.f32.mrb[0].mxu0
  %v1207 = vpop.f32.mrb[0].mxu0
  %v1208 = vadd.f32 %v976, %v1207
  %v1209 = vpop.f32.mrb[0].mxu0
  %1210 = vmatprep.mubr.bf16.mxu0 %v817
  %1211 = vmatmul.mubr.bf16.gmra.mrb[0].mxu0 %v503
  %v1212 = vpop.f32.mrb[0].mxu0
  %v1213 = vadd.f32 %v981, %v1212
  %v1214 = vpop.f32.mrb[0].mxu0
  %v1215 = vpop.f32.mrb[0].mxu0
  %v1216 = vadd.f32 %v984, %v1215
  %v1217 = vpop.f32.mrb[0].mxu0
  %1218 = vmatprep.mubr.bf16.mxu0 %v820
  %1219 = vmatmul.mubr.bf16.gmra.mrb[0].mxu0 %v507
  %v1220 = vpop.f32.mrb[0].mxu0
  %v1221 = vadd.f32 %v989, %v1220
  %v1222 = vpop.f32.mrb[0].mxu0
  %v1223 = vpop.f32.mrb[0].mxu0
  %v1224 = vadd.f32 %v992, %v1223
  %v1225 = vpop.f32.mrb[0].mxu0
  %1226 = vmatprep.mubr.bf16.mxu0 %v823
  %1227 = vmatmul.mubr.bf16.gmra.mrb[0].mxu0 %v511
  %v1228 = vpop.f32.mrb[0].mxu0
  %v1229 = vadd.f32 %v997, %v1228
  %v1230 = vpop.f32.mrb[0].mxu0
  %v1231 = vpop.f32.mrb[0].mxu0
  %v1232 = vadd.f32 %v1000, %v1231
  %v1233 = vpop.f32.mrb[0].mxu0
  %1234 = vmatprep.mubr.bf16.mxu0 %v826
  %1235 = vmatmul.mubr.bf16.gmra.mrb[0].mxu0 %v515
  %v1236 = vpop.f32.mrb[0].mxu0
  %v1237 = vadd.f32 %v1005, %v1236
  %v1238 = vpop.f32.mrb[0].mxu0
  %v1239 = vpop.f32.mrb[0].mxu0
  %v1240 = vadd.f32 %v1008, %v1239
  %v1241 = vpop.f32.mrb[0].mxu0
  %1242 = vmatprep.mubr.bf16.mxu0 %v829
  %1243 = vmatmul.mubr.bf16.gmra.mrb[0].mxu0 %v519
  %v1244 = vpop.f32.mrb[0].mxu0
  %v1245 = vadd.f32 %v1013, %v1244
  %v1246 = vpop.f32.mrb[0].mxu0
  %v1247 = vpop.f32.mrb[0].mxu0
  %v1248 = vadd.f32 %v1016, %v1247
  %v1249 = vpop.f32.mrb[0].mxu0
  %1250 = vmatprep.mubr.bf16.mxu0 %v832
  %1251 = vmatmul.mubr.bf16.gmra.mrb[0].mxu0 %v523
  %v1252 = vpop.f32.mrb[0].mxu0
  %v1253 = vadd.f32 %v1021, %v1252
  %v1254 = vpop.f32.mrb[0].mxu0
  %v1255 = vpop.f32.mrb[0].mxu0
  %v1256 = vadd.f32 %v1024, %v1255
  %v1257 = vpop.f32.mrb[0].mxu0
  %1258 = vmatprep.mubr.bf16.mxu0 %v835
  %1259 = vmatmul.mubr.bf16.gmra.mrb[0].mxu0 %v527
  %v1260 = vpop.f32.mrb[0].mxu0
  %v1261 = vadd.f32 %v1029, %v1260
  %v1262 = vpop.f32.mrb[0].mxu0
  %v1263 = vpop.f32.mrb[0].mxu0
  %v1264 = vadd.f32 %v1032, %v1263
  %v1265 = vpop.f32.mrb[0].mxu0
  %1266 = vmatprep.mubr.bf16.mxu0 %v838
  %1267 = vmatmul.mubr.bf16.gmra.mrb[0].mxu0 %v531
  %v1268 = vpop.f32.mrb[0].mxu0
  %v1269 = vadd.f32 %v1037, %v1268
  %v1270 = vpop.f32.mrb[0].mxu0
  %v1271 = vpop.f32.mrb[0].mxu0
  %v1272 = vadd.f32 %v1040, %v1271
  %v1273 = vpop.f32.mrb[0].mxu0
  %1274 = vmatprep.mubr.bf16.mxu0 %v841
  %1275 = vmatmul.mubr.bf16.gmra.mrb[0].mxu0 %v535
  %v1276 = vpop.f32.mrb[0].mxu0
  %v1277 = vadd.f32 %v1045, %v1276
  %v1278 = vpop.f32.mrb[0].mxu0
  %v1279 = vpop.f32.mrb[0].mxu0
  %v1280 = vadd.f32 %v1048, %v1279
  %v1281 = vpop.f32.mrb[0].mxu0
  %1282 = vmatprep.mubr.bf16.mxu0 %v844
  %1283 = vmatmul.mubr.bf16.gmra.mrb[0].mxu0 %v539
  %v1284 = vpop.f32.mrb[0].mxu0
  %v1285 = vadd.f32 %v1053, %v1284
  %v1286 = vpop.f32.mrb[0].mxu0
  %v1287 = vpop.f32.mrb[0].mxu0
  %v1288 = vadd.f32 %v1056, %v1287
  %v1289 = vpop.f32.mrb[0].mxu0
  %1290 = vmatprep.mubr.bf16.mxu0 %v847
  %1291 = vmatmul.mubr.bf16.gmra.mrb[0].mxu0 %v543
  %v1292 = vpop.f32.mrb[0].mxu0
  %v1293 = vadd.f32 %v1061, %v1292
  %v1294 = vpop.f32.mrb[0].mxu0
  %v1295 = vpop.f32.mrb[0].mxu0
  %v1296 = vadd.f32 %v1064, %v1295
  %v1297 = vpop.f32.mrb[0].mxu0
  %1298 = vmatprep.mubr.bf16.mxu0 %v850
  %1299 = vmatmul.mubr.bf16.gmra.mrb[0].mxu0 %v547
  %v1300 = vpop.f32.mrb[0].mxu0
  %v1301 = vadd.f32 %v1069, %v1300
  %v1302 = vpop.f32.mrb[0].mxu0
  %v1303 = vpop.f32.mrb[0].mxu0
  %v1304 = vadd.f32 %v1072, %v1303
  %v1305 = vpop.f32.mrb[0].mxu0
  %1306 = vmatprep.mubr.bf16.mxu0 %v853
  %1307 = vmatmul.mubr.bf16.gmra.mrb[0].mxu0 %v551
  %v1308 = vpop.f32.mrb[0].mxu0
  %v1309 = vadd.f32 %v1077, %v1308
  %v1310 = vpop.f32.mrb[0].mxu0
  %v1311 = vpop.f32.mrb[0].mxu0
  %v1312 = vadd.f32 %v1080, %v1311
  %v1313 = vpop.f32.mrb[0].mxu0
  %1314 = vmatprep.mubr.bf16.mxu0 %v856
  %1315 = vmatmul.mubr.bf16.gmra.mrb[0].mxu0 %v555
  %v1316 = vpop.f32.mrb[0].mxu0
  %v1317 = vadd.f32 %v1085, %v1316
  %v1318 = vpop.f32.mrb[0].mxu0
  %v1319 = vpop.f32.mrb[0].mxu0
  %v1320 = vpop.f32.mrb[0].mxu0
  %1321 = vdwg.mxu0
  %vm1322 = vcmask 261120
  %1323 = vst.msk [vmem:[%s2] sm:$0xff] %vm1322, %v1125
  %1324 = vst.msk [vmem:[%s2 + $0x8] sm:$0xff] %vm1322, %v1128
  %1325 = vst.msk [vmem:[%s2 + $0x10] sm:$0xff] %vm1322, %v1133
  %1326 = vst.msk [vmem:[%s2 + $0x18] sm:$0xff] %vm1322, %v1136
  %1327 = vst.msk [vmem:[%s2 + $0x20] sm:$0xff] %vm1322, %v1141
  %1328 = vst.msk [vmem:[%s2 + $0x28] sm:$0xff] %vm1322, %v1144
  %1329 = vst.msk [vmem:[%s2 + $0x30] sm:$0xff] %vm1322, %v1149
  %1330 = vst.msk [vmem:[%s2 + $0x38] sm:$0xff] %vm1322, %v1152
  %1331 = vst.msk [vmem:[%s2 + $0x40] sm:$0xff] %vm1322, %v1157
  %1332 = vst.msk [vmem:[%s2 + $0x48] sm:$0xff] %vm1322, %v1160
  %1333 = vst.msk [vmem:[%s2 + $0x50] sm:$0xff] %vm1322, %v1165
  %1334 = vst.msk [vmem:[%s2 + $0x58] sm:$0xff] %vm1322, %v1168
  %1335 = vst.msk [vmem:[%s2 + $0x60] sm:$0xff] %vm1322, %v1173
  %1336 = vst.msk [vmem:[%s2 + $0x68] sm:$0xff] %vm1322, %v1176
  %1337 = vst.msk [vmem:[%s2 + $0x70] sm:$0xff] %vm1322, %v1181
  %1338 = vst.msk [vmem:[%s2 + $0x78] sm:$0xff] %vm1322, %v1184
  %1339 = vst.msk [vmem:[%s2 + $0x80] sm:$0xff] %vm1322, %v1189
  %1340 = vst.msk [vmem:[%s2 + $0x88] sm:$0xff] %vm1322, %v1192
  %1341 = vst.msk [vmem:[%s2 + $0x90] sm:$0xff] %vm1322, %v1197
  %1342 = vst.msk [vmem:[%s2 + $0x98] sm:$0xff] %vm1322, %v1200
  %1343 = vst.msk [vmem:[%s2 + $0xa0] sm:$0xff] %vm1322, %v1205
  %1344 = vst.msk [vmem:[%s2 + $0xa8] sm:$0xff] %vm1322, %v1208
  %1345 = vst.msk [vmem:[%s2 + $0xb0] sm:$0xff] %vm1322, %v1213
  %1346 = vst.msk [vmem:[%s2 + $0xb8] sm:$0xff] %vm1322, %v1216
  %1347 = vst.msk [vmem:[%s2 + $0xc0] sm:$0xff] %vm1322, %v1221
  %1348 = vst.msk [vmem:[%s2 + $0xc8] sm:$0xff] %vm1322, %v1224
  %1349 = vst.msk [vmem:[%s2 + $0xd0] sm:$0xff] %vm1322, %v1229
  %1350 = vst.msk [vmem:[%s2 + $0xd8] sm:$0xff] %vm1322, %v1232
  %1351 = vst.msk [vmem:[%s2 + $0xe0] sm:$0xff] %vm1322, %v1237
  %1352 = vst.msk [vmem:[%s2 + $0xe8] sm:$0xff] %vm1322, %v1240
  %1353 = vst.msk [vmem:[%s2 + $0xf0] sm:$0xff] %vm1322, %v1245
  %1354 = vst.msk [vmem:[%s2 + $0xf8] sm:$0xff] %vm1322, %v1248
  %1355 = vst.msk [vmem:[%s2 + $0x100] sm:$0xff] %vm1322, %v1253
  %1356 = vst.msk [vmem:[%s2 + $0x108] sm:$0xff] %vm1322, %v1256
  %1357 = vst.msk [vmem:[%s2 + $0x110] sm:$0xff] %vm1322, %v1261
  %1358 = vst.msk [vmem:[%s2 + $0x118] sm:$0xff] %vm1322, %v1264
  %1359 = vst.msk [vmem:[%s2 + $0x120] sm:$0xff] %vm1322, %v1269
  %1360 = vst.msk [vmem:[%s2 + $0x128] sm:$0xff] %vm1322, %v1272
  %1361 = vst.msk [vmem:[%s2 + $0x130] sm:$0xff] %vm1322, %v1277
  %1362 = vst.msk [vmem:[%s2 + $0x138] sm:$0xff] %vm1322, %v1280
  %1363 = vst.msk [vmem:[%s2 + $0x140] sm:$0xff] %vm1322, %v1285
  %1364 = vst.msk [vmem:[%s2 + $0x148] sm:$0xff] %vm1322, %v1288
  %1365 = vst.msk [vmem:[%s2 + $0x150] sm:$0xff] %vm1322, %v1293
  %1366 = vst.msk [vmem:[%s2 + $0x158] sm:$0xff] %vm1322, %v1296
  %1367 = vst.msk [vmem:[%s2 + $0x160] sm:$0xff] %vm1322, %v1301
  %1368 = vst.msk [vmem:[%s2 + $0x168] sm:$0xff] %vm1322, %v1304
  %1369 = vst.msk [vmem:[%s2 + $0x170] sm:$0xff] %vm1322, %v1309
  %1370 = vst.msk [vmem:[%s2 + $0x178] sm:$0xff] %vm1322, %v1312
  %1371 = vst.msk [vmem:[%s2 + $0x180] sm:$0xff] %vm1322, %v1317
  %p1372 = scmp.eq.s32.totalorder 0, 0
  // Predicated region
  $region10: #{auto_quantized_net_forward.7} parent=0 // pred_check
    %p1373 = pneg %p1372
  $region11: #{auto_quantized_net_forward.7} parent=0 // pred_check_branch
    %1375 = sbr.rel (%p1373) target = $region13
  $region12: #{auto_quantized_net_forward.7} parent=0 // pred_region
    %vm1376 = vcmask 253952
    %1377 = vst.msk [vmem:[%s3] sm:$0x1] %vm1376, 0.0
    %1378 = vst.msk [vmem:[%s4] sm:$0x1] %vm1376, 0.0
  $region13: #{auto_quantized_net_forward.7} parent=0 // pred_fallthru
    _
  %v1379 = vld [vmem:[%s3] sm:$0x1]
  %v1380 = vsel %vm1322, %v1125, 0.0
  %v1381 = vsel %vm1322, %v1128, 0.0
  %v1382 = vadd.f32 %v1380, %v1381
  %v1383 = vsel %vm1322, %v1133, 0.0
  %v1384 = vadd.f32 %v1382, %v1383
  %v1385 = vsel %vm1322, %v1136, 0.0
  %v1386 = vadd.f32 %v1384, %v1385
  %v1387 = vsel %vm1322, %v1141, 0.0
  %v1388 = vadd.f32 %v1386, %v1387
  %v1389 = vsel %vm1322, %v1144, 0.0
  %v1390 = vadd.f32 %v1388, %v1389
  %v1391 = vsel %vm1322, %v1149, 0.0
  %v1392 = vadd.f32 %v1390, %v1391
  %v1393 = vsel %vm1322, %v1152, 0.0
  %v1394 = vadd.f32 %v1392, %v1393
  %v1395 = vsel %vm1322, %v1157, 0.0
  %v1396 = vadd.f32 %v1394, %v1395
  %v1397 = vsel %vm1322, %v1160, 0.0
  %v1398 = vadd.f32 %v1396, %v1397
  %v1399 = vsel %vm1322, %v1165, 0.0
  %v1400 = vadd.f32 %v1398, %v1399
  %v1401 = vsel %vm1322, %v1168, 0.0
  %v1402 = vadd.f32 %v1400, %v1401
  %v1403 = vsel %vm1322, %v1173, 0.0
  %v1404 = vadd.f32 %v1402, %v1403
  %v1405 = vsel %vm1322, %v1176, 0.0
  %v1406 = vadd.f32 %v1404, %v1405
  %v1407 = vsel %vm1322, %v1181, 0.0
  %v1408 = vadd.f32 %v1406, %v1407
  %v1409 = vsel %vm1322, %v1184, 0.0
  %v1410 = vadd.f32 %v1408, %v1409
  %v1411 = vsel %vm1322, %v1189, 0.0
  %v1412 = vadd.f32 %v1410, %v1411
  %v1413 = vsel %vm1322, %v1192, 0.0
  %v1414 = vadd.f32 %v1412, %v1413
  %v1415 = vsel %vm1322, %v1197, 0.0
  %v1416 = vadd.f32 %v1414, %v1415
  %v1417 = vsel %vm1322, %v1200, 0.0
  %v1418 = vadd.f32 %v1416, %v1417
  %v1419 = vsel %vm1322, %v1205, 0.0
  %v1420 = vadd.f32 %v1418, %v1419
  %v1421 = vsel %vm1322, %v1208, 0.0
  %v1422 = vadd.f32 %v1420, %v1421
  %v1423 = vsel %vm1322, %v1213, 0.0
  %v1424 = vadd.f32 %v1422, %v1423
  %v1425 = vsel %vm1322, %v1216, 0.0
  %v1426 = vadd.f32 %v1424, %v1425
  %v1427 = vsel %vm1322, %v1221, 0.0
  %v1428 = vadd.f32 %v1426, %v1427
  %v1429 = vsel %vm1322, %v1224, 0.0
  %v1430 = vadd.f32 %v1428, %v1429
  %v1431 = vsel %vm1322, %v1229, 0.0
  %v1432 = vadd.f32 %v1430, %v1431
  %v1433 = vsel %vm1322, %v1232, 0.0
  %v1434 = vadd.f32 %v1432, %v1433
  %v1435 = vsel %vm1322, %v1237, 0.0
  %v1436 = vadd.f32 %v1434, %v1435
  %v1437 = vsel %vm1322, %v1240, 0.0
  %v1438 = vadd.f32 %v1436, %v1437
  %v1439 = vsel %vm1322, %v1245, 0.0
  %v1440 = vadd.f32 %v1438, %v1439
  %v1441 = vsel %vm1322, %v1248, 0.0
  %v1442 = vadd.f32 %v1440, %v1441
  %v1443 = vsel %vm1322, %v1253, 0.0
  %v1444 = vadd.f32 %v1442, %v1443
  %v1445 = vsel %vm1322, %v1256, 0.0
  %v1446 = vadd.f32 %v1444, %v1445
  %v1447 = vsel %vm1322, %v1261, 0.0
  %v1448 = vadd.f32 %v1446, %v1447
  %v1449 = vsel %vm1322, %v1264, 0.0
  %v1450 = vadd.f32 %v1448, %v1449
  %v1451 = vsel %vm1322, %v1269, 0.0
  %v1452 = vadd.f32 %v1450, %v1451
  %v1453 = vsel %vm1322, %v1272, 0.0
  %v1454 = vadd.f32 %v1452, %v1453
  %v1455 = vsel %vm1322, %v1277, 0.0
  %v1456 = vadd.f32 %v1454, %v1455
  %v1457 = vsel %vm1322, %v1280, 0.0
  %v1458 = vadd.f32 %v1456, %v1457
  %v1459 = vsel %vm1322, %v1285, 0.0
  %v1460 = vadd.f32 %v1458, %v1459
  %v1461 = vsel %vm1322, %v1288, 0.0
  %v1462 = vadd.f32 %v1460, %v1461
  %v1463 = vsel %vm1322, %v1293, 0.0
  %v1464 = vadd.f32 %v1462, %v1463
  %v1465 = vsel %vm1322, %v1296, 0.0
  %v1466 = vadd.f32 %v1464, %v1465
  %v1467 = vsel %vm1322, %v1301, 0.0
  %v1468 = vadd.f32 %v1466, %v1467
  %v1469 = vsel %vm1322, %v1304, 0.0
  %v1470 = vadd.f32 %v1468, %v1469
  %v1471 = vsel %vm1322, %v1309, 0.0
  %v1472 = vadd.f32 %v1470, %v1471
  %v1473 = vsel %vm1322, %v1312, 0.0
  %v1474 = vadd.f32 %v1472, %v1473
  %v1475 = vsel %vm1322, %v1317, 0.0
  %v1476 = vadd.f32 %v1474, %v1475
  %v1477 = vrot.slane %v1476, 4
  %v1478 = vadd.f32 %v1476, %v1477
  %v1479 = vrot.slane %v1478, 2
  %v1480 = vadd.f32 %v1478, %v1479
  %v1481 = vrot.slane %v1480, 1
  %v1482 = vadd.f32 %v1480, %v1481
  %v1483 = vadd.f32 %v1379, %v1482
  %vm1484 = vcmask 253952
  %1485 = vst.msk [vmem:[%s3] sm:$0x1] %vm1484, %v1483
  %v1486 = vld [vmem:[%s4] sm:$0x1]
  %v1487 = vmul.f32 %v1125, %v1125
  %v1488 = vmul.f32 %v1128, %v1128
  %v1489 = vmul.f32 %v1133, %v1133
  %v1490 = vmul.f32 %v1136, %v1136
  %v1491 = vmul.f32 %v1141, %v1141
  %v1492 = vmul.f32 %v1144, %v1144
  %v1493 = vmul.f32 %v1149, %v1149
  %v1494 = vmul.f32 %v1152, %v1152
  %v1495 = vmul.f32 %v1157, %v1157
  %v1496 = vmul.f32 %v1160, %v1160
  %v1497 = vmul.f32 %v1165, %v1165
  %v1498 = vmul.f32 %v1168, %v1168
  %v1499 = vmul.f32 %v1173, %v1173
  %v1500 = vmul.f32 %v1176, %v1176
  %v1501 = vmul.f32 %v1181, %v1181
  %v1502 = vmul.f32 %v1184, %v1184
  %v1503 = vmul.f32 %v1189, %v1189
  %v1504 = vmul.f32 %v1192, %v1192
  %v1505 = vmul.f32 %v1197, %v1197
  %v1506 = vmul.f32 %v1200, %v1200
  %v1507 = vmul.f32 %v1205, %v1205
  %v1508 = vmul.f32 %v1208, %v1208
  %v1509 = vmul.f32 %v1213, %v1213
  %v1510 = vmul.f32 %v1216, %v1216
  %v1511 = vmul.f32 %v1221, %v1221
  %v1512 = vmul.f32 %v1224, %v1224
  %v1513 = vmul.f32 %v1229, %v1229
  %v1514 = vmul.f32 %v1232, %v1232
  %v1515 = vmul.f32 %v1237, %v1237
  %v1516 = vmul.f32 %v1240, %v1240
  %v1517 = vmul.f32 %v1245, %v1245
  %v1518 = vmul.f32 %v1248, %v1248
  %v1519 = vmul.f32 %v1253, %v1253
  %v1520 = vmul.f32 %v1256, %v1256
  %v1521 = vmul.f32 %v1261, %v1261
  %v1522 = vmul.f32 %v1264, %v1264
  %v1523 = vmul.f32 %v1269, %v1269
  %v1524 = vmul.f32 %v1272, %v1272
  %v1525 = vmul.f32 %v1277, %v1277
  %v1526 = vmul.f32 %v1280, %v1280
  %v1527 = vmul.f32 %v1285, %v1285
  %v1528 = vmul.f32 %v1288, %v1288
  %v1529 = vmul.f32 %v1293, %v1293
  %v1530 = vmul.f32 %v1296, %v1296
  %v1531 = vmul.f32 %v1301, %v1301
  %v1532 = vmul.f32 %v1304, %v1304
  %v1533 = vmul.f32 %v1309, %v1309
  %v1534 = vmul.f32 %v1312, %v1312
  %v1535 = vmul.f32 %v1317, %v1317
  %v1536 = vsel %vm1322, %v1487, 0.0
  %v1537 = vsel %vm1322, %v1488, 0.0
  %v1538 = vadd.f32 %v1536, %v1537
  %v1539 = vsel %vm1322, %v1489, 0.0
  %v1540 = vadd.f32 %v1538, %v1539
  %v1541 = vsel %vm1322, %v1490, 0.0
  %v1542 = vadd.f32 %v1540, %v1541
  %v1543 = vsel %vm1322, %v1491, 0.0
  %v1544 = vadd.f32 %v1542, %v1543
  %v1545 = vsel %vm1322, %v1492, 0.0
  %v1546 = vadd.f32 %v1544, %v1545
  %v1547 = vsel %vm1322, %v1493, 0.0
  %v1548 = vadd.f32 %v1546, %v1547
  %v1549 = vsel %vm1322, %v1494, 0.0
  %v1550 = vadd.f32 %v1548, %v1549
  %v1551 = vsel %vm1322, %v1495, 0.0
  %v1552 = vadd.f32 %v1550, %v1551
  %v1553 = vsel %vm1322, %v1496, 0.0
  %v1554 = vadd.f32 %v1552, %v1553
  %v1555 = vsel %vm1322, %v1497, 0.0
  %v1556 = vadd.f32 %v1554, %v1555
  %v1557 = vsel %vm1322, %v1498, 0.0
  %v1558 = vadd.f32 %v1556, %v1557
  %v1559 = vsel %vm1322, %v1499, 0.0
  %v1560 = vadd.f32 %v1558, %v1559
  %v1561 = vsel %vm1322, %v1500, 0.0
  %v1562 = vadd.f32 %v1560, %v1561
  %v1563 = vsel %vm1322, %v1501, 0.0
  %v1564 = vadd.f32 %v1562, %v1563
  %v1565 = vsel %vm1322, %v1502, 0.0
  %v1566 = vadd.f32 %v1564, %v1565
  %v1567 = vsel %vm1322, %v1503, 0.0
  %v1568 = vadd.f32 %v1566, %v1567
  %v1569 = vsel %vm1322, %v1504, 0.0
  %v1570 = vadd.f32 %v1568, %v1569
  %v1571 = vsel %vm1322, %v1505, 0.0
  %v1572 = vadd.f32 %v1570, %v1571
  %v1573 = vsel %vm1322, %v1506, 0.0
  %v1574 = vadd.f32 %v1572, %v1573
  %v1575 = vsel %vm1322, %v1507, 0.0
  %v1576 = vadd.f32 %v1574, %v1575
  %v1577 = vsel %vm1322, %v1508, 0.0
  %v1578 = vadd.f32 %v1576, %v1577
  %v1579 = vsel %vm1322, %v1509, 0.0
  %v1580 = vadd.f32 %v1578, %v1579
  %v1581 = vsel %vm1322, %v1510, 0.0
  %v1582 = vadd.f32 %v1580, %v1581
  %v1583 = vsel %vm1322, %v1511, 0.0
  %v1584 = vadd.f32 %v1582, %v1583
  %v1585 = vsel %vm1322, %v1512, 0.0
  %v1586 = vadd.f32 %v1584, %v1585
  %v1587 = vsel %vm1322, %v1513, 0.0
  %v1588 = vadd.f32 %v1586, %v1587
  %v1589 = vsel %vm1322, %v1514, 0.0
  %v1590 = vadd.f32 %v1588, %v1589
  %v1591 = vsel %vm1322, %v1515, 0.0
  %v1592 = vadd.f32 %v1590, %v1591
  %v1593 = vsel %vm1322, %v1516, 0.0
  %v1594 = vadd.f32 %v1592, %v1593
  %v1595 = vsel %vm1322, %v1517, 0.0
  %v1596 = vadd.f32 %v1594, %v1595
  %v1597 = vsel %vm1322, %v1518, 0.0
  %v1598 = vadd.f32 %v1596, %v1597
  %v1599 = vsel %vm1322, %v1519, 0.0
  %v1600 = vadd.f32 %v1598, %v1599
  %v1601 = vsel %vm1322, %v1520, 0.0
  %v1602 = vadd.f32 %v1600, %v1601
  %v1603 = vsel %vm1322, %v1521, 0.0
  %v1604 = vadd.f32 %v1602, %v1603
  %v1605 = vsel %vm1322, %v1522, 0.0
  %v1606 = vadd.f32 %v1604, %v1605
  %v1607 = vsel %vm1322, %v1523, 0.0
  %v1608 = vadd.f32 %v1606, %v1607
  %v1609 = vsel %vm1322, %v1524, 0.0
  %v1610 = vadd.f32 %v1608, %v1609
  %v1611 = vsel %vm1322, %v1525, 0.0
  %v1612 = vadd.f32 %v1610, %v1611
  %v1613 = vsel %vm1322, %v1526, 0.0
  %v1614 = vadd.f32 %v1612, %v1613
  %v1615 = vsel %vm1322, %v1527, 0.0
  %v1616 = vadd.f32 %v1614, %v1615
  %v1617 = vsel %vm1322, %v1528, 0.0
  %v1618 = vadd.f32 %v1616, %v1617
  %v1619 = vsel %vm1322, %v1529, 0.0
  %v1620 = vadd.f32 %v1618, %v1619
  %v1621 = vsel %vm1322, %v1530, 0.0
  %v1622 = vadd.f32 %v1620, %v1621
  %v1623 = vsel %vm1322, %v1531, 0.0
  %v1624 = vadd.f32 %v1622, %v1623
  %v1625 = vsel %vm1322, %v1532, 0.0
  %v1626 = vadd.f32 %v1624, %v1625
  %v1627 = vsel %vm1322, %v1533, 0.0
  %v1628 = vadd.f32 %v1626, %v1627
  %v1629 = vsel %vm1322, %v1534, 0.0
  %v1630 = vadd.f32 %v1628, %v1629
  %v1631 = vsel %vm1322, %v1535, 0.0
  %v1632 = vadd.f32 %v1630, %v1631
  %v1633 = vrot.slane %v1632, 4
  %v1634 = vadd.f32 %v1632, %v1633
  %v1635 = vrot.slane %v1634, 2
  %v1636 = vadd.f32 %v1634, %v1635
  %v1637 = vrot.slane %v1636, 1
  %v1638 = vadd.f32 %v1636, %v1637
  %v1639 = vadd.f32 %v1486, %v1638
  %1640 = vst.msk [vmem:[%s4] sm:$0x1] %vm1484, %v1639
  // Predicated region
  $region14: #{auto_quantized_net_forward.7} parent=0 // pred_check
    _
  $region15: #{auto_quantized_net_forward.7} parent=0 // pred_check_branch
    %1642 = sbr.rel (0) target = $region17
  $region16: #{auto_quantized_net_forward.7} parent=0 // pred_region
    _
  $region17: #{auto_quantized_net_forward.7} parent=0 // pred_fallthru
    _
  // Predicated region
  $region18: #{auto_quantized_net_forward.7} parent=0 // pred_check
    _
  $region19: #{auto_quantized_net_forward.7} parent=0 // pred_check_branch
    %1644 = sbr.rel (0) target = $region21
  $region20: #{auto_quantized_net_forward.7} parent=0 // pred_region
    _
  $region21: #{auto_quantized_net_forward.7} parent=0 // pred_fallthru
    _
  // Predicated region
  $region22: #{auto_quantized_net_forward.7} parent=0 // pred_check
    _
  $region23: #{auto_quantized_net_forward.7} parent=0 // pred_check_branch
    %1646 = sbr.rel (0) target = $region25
  $region24: #{auto_quantized_net_forward.7} parent=0 // pred_region
    _
  $region25: #{auto_quantized_net_forward.7} parent=0 // pred_fallthru
    _
  // Predicated region
  $region26: #{auto_quantized_net_forward.7} parent=0 // pred_check
    _
  $region27: #{auto_quantized_net_forward.7} parent=0 // pred_check_branch
    %1648 = sbr.rel (0) target = $region29
  $region28: #{auto_quantized_net_forward.7} parent=0 // pred_region
    _
  $region29: #{auto_quantized_net_forward.7} parent=0 // pred_fallthru
    _
  // Predicated region
  $region30: #{auto_quantized_net_forward.7} parent=0 // pred_check
    _
  $region31: #{auto_quantized_net_forward.7} parent=0 // pred_check_branch
    %1650 = sbr.rel (0) target = $region33
  $region32: #{auto_quantized_net_forward.7} parent=0 // pred_region
    _
  $region33: #{auto_quantized_net_forward.7} parent=0 // pred_fallthru
    _
  // Predicated region
  $region34: #{auto_quantized_net_forward.7} parent=0 // pred_check
    _
  $region35: #{auto_quantized_net_forward.7} parent=0 // pred_check_branch
    %1652 = sbr.rel (0) target = $region37
  $region36: #{auto_quantized_net_forward.7} parent=0 // pred_region
    _
  $region37: #{auto_quantized_net_forward.7} parent=0 // pred_fallthru
    _

// kernel: auto_quantized_net_forward.9
$region0: #{auto_quantized_net_forward.9}
  #allocation0 [shape = 'u32[]', space=smem, size = 0x4, offset = 0x4, fixed_abs, tag = 'smem constant byte address 0x4 - core index']
  #allocation1 [shape = 'u32[144,128]{1,0:T(1,128)}', space=vmem, size = 0x12000, scoped, tag = 'internal scratch']
  %s0 = inlined_call_operand.vmem [shape: bf16[2,1568], index: 0, kind: input, shape index: {}]
  %s1 = inlined_call_operand.vmem [shape: bf16[1568,10], index: 1, kind: input, shape index: {}]
  %s2 = inlined_call_operand.vmem [shape: f32[1,10], index: 2, kind: input, shape index: {}]
  %s3 = inlined_call_operand.hbm [shape: f32[2,10], index: 3, kind: output, shape index: {}]
  %s4 = sld [smem:[#allocation0]]
  $region22: #{auto_quantized_net_forward.9} parent=0
    _
  %s6 = ssub.s32 1, %s4
  %s7 = scalar_select 0, %s6, %s4
  $region1: #{auto_quantized_net_forward.9} parent=0
    #allocation2 [shape = 'u8[1024]{0}', space=vmem, size = 0x400, scoped, tag = 'output window, operand 0, single buffered']
    #allocation3 [shape = 's32[1]{0}', space=sflag, size = 0x4, scoped, tag = 'scoped memory for auto_quantized_net_forward.9']
    %8 = vsyncpa [#allocation3], 0
    // Predicated region
    $region2: #{auto_quantized_net_forward.9} parent=1 // pred_check
      _
    $region3: #{auto_quantized_net_forward.9} parent=1 // pred_check_branch
      %10 = sbr.rel (0) target = $region5
    $region4: #{auto_quantized_net_forward.9} parent=1 // pred_region
      _
    $region5: #{auto_quantized_net_forward.9} parent=1 // pred_fallthru
      _
    // Predicated region
    $region6: #{auto_quantized_net_forward.9} parent=1 // pred_check
      _
    $region7: #{auto_quantized_net_forward.9} parent=1 // pred_check_branch
      %12 = sbr.rel (0) target = $region9
    $region8: #{auto_quantized_net_forward.9} parent=1 // pred_region
      _
    $region9: #{auto_quantized_net_forward.9} parent=1 // pred_fallthru
      _
    // Predicated region
    $region10: #{auto_quantized_net_forward.9} parent=1 // pred_check
      _
    $region11: #{auto_quantized_net_forward.9} parent=1 // pred_check_branch
      %14 = sbr.rel (0) target = $region13
    $region12: #{auto_quantized_net_forward.9} parent=1 // pred_region
      _
    $region13: #{auto_quantized_net_forward.9} parent=1 // pred_fallthru
      _
    %v16 = vld [vmem:[%s0] sm:$0xff]
    %v17 = vld [vmem:[%s0 + $0x8] sm:$0x1f]
    %v18 = vld [vmem:[%s1] sm:$0xf]
    %v19 = vld [vmem:[%s1 + $0x4] sm:$0xf]
    %v20 = vld [vmem:[%s1 + $0x8] sm:$0xf]
    %v21 = vld [vmem:[%s1 + $0xc] sm:$0xf]
    %v22 = vld [vmem:[%s1 + $0x10] sm:$0xf]
    %v23 = vld [vmem:[%s1 + $0x14] sm:$0xf]
    %v24 = vld [vmem:[%s1 + $0x18] sm:$0xf]
    %v25 = vld [vmem:[%s1 + $0x1c] sm:$0xf]
    %v26 = vld [vmem:[%s1 + $0x20] sm:$0xf]
    %v27 = vld [vmem:[%s1 + $0x24] sm:$0xf]
    %v28 = vld [vmem:[%s1 + $0x28] sm:$0xf]
    %v29 = vld [vmem:[%s1 + $0x2c] sm:$0xf]
    %v30 = vld [vmem:[%s1 + $0x30] sm:$0xf]
    %v31 = vld [vmem:[%s1 + $0x34] sm:$0xf]
    %v32 = vld [vmem:[%s1 + $0x38] sm:$0xf]
    %v33 = vld [vmem:[%s1 + $0x3c] sm:$0xf]
    %v34 = vld [vmem:[%s1 + $0x40] sm:$0xf]
    %v35 = vld [vmem:[%s1 + $0x44] sm:$0xf]
    %v36 = vld [vmem:[%s1 + $0x48] sm:$0xf]
    %v37 = vld [vmem:[%s1 + $0x4c] sm:$0xf]
    %v38 = vld [vmem:[%s1 + $0x50] sm:$0xf]
    %v39 = vld [vmem:[%s1 + $0x54] sm:$0xf]
    %v40 = vld [vmem:[%s1 + $0x58] sm:$0xf]
    %v41 = vld [vmem:[%s1 + $0x5c] sm:$0xf]
    %v42 = vld [vmem:[%s1 + $0x60] sm:$0xf]
    %v43 = vld [vmem:[%s1 + $0x64] sm:$0xf]
    %v44 = vld [vmem:[%s1 + $0x68] sm:$0xf]
    %v45 = vld [vmem:[%s1 + $0x6c] sm:$0xf]
    %v46 = vld [vmem:[%s1 + $0x70] sm:$0xf]
    %v47 = vld [vmem:[%s1 + $0x74] sm:$0xf]
    %v48 = vld [vmem:[%s1 + $0x78] sm:$0xf]
    %v49 = vld [vmem:[%s1 + $0x7c] sm:$0xf]
    %v50 = vld [vmem:[%s1 + $0x80] sm:$0xf]
    %v51 = vld [vmem:[%s1 + $0x84] sm:$0xf]
    %v52 = vld [vmem:[%s1 + $0x88] sm:$0xf]
    %v53 = vld [vmem:[%s1 + $0x8c] sm:$0xf]
    %v54 = vld [vmem:[%s1 + $0x90] sm:$0xf]
    %v55 = vld [vmem:[%s1 + $0x94] sm:$0xf]
    %v56 = vld [vmem:[%s1 + $0x98] sm:$0xf]
    %v57 = vld [vmem:[%s1 + $0x9c] sm:$0xf]
    %v58 = vld [vmem:[%s1 + $0xa0] sm:$0xf]
    %v59 = vld [vmem:[%s1 + $0xa4] sm:$0xf]
    %v60 = vld [vmem:[%s1 + $0xa8] sm:$0xf]
    %v61 = vld [vmem:[%s1 + $0xac] sm:$0xf]
    %v62 = vld [vmem:[%s1 + $0xb0] sm:$0xf]
    %v63 = vld [vmem:[%s1 + $0xb4] sm:$0xf]
    %v64 = vld [vmem:[%s1 + $0xb8] sm:$0xf]
    %v65 = vld [vmem:[%s1 + $0xbc] sm:$0xf]
    %v66 = vld [vmem:[%s1 + $0xc0] sm:$0xf]
    %v67 = vld [vmem:[%s1 + $0xc4] sm:$0xf]
    %v68 = vld [vmem:[%s1 + $0xc8] sm:$0xf]
    %v69 = vld [vmem:[%s1 + $0xcc] sm:$0xf]
    %v70 = vld [vmem:[%s1 + $0xd0] sm:$0xf]
    %v71 = vld [vmem:[%s1 + $0xd4] sm:$0xf]
    %v72 = vld [vmem:[%s1 + $0xd8] sm:$0xf]
    %v73 = vld [vmem:[%s1 + $0xdc] sm:$0xf]
    %v74 = vld [vmem:[%s1 + $0xe0] sm:$0xf]
    %v75 = vld [vmem:[%s1 + $0xe4] sm:$0xf]
    %v76 = vld [vmem:[%s1 + $0xe8] sm:$0xf]
    %v77 = vld [vmem:[%s1 + $0xec] sm:$0xf]
    %v78 = vld [vmem:[%s1 + $0xf0] sm:$0xf]
    %v79 = vld [vmem:[%s1 + $0xf4] sm:$0xf]
    %v80 = vld [vmem:[%s1 + $0xf8] sm:$0xf]
    %v81 = vld [vmem:[%s1 + $0xfc] sm:$0xf]
    %v82 = vld [vmem:[%s1 + $0x100] sm:$0xf]
    %v83 = vld [vmem:[%s1 + $0x104] sm:$0xf]
    %v84 = vld [vmem:[%s1 + $0x108] sm:$0xf]
    %v85 = vld [vmem:[%s1 + $0x10c] sm:$0xf]
    %v86 = vld [vmem:[%s1 + $0x110] sm:$0xf]
    %v87 = vld [vmem:[%s1 + $0x114] sm:$0xf]
    %v88 = vld [vmem:[%s1 + $0x118] sm:$0xf]
    %v89 = vld [vmem:[%s1 + $0x11c] sm:$0xf]
    %v90 = vld [vmem:[%s1 + $0x120] sm:$0xf]
    %v91 = vld [vmem:[%s1 + $0x124] sm:$0xf]
    %v92 = vld [vmem:[%s1 + $0x128] sm:$0xf]
    %v93 = vld [vmem:[%s1 + $0x12c] sm:$0xf]
    %v94 = vld [vmem:[%s1 + $0x130] sm:$0xf]
    %v95 = vld [vmem:[%s1 + $0x134] sm:$0xf]
    %v96 = vld [vmem:[%s1 + $0x138] sm:$0xf]
    %v97 = vld [vmem:[%s1 + $0x13c] sm:$0xf]
    %v98 = vld [vmem:[%s1 + $0x140] sm:$0xf]
    %v99 = vld [vmem:[%s1 + $0x144] sm:$0xf]
    %v100 = vld [vmem:[%s1 + $0x148] sm:$0xf]
    %v101 = vld [vmem:[%s1 + $0x14c] sm:$0xf]
    %v102 = vld [vmem:[%s1 + $0x150] sm:$0xf]
    %v103 = vld [vmem:[%s1 + $0x154] sm:$0xf]
    %v104 = vld [vmem:[%s1 + $0x158] sm:$0xf]
    %v105 = vld [vmem:[%s1 + $0x15c] sm:$0xf]
    %v106 = vld [vmem:[%s1 + $0x160] sm:$0xf]
    %v107 = vld [vmem:[%s1 + $0x164] sm:$0xf]
    %v108 = vld [vmem:[%s1 + $0x168] sm:$0xf]
    %v109 = vld [vmem:[%s1 + $0x16c] sm:$0xf]
    %v110 = vld [vmem:[%s1 + $0x170] sm:$0xf]
    %v111 = vld [vmem:[%s1 + $0x174] sm:$0xf]
    %v112 = vld [vmem:[%s1 + $0x178] sm:$0xf]
    %v113 = vld [vmem:[%s1 + $0x17c] sm:$0xf]
    %v114 = vld [vmem:[%s1 + $0x180] sm:$0xf]
    %v115 = vld [vmem:[%s1 + $0x184] sm:$0xf]
    %v116 = vld [vmem:[%s1 + $0x188] sm:$0xf]
    %v117 = vld [vmem:[%s1 + $0x18c] sm:$0xf]
    %v118 = vld [vmem:[%s1 + $0x190] sm:$0xf]
    %v119 = vld [vmem:[%s1 + $0x194] sm:$0xf]
    %v120 = vld [vmem:[%s1 + $0x198] sm:$0xf]
    %v121 = vld [vmem:[%s1 + $0x19c] sm:$0xf]
    %v122 = vld [vmem:[%s1 + $0x1a0] sm:$0xf]
    %v123 = vld [vmem:[%s1 + $0x1a4] sm:$0xf]
    %v124 = vld [vmem:[%s1 + $0x1a8] sm:$0xf]
    %v125 = vld [vmem:[%s1 + $0x1ac] sm:$0xf]
    %v126 = vld [vmem:[%s1 + $0x1b0] sm:$0xf]
    %v127 = vld [vmem:[%s1 + $0x1b4] sm:$0xf]
    %v128 = vld [vmem:[%s1 + $0x1b8] sm:$0xf]
    %v129 = vld [vmem:[%s1 + $0x1bc] sm:$0xf]
    %v130 = vld [vmem:[%s1 + $0x1c0] sm:$0xf]
    %v131 = vld [vmem:[%s1 + $0x1c4] sm:$0xf]
    %v132 = vld [vmem:[%s1 + $0x1c8] sm:$0xf]
    %v133 = vld [vmem:[%s1 + $0x1cc] sm:$0xf]
    %v134 = vld [vmem:[%s1 + $0x1d0] sm:$0xf]
    %v135 = vld [vmem:[%s1 + $0x1d4] sm:$0xf]
    %v136 = vld [vmem:[%s1 + $0x1d8] sm:$0xf]
    %v137 = vld [vmem:[%s1 + $0x1dc] sm:$0xf]
    %v138 = vld [vmem:[%s1 + $0x1e0] sm:$0xf]
    %v139 = vld [vmem:[%s1 + $0x1e4] sm:$0xf]
    %v140 = vld [vmem:[%s1 + $0x1e8] sm:$0xf]
    %v141 = vld [vmem:[%s1 + $0x1ec] sm:$0xf]
    %v142 = vld [vmem:[%s1 + $0x1f0] sm:$0xf]
    %v143 = vld [vmem:[%s1 + $0x1f4] sm:$0xf]
    %v144 = vld [vmem:[%s1 + $0x1f8] sm:$0xf]
    %v145 = vld [vmem:[%s1 + $0x1fc] sm:$0xf]
    %v146 = vld [vmem:[%s1 + $0x200] sm:$0xf]
    %v147 = vld [vmem:[%s1 + $0x204] sm:$0xf]
    %v148 = vld [vmem:[%s1 + $0x208] sm:$0xf]
    %v149 = vld [vmem:[%s1 + $0x20c] sm:$0xf]
    %v150 = vld [vmem:[%s1 + $0x210] sm:$0xf]
    %v151 = vld [vmem:[%s1 + $0x214] sm:$0xf]
    %v152 = vld [vmem:[%s1 + $0x218] sm:$0xf]
    %v153 = vld [vmem:[%s1 + $0x21c] sm:$0xf]
    %v154 = vld [vmem:[%s1 + $0x220] sm:$0xf]
    %v155 = vld [vmem:[%s1 + $0x224] sm:$0xf]
    %v156 = vld [vmem:[%s1 + $0x228] sm:$0xf]
    %v157 = vld [vmem:[%s1 + $0x22c] sm:$0xf]
    %v158 = vld [vmem:[%s1 + $0x230] sm:$0xf]
    %v159 = vld [vmem:[%s1 + $0x234] sm:$0xf]
    %v160 = vld [vmem:[%s1 + $0x238] sm:$0xf]
    %v161 = vld [vmem:[%s1 + $0x23c] sm:$0xf]
    %v162 = vld [vmem:[%s1 + $0x240] sm:$0xf]
    %v163 = vld [vmem:[%s1 + $0x244] sm:$0xf]
    %v164 = vld [vmem:[%s1 + $0x248] sm:$0xf]
    %v165 = vld [vmem:[%s1 + $0x24c] sm:$0xf]
    %v166 = vld [vmem:[%s1 + $0x250] sm:$0xf]
    %v167 = vld [vmem:[%s1 + $0x254] sm:$0xf]
    %v168 = vld [vmem:[%s1 + $0x258] sm:$0xf]
    %v169 = vld [vmem:[%s1 + $0x25c] sm:$0xf]
    %v170 = vld [vmem:[%s1 + $0x260] sm:$0xf]
    %v171 = vld [vmem:[%s1 + $0x264] sm:$0xf]
    %v172 = vld [vmem:[%s1 + $0x268] sm:$0xf]
    %v173 = vld [vmem:[%s1 + $0x26c] sm:$0xf]
    %v174 = vld [vmem:[%s1 + $0x270] sm:$0xf]
    %v175 = vld [vmem:[%s1 + $0x274] sm:$0xf]
    %v176 = vld [vmem:[%s1 + $0x278] sm:$0xf]
    %v177 = vld [vmem:[%s1 + $0x27c] sm:$0xf]
    %v178 = vld [vmem:[%s1 + $0x280] sm:$0xf]
    %v179 = vld [vmem:[%s1 + $0x284] sm:$0xf]
    %v180 = vld [vmem:[%s1 + $0x288] sm:$0xf]
    %v181 = vld [vmem:[%s1 + $0x28c] sm:$0xf]
    %v182 = vld [vmem:[%s1 + $0x290] sm:$0xf]
    %v183 = vld [vmem:[%s1 + $0x294] sm:$0xf]
    %v184 = vld [vmem:[%s1 + $0x298] sm:$0xf]
    %v185 = vld [vmem:[%s1 + $0x29c] sm:$0xf]
    %v186 = vld [vmem:[%s1 + $0x2a0] sm:$0xf]
    %v187 = vld [vmem:[%s1 + $0x2a4] sm:$0xf]
    %v188 = vld [vmem:[%s1 + $0x2a8] sm:$0xf]
    %v189 = vld [vmem:[%s1 + $0x2ac] sm:$0xf]
    %v190 = vld [vmem:[%s1 + $0x2b0] sm:$0xf]
    %v191 = vld [vmem:[%s1 + $0x2b4] sm:$0xf]
    %v192 = vld [vmem:[%s1 + $0x2b8] sm:$0xf]
    %v193 = vld [vmem:[%s1 + $0x2bc] sm:$0xf]
    %v194 = vld [vmem:[%s1 + $0x2c0] sm:$0xf]
    %v195 = vld [vmem:[%s1 + $0x2c4] sm:$0xf]
    %v196 = vld [vmem:[%s1 + $0x2c8] sm:$0xf]
    %v197 = vld [vmem:[%s1 + $0x2cc] sm:$0xf]
    %v198 = vld [vmem:[%s1 + $0x2d0] sm:$0xf]
    %v199 = vld [vmem:[%s1 + $0x2d4] sm:$0xf]
    %v200 = vld [vmem:[%s1 + $0x2d8] sm:$0xf]
    %v201 = vld [vmem:[%s1 + $0x2dc] sm:$0xf]
    %v202 = vld [vmem:[%s1 + $0x2e0] sm:$0xf]
    %v203 = vld [vmem:[%s1 + $0x2e4] sm:$0xf]
    %v204 = vld [vmem:[%s1 + $0x2e8] sm:$0xf]
    %v205 = vld [vmem:[%s1 + $0x2ec] sm:$0xf]
    %v206 = vld [vmem:[%s1 + $0x2f0] sm:$0xf]
    %v207 = vld [vmem:[%s1 + $0x2f4] sm:$0xf]
    %v208 = vld [vmem:[%s1 + $0x2f8] sm:$0xf]
    %v209 = vld [vmem:[%s1 + $0x2fc] sm:$0xf]
    %v210 = vld [vmem:[%s1 + $0x300] sm:$0xf]
    %v211 = vld [vmem:[%s1 + $0x304] sm:$0xf]
    %v212 = vld [vmem:[%s1 + $0x308] sm:$0xf]
    %v213 = vld [vmem:[%s1 + $0x30c] sm:$0xf]
    %v214 = vld [vmem:[%s2] sm:$0x1]
    %v216 = vlaneseq
    %v217 = vshrl.u32 %v216, 7
    %v218 = vsub.s32 0, %v217
    %v219 = vrot.slane %v214, %v218
    %v223 = vcombine.high %v16, %v16
    %v225 = vunpack.c.l.s4 1966171168
    %v226 = vunpack.c.0.s8 %v225
    %v227 = vlaneseq
    %v228 = vshrl.u32 %v227, 7
    %v229 = vsub.s32 %v226, %v228
    %v230 = vrot.slane %v16, %v229
    %v232 = vunpack.c.l.s4 1966171168
    %v233 = vunpack.c.0.s8 %v232
    %v234 = vlaneseq
    %v235 = vshrl.u32 %v234, 7
    %v236 = vsub.s32 %v233, %v235
    %v237 = vrot.slane %v223, %v236
    %v238 = vcombine.high %v230, %v230
    %v239 = vcombine.high %v237, %v237
    %v241 = vunpack.c.l.s4 1966171168
    %v242 = vunpack.c.0.s8 %v241
    %v243 = vlaneseq
    %v244 = vshrl.u32 %v243, 7
    %v245 = vsub.s32 %v242, %v244
    %v246 = vrot.slane %v230, %v245
    %v248 = vunpack.c.l.s4 1966171168
    %v249 = vunpack.c.0.s8 %v248
    %v250 = vlaneseq
    %v251 = vshrl.u32 %v250, 7
    %v252 = vsub.s32 %v249, %v251
    %v253 = vrot.slane %v237, %v252
    %v255 = vunpack.c.l.s4 1966171168
    %v256 = vunpack.c.0.s8 %v255
    %v257 = vlaneseq
    %v258 = vshrl.u32 %v257, 7
    %v259 = vsub.s32 %v256, %v258
    %v260 = vrot.slane %v238, %v259
    %v262 = vunpack.c.l.s4 1966171168
    %v263 = vunpack.c.0.s8 %v262
    %v264 = vlaneseq
    %v265 = vshrl.u32 %v264, 7
    %v266 = vsub.s32 %v263, %v265
    %v267 = vrot.slane %v239, %v266
    %v268 = vcombine.high %v246, %v246
    %v269 = vcombine.high %v253, %v253
    %v270 = vcombine.high %v260, %v260
    %v271 = vcombine.high %v267, %v267
    %v272 = vcombine.high %v17, %v17
    %v274 = vunpack.c.l.s4 1966171168
    %v275 = vunpack.c.0.s8 %v274
    %v276 = vlaneseq
    %v277 = vshrl.u32 %v276, 7
    %v278 = vsub.s32 %v275, %v277
    %v279 = vrot.slane %v17, %v278
    %v281 = vunpack.c.l.s4 1966171168
    %v282 = vunpack.c.0.s8 %v281
    %v283 = vlaneseq
    %v284 = vshrl.u32 %v283, 7
    %v285 = vsub.s32 %v282, %v284
    %v286 = vrot.slane %v272, %v285
    %v287 = vcombine.high %v279, %v279
    %v289 = vunpack.c.l.s4 1966171168
    %v290 = vunpack.c.0.s8 %v289
    %v291 = vlaneseq
    %v292 = vshrl.u32 %v291, 7
    %v293 = vsub.s32 %v290, %v292
    %v294 = vrot.slane %v279, %v293
    %v296 = vunpack.c.l.s4 1966171168
    %v297 = vunpack.c.0.s8 %v296
    %v298 = vlaneseq
    %v299 = vshrl.u32 %v298, 7
    %v300 = vsub.s32 %v297, %v299
    %v301 = vrot.slane %v286, %v300
    %v303 = vunpack.c.l.s4 1966171168
    %v304 = vunpack.c.0.s8 %v303
    %v305 = vlaneseq
    %v306 = vshrl.u32 %v305, 7
    %v307 = vsub.s32 %v304, %v306
    %v308 = vrot.slane %v287, %v307
    %v309 = vcombine.high %v294, %v294
    %v310 = vcombine.high %v308, %v308
    %v519 = vunpack.c.l.b16 %v18
    %v520 = vunpack.c.l.b16 %v19
    %v521 = vunpack.c.l.b16 %v20
    %v522 = vunpack.c.l.b16 %v21
    %v523 = vunpack.c.l.b16 %v22
    %v524 = vunpack.c.l.b16 %v23
    %v525 = vunpack.c.l.b16 %v24
    %v526 = vunpack.c.l.b16 %v25
    %v527 = vunpack.c.l.b16 %v26
    %v528 = vunpack.c.l.b16 %v27
    %v529 = vunpack.c.l.b16 %v28
    %v530 = vunpack.c.l.b16 %v29
    %v531 = vunpack.c.l.b16 %v30
    %v532 = vunpack.c.l.b16 %v31
    %v533 = vunpack.c.l.b16 %v32
    %v534 = vunpack.c.l.b16 %v33
    %v535 = vunpack.c.l.b16 %v34
    %v536 = vunpack.c.l.b16 %v35
    %v537 = vunpack.c.l.b16 %v36
    %v538 = vunpack.c.l.b16 %v37
    %v539 = vunpack.c.l.b16 %v38
    %v540 = vunpack.c.l.b16 %v39
    %v541 = vunpack.c.l.b16 %v40
    %v542 = vunpack.c.l.b16 %v41
    %v543 = vunpack.c.l.b16 %v42
    %v544 = vunpack.c.l.b16 %v43
    %v545 = vunpack.c.l.b16 %v44
    %v546 = vunpack.c.l.b16 %v45
    %v547 = vunpack.c.l.b16 %v46
    %v548 = vunpack.c.l.b16 %v47
    %v549 = vunpack.c.l.b16 %v48
    %v550 = vunpack.c.l.b16 %v49
    %v551 = vunpack.c.l.b16 %v50
    %v552 = vunpack.c.l.b16 %v51
    %v553 = vunpack.c.l.b16 %v52
    %v554 = vunpack.c.l.b16 %v53
    %v555 = vunpack.c.l.b16 %v54
    %v556 = vunpack.c.l.b16 %v55
    %v557 = vunpack.c.l.b16 %v56
    %v558 = vunpack.c.l.b16 %v57
    %v559 = vunpack.c.l.b16 %v58
    %v560 = vunpack.c.l.b16 %v59
    %v561 = vunpack.c.l.b16 %v60
    %v562 = vunpack.c.l.b16 %v61
    %v563 = vunpack.c.l.b16 %v62
    %v564 = vunpack.c.l.b16 %v63
    %v565 = vunpack.c.l.b16 %v64
    %v566 = vunpack.c.l.b16 %v65
    %v567 = vunpack.c.l.b16 %v66
    %v568 = vunpack.c.l.b16 %v67
    %v569 = vunpack.c.l.b16 %v68
    %v570 = vunpack.c.l.b16 %v69
    %v571 = vunpack.c.l.b16 %v70
    %v572 = vunpack.c.l.b16 %v71
    %v573 = vunpack.c.l.b16 %v72
    %v574 = vunpack.c.l.b16 %v73
    %v575 = vunpack.c.l.b16 %v74
    %v576 = vunpack.c.l.b16 %v75
    %v577 = vunpack.c.l.b16 %v76
    %v578 = vunpack.c.l.b16 %v77
    %v579 = vunpack.c.l.b16 %v78
    %v580 = vunpack.c.l.b16 %v79
    %v581 = vunpack.c.l.b16 %v80
    %v582 = vunpack.c.l.b16 %v81
    %v583 = vunpack.c.l.b16 %v82
    %v584 = vunpack.c.l.b16 %v83
    %v585 = vunpack.c.l.b16 %v84
    %v586 = vunpack.c.l.b16 %v85
    %v587 = vunpack.c.l.b16 %v86
    %v588 = vunpack.c.l.b16 %v87
    %v589 = vunpack.c.l.b16 %v88
    %v590 = vunpack.c.l.b16 %v89
    %v591 = vunpack.c.l.b16 %v90
    %v592 = vunpack.c.l.b16 %v91
    %v593 = vunpack.c.l.b16 %v92
    %v594 = vunpack.c.l.b16 %v93
    %v595 = vunpack.c.l.b16 %v94
    %v596 = vunpack.c.l.b16 %v95
    %v597 = vunpack.c.l.b16 %v96
    %v598 = vunpack.c.l.b16 %v97
    %v599 = vunpack.c.l.b16 %v98
    %v600 = vunpack.c.l.b16 %v99
    %v601 = vunpack.c.l.b16 %v100
    %v602 = vunpack.c.l.b16 %v101
    %v603 = vunpack.c.l.b16 %v102
    %v604 = vunpack.c.l.b16 %v103
    %v605 = vunpack.c.l.b16 %v104
    %v606 = vunpack.c.l.b16 %v105
    %v607 = vunpack.c.l.b16 %v106
    %v608 = vunpack.c.l.b16 %v107
    %v609 = vunpack.c.l.b16 %v108
    %v610 = vunpack.c.l.b16 %v109
    %v611 = vunpack.c.l.b16 %v110
    %v612 = vunpack.c.l.b16 %v111
    %v613 = vunpack.c.l.b16 %v112
    %v614 = vunpack.c.l.b16 %v113
    %v615 = vunpack.c.l.b16 %v114
    %v616 = vunpack.c.l.b16 %v115
    %v617 = vunpack.c.l.b16 %v116
    %v618 = vunpack.c.l.b16 %v117
    %v619 = vunpack.c.l.b16 %v118
    %v620 = vunpack.c.l.b16 %v119
    %v621 = vunpack.c.l.b16 %v120
    %v622 = vunpack.c.l.b16 %v121
    %v623 = vunpack.c.l.b16 %v122
    %v624 = vunpack.c.l.b16 %v123
    %v625 = vunpack.c.l.b16 %v124
    %v626 = vunpack.c.l.b16 %v125
    %v627 = vunpack.c.l.b16 %v126
    %v628 = vunpack.c.l.b16 %v127
    %v629 = vunpack.c.l.b16 %v128
    %v630 = vunpack.c.l.b16 %v129
    %v631 = vunpack.c.l.b16 %v130
    %v632 = vunpack.c.l.b16 %v131
    %v633 = vunpack.c.l.b16 %v132
    %v634 = vunpack.c.l.b16 %v133
    %v635 = vunpack.c.l.b16 %v134
    %v636 = vunpack.c.l.b16 %v135
    %v637 = vunpack.c.l.b16 %v136
    %v638 = vunpack.c.l.b16 %v137
    %v639 = vunpack.c.l.b16 %v138
    %v640 = vunpack.c.l.b16 %v139
    %v641 = vunpack.c.l.b16 %v140
    %v642 = vunpack.c.l.b16 %v141
    %v643 = vunpack.c.l.b16 %v142
    %v644 = vunpack.c.l.b16 %v143
    %v645 = vunpack.c.l.b16 %v144
    %v646 = vunpack.c.l.b16 %v145
    %v647 = vunpack.c.l.b16 %v146
    %v648 = vunpack.c.l.b16 %v147
    %v649 = vunpack.c.l.b16 %v148
    %v650 = vunpack.c.l.b16 %v149
    %v651 = vunpack.c.l.b16 %v150
    %v652 = vunpack.c.l.b16 %v151
    %v653 = vunpack.c.l.b16 %v152
    %v654 = vunpack.c.l.b16 %v153
    %v655 = vunpack.c.l.b16 %v154
    %v656 = vunpack.c.l.b16 %v155
    %v657 = vunpack.c.l.b16 %v156
    %v658 = vunpack.c.l.b16 %v157
    %v659 = vunpack.c.l.b16 %v158
    %v660 = vunpack.c.l.b16 %v159
    %v661 = vunpack.c.l.b16 %v160
    %v662 = vunpack.c.l.b16 %v161
    %v663 = vunpack.c.l.b16 %v162
    %v664 = vunpack.c.l.b16 %v163
    %v665 = vunpack.c.l.b16 %v164
    %v666 = vunpack.c.l.b16 %v165
    %v667 = vunpack.c.l.b16 %v166
    %v668 = vunpack.c.l.b16 %v167
    %v669 = vunpack.c.l.b16 %v168
    %v670 = vunpack.c.l.b16 %v169
    %v671 = vunpack.c.l.b16 %v170
    %v672 = vunpack.c.l.b16 %v171
    %v673 = vunpack.c.l.b16 %v172
    %v674 = vunpack.c.l.b16 %v173
    %v675 = vunpack.c.l.b16 %v174
    %v676 = vunpack.c.l.b16 %v175
    %v677 = vunpack.c.l.b16 %v176
    %v678 = vunpack.c.l.b16 %v177
    %v679 = vunpack.c.l.b16 %v178
    %v680 = vunpack.c.l.b16 %v179
    %v681 = vunpack.c.l.b16 %v180
    %v682 = vunpack.c.l.b16 %v181
    %v683 = vunpack.c.l.b16 %v182
    %v684 = vunpack.c.l.b16 %v183
    %v685 = vunpack.c.l.b16 %v184
    %v686 = vunpack.c.l.b16 %v185
    %v687 = vunpack.c.l.b16 %v186
    %v688 = vunpack.c.l.b16 %v187
    %v689 = vunpack.c.l.b16 %v188
    %v690 = vunpack.c.l.b16 %v189
    %v691 = vunpack.c.l.b16 %v190
    %v692 = vunpack.c.l.b16 %v191
    %v693 = vunpack.c.l.b16 %v192
    %v694 = vunpack.c.l.b16 %v193
    %v695 = vunpack.c.l.b16 %v194
    %v696 = vunpack.c.l.b16 %v195
    %v697 = vunpack.c.l.b16 %v196
    %v698 = vunpack.c.l.b16 %v197
    %v699 = vunpack.c.l.b16 %v198
    %v700 = vunpack.c.l.b16 %v199
    %v701 = vunpack.c.l.b16 %v200
    %v702 = vunpack.c.l.b16 %v201
    %v703 = vunpack.c.l.b16 %v202
    %v704 = vunpack.c.l.b16 %v203
    %v705 = vunpack.c.l.b16 %v204
    %v706 = vunpack.c.l.b16 %v205
    %v707 = vunpack.c.l.b16 %v206
    %v708 = vunpack.c.l.b16 %v207
    %v709 = vunpack.c.l.b16 %v208
    %v710 = vunpack.c.l.b16 %v209
    %v711 = vunpack.c.l.b16 %v210
    %v712 = vunpack.c.l.b16 %v211
    %v713 = vunpack.c.l.b16 %v212
    %v714 = vunpack.c.l.b16 %v213
    %v715 = vpack.c.b16 %v520, %v519
    %v716 = vpack.c.b16 %v522, %v521
    %v717 = vpack.c.b16 %v524, %v523
    %v718 = vpack.c.b16 %v526, %v525
    %v719 = vpack.c.b16 %v528, %v527
    %v720 = vpack.c.b16 %v530, %v529
    %v721 = vpack.c.b16 %v532, %v531
    %v722 = vpack.c.b16 %v534, %v533
    %v723 = vpack.c.b16 %v536, %v535
    %v724 = vpack.c.b16 %v538, %v537
    %v725 = vpack.c.b16 %v540, %v539
    %v726 = vpack.c.b16 %v542, %v541
    %v727 = vpack.c.b16 %v544, %v543
    %v728 = vpack.c.b16 %v546, %v545
    %v729 = vpack.c.b16 %v548, %v547
    %v730 = vpack.c.b16 %v550, %v549
    %v731 = vpack.c.b16 %v552, %v551
    %v732 = vpack.c.b16 %v554, %v553
    %v733 = vpack.c.b16 %v556, %v555
    %v734 = vpack.c.b16 %v558, %v557
    %v735 = vpack.c.b16 %v560, %v559
    %v736 = vpack.c.b16 %v562, %v561
    %v737 = vpack.c.b16 %v564, %v563
    %v738 = vpack.c.b16 %v566, %v565
    %v739 = vpack.c.b16 %v568, %v567
    %v740 = vpack.c.b16 %v570, %v569
    %v741 = vpack.c.b16 %v572, %v571
    %v742 = vpack.c.b16 %v574, %v573
    %v743 = vpack.c.b16 %v576, %v575
    %v744 = vpack.c.b16 %v578, %v577
    %v745 = vpack.c.b16 %v580, %v579
    %v746 = vpack.c.b16 %v582, %v581
    %v747 = vpack.c.b16 %v584, %v583
    %v748 = vpack.c.b16 %v586, %v585
    %v749 = vpack.c.b16 %v588, %v587
    %v750 = vpack.c.b16 %v590, %v589
    %v751 = vpack.c.b16 %v592, %v591
    %v752 = vpack.c.b16 %v594, %v593
    %v753 = vpack.c.b16 %v596, %v595
    %v754 = vpack.c.b16 %v598, %v597
    %v755 = vpack.c.b16 %v600, %v599
    %v756 = vpack.c.b16 %v602, %v601
    %v757 = vpack.c.b16 %v604, %v603
    %v758 = vpack.c.b16 %v606, %v605
    %v759 = vpack.c.b16 %v608, %v607
    %v760 = vpack.c.b16 %v610, %v609
    %v761 = vpack.c.b16 %v612, %v611
    %v762 = vpack.c.b16 %v614, %v613
    %v763 = vpack.c.b16 %v616, %v615
    %v764 = vpack.c.b16 %v618, %v617
    %v765 = vpack.c.b16 %v620, %v619
    %v766 = vpack.c.b16 %v622, %v621
    %v767 = vpack.c.b16 %v624, %v623
    %v768 = vpack.c.b16 %v626, %v625
    %v769 = vpack.c.b16 %v628, %v627
    %v770 = vpack.c.b16 %v630, %v629
    %v771 = vpack.c.b16 %v632, %v631
    %v772 = vpack.c.b16 %v634, %v633
    %v773 = vpack.c.b16 %v636, %v635
    %v774 = vpack.c.b16 %v638, %v637
    %v775 = vpack.c.b16 %v640, %v639
    %v776 = vpack.c.b16 %v642, %v641
    %v777 = vpack.c.b16 %v644, %v643
    %v778 = vpack.c.b16 %v646, %v645
    %v779 = vpack.c.b16 %v648, %v647
    %v780 = vpack.c.b16 %v650, %v649
    %v781 = vpack.c.b16 %v652, %v651
    %v782 = vpack.c.b16 %v654, %v653
    %v783 = vpack.c.b16 %v656, %v655
    %v784 = vpack.c.b16 %v658, %v657
    %v785 = vpack.c.b16 %v660, %v659
    %v786 = vpack.c.b16 %v662, %v661
    %v787 = vpack.c.b16 %v664, %v663
    %v788 = vpack.c.b16 %v666, %v665
    %v789 = vpack.c.b16 %v668, %v667
    %v790 = vpack.c.b16 %v670, %v669
    %v791 = vpack.c.b16 %v672, %v671
    %v792 = vpack.c.b16 %v674, %v673
    %v793 = vpack.c.b16 %v676, %v675
    %v794 = vpack.c.b16 %v678, %v677
    %v795 = vpack.c.b16 %v680, %v679
    %v796 = vpack.c.b16 %v682, %v681
    %v797 = vpack.c.b16 %v684, %v683
    %v798 = vpack.c.b16 %v686, %v685
    %v799 = vpack.c.b16 %v688, %v687
    %v800 = vpack.c.b16 %v690, %v689
    %v801 = vpack.c.b16 %v692, %v691
    %v802 = vpack.c.b16 %v694, %v693
    %v803 = vpack.c.b16 %v696, %v695
    %v804 = vpack.c.b16 %v698, %v697
    %v805 = vpack.c.b16 %v700, %v699
    %v806 = vpack.c.b16 %v702, %v701
    %v807 = vpack.c.b16 %v704, %v703
    %v808 = vpack.c.b16 %v706, %v705
    %v809 = vpack.c.b16 %v708, %v707
    %v810 = vpack.c.b16 %v710, %v709
    %v811 = vpack.c.b16 %v712, %v711
    %v812 = vpack.c.b16 %v714, %v713
    %vm911 = vcmask 261120
    %v913 = vsel %vm911, %v301, 0
    %915 = vmatprep.subr.bf16.mxu0 0
    %916 = vmatpush1.bf16.msra.mxu0 %v715
    %917 = vmatprep.subr.bf16.mxu0 0
    %918 = vmatpush1.bf16.msra.mxu0 %v716
    %919 = vmatprep.subr.bf16.mxu0 0
    %920 = vmatpush1.bf16.msra.mxu0 %v717
    %921 = vmatprep.subr.bf16.mxu0 0
    %922 = vmatpush1.bf16.msra.mxu0 %v718
    %923 = vmatprep.subr.bf16.mxu0 0
    %924 = vmatpush1.bf16.msra.mxu0 %v719
    %925 = vmatprep.subr.bf16.mxu0 0
    %926 = vmatpush1.bf16.msra.mxu0 %v720
    %927 = vmatprep.subr.bf16.mxu0 0
    %928 = vmatpush1.bf16.msra.mxu0 %v721
    %929 = vmatprep.subr.bf16.mxu0 0
    %930 = vmatpush1.bf16.msra.mxu0 %v722
    %931 = vmatprep.subr.bf16.mxu0 0
    %932 = vmatpush1.bf16.msra.mxu0 %v723
    %933 = vmatprep.subr.bf16.mxu0 0
    %934 = vmatpush1.bf16.msra.mxu0 %v724
    %935 = vmatprep.subr.bf16.mxu0 0
    %936 = vmatpush1.bf16.msra.mxu0 %v725
    %937 = vmatprep.subr.bf16.mxu0 0
    %938 = vmatpush1.bf16.msra.mxu0 %v726
    %939 = vmatprep.subr.bf16.mxu0 0
    %940 = vmatpush1.bf16.msra.mxu0 %v727
    %941 = vmatprep.subr.bf16.mxu0 0
    %942 = vmatpush1.bf16.msra.mxu0 %v728
    %943 = vmatprep.subr.bf16.mxu0 0
    %944 = vmatpush1.bf16.msra.mxu0 %v729
    %945 = vmatprep.subr.bf16.mxu0 0
    %946 = vmatpush1.bf16.msra.mxu0 %v730
    %947 = vmatprep.mubr.bf16.mxu0 %v260
    %948 = vmatmul.mubr.bf16.gmra.mrb[0].mxu0 %v246
    %v949 = vpop.f32.mrb[0].mxu0
    %v950 = vadd.f32 %v219, %v949
    %v951 = vpop.f32.mrb[0].mxu0
    %v952 = vpop.f32.mrb[0].mxu0
    %v953 = vpop.f32.mrb[0].mxu0
    %954 = vdwg.mxu0
    %955 = vmatprep.subr.bf16.mxu0 0
    %956 = vmatpush1.bf16.msra.mxu0 %v731
    %957 = vmatprep.subr.bf16.mxu0 0
    %958 = vmatpush1.bf16.msra.mxu0 %v732
    %959 = vmatprep.subr.bf16.mxu0 0
    %960 = vmatpush1.bf16.msra.mxu0 %v733
    %961 = vmatprep.subr.bf16.mxu0 0
    %962 = vmatpush1.bf16.msra.mxu0 %v734
    %963 = vmatprep.subr.bf16.mxu0 0
    %964 = vmatpush1.bf16.msra.mxu0 %v735
    %965 = vmatprep.subr.bf16.mxu0 0
    %966 = vmatpush1.bf16.msra.mxu0 %v736
    %967 = vmatprep.subr.bf16.mxu0 0
    %968 = vmatpush1.bf16.msra.mxu0 %v737
    %969 = vmatprep.subr.bf16.mxu0 0
    %970 = vmatpush1.bf16.msra.mxu0 %v738
    %971 = vmatprep.subr.bf16.mxu0 0
    %972 = vmatpush1.bf16.msra.mxu0 %v739
    %973 = vmatprep.subr.bf16.mxu0 0
    %974 = vmatpush1.bf16.msra.mxu0 %v740
    %975 = vmatprep.subr.bf16.mxu0 0
    %976 = vmatpush1.bf16.msra.mxu0 %v741
    %977 = vmatprep.subr.bf16.mxu0 0
    %978 = vmatpush1.bf16.msra.mxu0 %v742
    %979 = vmatprep.subr.bf16.mxu0 0
    %980 = vmatpush1.bf16.msra.mxu0 %v743
    %981 = vmatprep.subr.bf16.mxu0 0
    %982 = vmatpush1.bf16.msra.mxu0 %v744
    %983 = vmatprep.subr.bf16.mxu0 0
    %984 = vmatpush1.bf16.msra.mxu0 %v745
    %985 = vmatprep.subr.bf16.mxu0 0
    %986 = vmatpush1.bf16.msra.mxu0 %v746
    %987 = vmatprep.mubr.bf16.mxu0 %v270
    %988 = vmatmul.mubr.bf16.gmra.mrb[0].mxu0 %v268
    %v989 = vpop.f32.mrb[0].mxu0
    %v990 = vadd.f32 %v950, %v989
    %v991 = vpop.f32.mrb[0].mxu0
    %v992 = vpop.f32.mrb[0].mxu0
    %v993 = vpop.f32.mrb[0].mxu0
    %994 = vdwg.mxu0
    %995 = vmatprep.subr.bf16.mxu0 0
    %996 = vmatpush1.bf16.msra.mxu0 %v747
    %997 = vmatprep.subr.bf16.mxu0 0
    %998 = vmatpush1.bf16.msra.mxu0 %v748
    %999 = vmatprep.subr.bf16.mxu0 0
    %1000 = vmatpush1.bf16.msra.mxu0 %v749
    %1001 = vmatprep.subr.bf16.mxu0 0
    %1002 = vmatpush1.bf16.msra.mxu0 %v750
    %1003 = vmatprep.subr.bf16.mxu0 0
    %1004 = vmatpush1.bf16.msra.mxu0 %v751
    %1005 = vmatprep.subr.bf16.mxu0 0
    %1006 = vmatpush1.bf16.msra.mxu0 %v752
    %1007 = vmatprep.subr.bf16.mxu0 0
    %1008 = vmatpush1.bf16.msra.mxu0 %v753
    %1009 = vmatprep.subr.bf16.mxu0 0
    %1010 = vmatpush1.bf16.msra.mxu0 %v754
    %1011 = vmatprep.subr.bf16.mxu0 0
    %1012 = vmatpush1.bf16.msra.mxu0 %v755
    %1013 = vmatprep.subr.bf16.mxu0 0
    %1014 = vmatpush1.bf16.msra.mxu0 %v756
    %1015 = vmatprep.subr.bf16.mxu0 0
    %1016 = vmatpush1.bf16.msra.mxu0 %v757
    %1017 = vmatprep.subr.bf16.mxu0 0
    %1018 = vmatpush1.bf16.msra.mxu0 %v758
    %1019 = vmatprep.subr.bf16.mxu0 0
    %1020 = vmatpush1.bf16.msra.mxu0 %v759
    %1021 = vmatprep.subr.bf16.mxu0 0
    %1022 = vmatpush1.bf16.msra.mxu0 %v760
    %1023 = vmatprep.subr.bf16.mxu0 0
    %1024 = vmatpush1.bf16.msra.mxu0 %v761
    %1025 = vmatprep.subr.bf16.mxu0 0
    %1026 = vmatpush1.bf16.msra.mxu0 %v762
    %1027 = vmatprep.mubr.bf16.mxu0 %v267
    %1028 = vmatmul.mubr.bf16.gmra.mrb[0].mxu0 %v253
    %v1029 = vpop.f32.mrb[0].mxu0
    %v1030 = vadd.f32 %v990, %v1029
    %v1031 = vpop.f32.mrb[0].mxu0
    %v1032 = vpop.f32.mrb[0].mxu0
    %v1033 = vpop.f32.mrb[0].mxu0
    %1034 = vdwg.mxu0
    %1035 = vmatprep.subr.bf16.mxu0 0
    %1036 = vmatpush1.bf16.msra.mxu0 %v763
    %1037 = vmatprep.subr.bf16.mxu0 0
    %1038 = vmatpush1.bf16.msra.mxu0 %v764
    %1039 = vmatprep.subr.bf16.mxu0 0
    %1040 = vmatpush1.bf16.msra.mxu0 %v765
    %1041 = vmatprep.subr.bf16.mxu0 0
    %1042 = vmatpush1.bf16.msra.mxu0 %v766
    %1043 = vmatprep.subr.bf16.mxu0 0
    %1044 = vmatpush1.bf16.msra.mxu0 %v767
    %1045 = vmatprep.subr.bf16.mxu0 0
    %1046 = vmatpush1.bf16.msra.mxu0 %v768
    %1047 = vmatprep.subr.bf16.mxu0 0
    %1048 = vmatpush1.bf16.msra.mxu0 %v769
    %1049 = vmatprep.subr.bf16.mxu0 0
    %1050 = vmatpush1.bf16.msra.mxu0 %v770
    %1051 = vmatprep.subr.bf16.mxu0 0
    %1052 = vmatpush1.bf16.msra.mxu0 %v771
    %1053 = vmatprep.subr.bf16.mxu0 0
    %1054 = vmatpush1.bf16.msra.mxu0 %v772
    %1055 = vmatprep.subr.bf16.mxu0 0
    %1056 = vmatpush1.bf16.msra.mxu0 %v773
    %1057 = vmatprep.subr.bf16.mxu0 0
    %1058 = vmatpush1.bf16.msra.mxu0 %v774
    %1059 = vmatprep.subr.bf16.mxu0 0
    %1060 = vmatpush1.bf16.msra.mxu0 %v775
    %1061 = vmatprep.subr.bf16.mxu0 0
    %1062 = vmatpush1.bf16.msra.mxu0 %v776
    %1063 = vmatprep.subr.bf16.mxu0 0
    %1064 = vmatpush1.bf16.msra.mxu0 %v777
    %1065 = vmatprep.subr.bf16.mxu0 0
    %1066 = vmatpush1.bf16.msra.mxu0 %v778
    %1067 = vmatprep.mubr.bf16.mxu0 %v271
    %1068 = vmatmul.mubr.bf16.gmra.mrb[0].mxu0 %v269
    %v1069 = vpop.f32.mrb[0].mxu0
    %v1070 = vadd.f32 %v1030, %v1069
    %v1071 = vpop.f32.mrb[0].mxu0
    %v1072 = vpop.f32.mrb[0].mxu0
    %v1073 = vpop.f32.mrb[0].mxu0
    %1074 = vdwg.mxu0
    %1075 = vmatprep.subr.bf16.mxu0 0
    %1076 = vmatpush1.bf16.msra.mxu0 %v779
    %1077 = vmatprep.subr.bf16.mxu0 0
    %1078 = vmatpush1.bf16.msra.mxu0 %v780
    %1079 = vmatprep.subr.bf16.mxu0 0
    %1080 = vmatpush1.bf16.msra.mxu0 %v781
    %1081 = vmatprep.subr.bf16.mxu0 0
    %1082 = vmatpush1.bf16.msra.mxu0 %v782
    %1083 = vmatprep.subr.bf16.mxu0 0
    %1084 = vmatpush1.bf16.msra.mxu0 %v783
    %1085 = vmatprep.subr.bf16.mxu0 0
    %1086 = vmatpush1.bf16.msra.mxu0 %v784
    %1087 = vmatprep.subr.bf16.mxu0 0
    %1088 = vmatpush1.bf16.msra.mxu0 %v785
    %1089 = vmatprep.subr.bf16.mxu0 0
    %1090 = vmatpush1.bf16.msra.mxu0 %v786
    %1091 = vmatprep.subr.bf16.mxu0 0
    %1092 = vmatpush1.bf16.msra.mxu0 %v787
    %1093 = vmatprep.subr.bf16.mxu0 0
    %1094 = vmatpush1.bf16.msra.mxu0 %v788
    %1095 = vmatprep.subr.bf16.mxu0 0
    %1096 = vmatpush1.bf16.msra.mxu0 %v789
    %1097 = vmatprep.subr.bf16.mxu0 0
    %1098 = vmatpush1.bf16.msra.mxu0 %v790
    %1099 = vmatprep.subr.bf16.mxu0 0
    %1100 = vmatpush1.bf16.msra.mxu0 %v791
    %1101 = vmatprep.subr.bf16.mxu0 0
    %1102 = vmatpush1.bf16.msra.mxu0 %v792
    %1103 = vmatprep.subr.bf16.mxu0 0
    %1104 = vmatpush1.bf16.msra.mxu0 %v793
    %1105 = vmatprep.subr.bf16.mxu0 0
    %1106 = vmatpush1.bf16.msra.mxu0 %v794
    %1107 = vmatprep.mubr.bf16.mxu0 %v308
    %1108 = vmatmul.mubr.bf16.gmra.mrb[0].mxu0 %v294
    %v1109 = vpop.f32.mrb[0].mxu0
    %v1110 = vadd.f32 %v1070, %v1109
    %v1111 = vpop.f32.mrb[0].mxu0
    %v1112 = vpop.f32.mrb[0].mxu0
    %v1113 = vpop.f32.mrb[0].mxu0
    %1114 = vdwg.mxu0
    %1115 = vmatprep.subr.bf16.mxu0 0
    %1116 = vmatpush1.bf16.msra.mxu0 %v795
    %1117 = vmatprep.subr.bf16.mxu0 0
    %1118 = vmatpush1.bf16.msra.mxu0 %v796
    %1119 = vmatprep.subr.bf16.mxu0 0
    %1120 = vmatpush1.bf16.msra.mxu0 %v797
    %1121 = vmatprep.subr.bf16.mxu0 0
    %1122 = vmatpush1.bf16.msra.mxu0 %v798
    %1123 = vmatprep.subr.bf16.mxu0 0
    %1124 = vmatpush1.bf16.msra.mxu0 %v799
    %1125 = vmatprep.subr.bf16.mxu0 0
    %1126 = vmatpush1.bf16.msra.mxu0 %v800
    %1127 = vmatprep.subr.bf16.mxu0 0
    %1128 = vmatpush1.bf16.msra.mxu0 %v801
    %1129 = vmatprep.subr.bf16.mxu0 0
    %1130 = vmatpush1.bf16.msra.mxu0 %v802
    %1131 = vmatprep.subr.bf16.mxu0 0
    %1132 = vmatpush1.bf16.msra.mxu0 %v803
    %1133 = vmatprep.subr.bf16.mxu0 0
    %1134 = vmatpush1.bf16.msra.mxu0 %v804
    %1135 = vmatprep.subr.bf16.mxu0 0
    %1136 = vmatpush1.bf16.msra.mxu0 %v805
    %1137 = vmatprep.subr.bf16.mxu0 0
    %1138 = vmatpush1.bf16.msra.mxu0 %v806
    %1139 = vmatprep.subr.bf16.mxu0 0
    %1140 = vmatpush1.bf16.msra.mxu0 %v807
    %1141 = vmatprep.subr.bf16.mxu0 0
    %1142 = vmatpush1.bf16.msra.mxu0 %v808
    %1143 = vmatprep.subr.bf16.mxu0 0
    %1144 = vmatpush1.bf16.msra.mxu0 %v809
    %1145 = vmatprep.subr.bf16.mxu0 0
    %1146 = vmatpush1.bf16.msra.mxu0 %v810
    %1147 = vmatprep.mubr.bf16.mxu0 %v310
    %1148 = vmatmul.mubr.bf16.gmra.mrb[0].mxu0 %v309
    %v1149 = vpop.f32.mrb[0].mxu0
    %v1150 = vadd.f32 %v1110, %v1149
    %v1151 = vpop.f32.mrb[0].mxu0
    %v1152 = vpop.f32.mrb[0].mxu0
    %v1153 = vpop.f32.mrb[0].mxu0
    %1154 = vdwg.mxu0
    %1155 = vmatprep.subr.bf16.mxu0 0
    %1156 = vmatpush1.bf16.msra.mxu0 %v811
    %1157 = vmatprep.subr.bf16.mxu0 0
    %1158 = vmatpush1.bf16.msra.mxu0 %v812
    %1159 = vmatprep.subr.bf16.mxu0 0
    %1160 = vmatpush1.bf16.msra.mxu0 0
    %1161 = vmatprep.subr.bf16.mxu0 0
    %1162 = vmatpush1.bf16.msra.mxu0 0
    %1163 = vmatprep.subr.bf16.mxu0 0
    %1164 = vmatpush1.bf16.msra.mxu0 0
    %1165 = vmatprep.subr.bf16.mxu0 0
    %1166 = vmatpush1.bf16.msra.mxu0 0
    %1167 = vmatprep.subr.bf16.mxu0 0
    %1168 = vmatpush1.bf16.msra.mxu0 0
    %1169 = vmatprep.subr.bf16.mxu0 0
    %1170 = vmatpush1.bf16.msra.mxu0 0
    %1171 = vmatprep.subr.bf16.mxu0 0
    %1172 = vmatpush1.bf16.msra.mxu0 0
    %1173 = vmatprep.subr.bf16.mxu0 0
    %1174 = vmatpush1.bf16.msra.mxu0 0
    %1175 = vmatprep.subr.bf16.mxu0 0
    %1176 = vmatpush1.bf16.msra.mxu0 0
    %1177 = vmatprep.subr.bf16.mxu0 0
    %1178 = vmatpush1.bf16.msra.mxu0 0
    %1179 = vmatprep.subr.bf16.mxu0 0
    %1180 = vmatpush1.bf16.msra.mxu0 0
    %1181 = vmatprep.subr.bf16.mxu0 0
    %1182 = vmatpush1.bf16.msra.mxu0 0
    %1183 = vmatprep.subr.bf16.mxu0 0
    %1184 = vmatpush1.bf16.msra.mxu0 0
    %1185 = vmatprep.subr.bf16.mxu0 0
    %1186 = vmatpush1.bf16.msra.mxu0 0
    %1187 = vmatprep.mubr.bf16.mxu0 0
    %1188 = vmatmul.mubr.bf16.gmra.mrb[0].mxu0 %v913
    %v1189 = vpop.f32.mrb[0].mxu0
    %v1190 = vadd.f32 %v1150, %v1189
    %v1191 = vpop.f32.mrb[0].mxu0
    %v1192 = vpop.f32.mrb[0].mxu0
    %v1193 = vpop.f32.mrb[0].mxu0
    %1194 = vdwg.mxu0
    %vm1195 = vcmask 74752
    %1196 = vst.msk [vmem:[#allocation2] sm:$0x3] %vm1195, %v1190
    // Predicated region
    $region14: #{auto_quantized_net_forward.9} parent=1 // pred_check
      _
    $region15: #{auto_quantized_net_forward.9} parent=1 // pred_check_branch
      %1198 = sbr.rel (0) target = $region17
    $region16: #{auto_quantized_net_forward.9} parent=1 // pred_region
      %s1200 = ssub.s32 32, 32
      %1201 = vsyncadd [#allocation3], %s1200
      %s1203 = sshll.u32 [#allocation2], 4
      %s1204 = int_to_ptr.vmem [resolvable:$true] %s1203
      %1206 = dma.vmem_to_hbm [thread:$0]  %s1204, 32, %s3, [#allocation3]
    $region17: #{auto_quantized_net_forward.9} parent=1 // pred_fallthru
      _
    // Predicated region
    $region18: #{auto_quantized_net_forward.9} parent=1 // pred_check
      _
    $region19: #{auto_quantized_net_forward.9} parent=1 // pred_check_branch
      %1208 = sbr.rel (0) target = $region21
    $region20: #{auto_quantized_net_forward.9} parent=1 // pred_region
      %1209 = dma.done [#allocation3], 32
    $region21: #{auto_quantized_net_forward.9} parent=1 // pred_fallthru
      _
    %1210 = vsyncpa [#allocation3], 1

</llo_original>
